<compile_context>
chip_gen: v7x
topology: tpu7x:2x2x1
jax: 0.10.0
libtpu: 0.0.40
codegen_flags: <defaults>
</compile_context>

<pallas_src>
import jax
import jax.numpy as jnp
import numpy as np
from jax.experimental import pallas as pl
from jax.experimental.pallas import tpu as pltpu


def _batch_tile(B):
    # tb must be a multiple of 8 (sublane-aligned blocks / free reshapes) or
    # equal to the full batch.
    return 8 if B % 8 == 0 else B


# --------------------------- Pallas kernel 1: bidirectional GRU --------------
def _gru_bidir_kernel(x_ref, w6_ref, b6_ref, whh_ref, bnh_ref, out_ref, gates_ref):
    S, TB, E = x_ref.shape
    H2 = out_ref.shape[2]
    H = H2 // 2
    H6 = 3 * H2

    # ---- Hoisted input projection: ONE (S*TB, E) x (E, 6H) bf16 matmul (f32
    #      accumulate) on the un-reversed input, gate-major fused columns
    #      [r_f r_b z_f z_b n_f n_b]; bias (b_ih + b_hh for r/z, b_ih only for n)
    #      added once.  Single flat store into the scratch (no unrolled loop).
    x_flat = x_ref[...].reshape(S * TB, E)
    gates_ref[...] = (jnp.dot(x_flat, w6_ref[...],
                              preferred_element_type=jnp.float32) + b6_ref[...])

    whh = whh_ref[...]                                   # (2H, 6H) block-diag, f32
    bnh = jnp.broadcast_to(bnh_ref[...], (TB, H2))       # hoisted broadcast (per review)
    # Lane mask: True on fwd-direction columns of the gate-major [f b f b f b] layout.
    col = jax.lax.broadcasted_iota(jnp.int32, (TB, H6), 1)
    fwd_mask = (col % H2) < H

    # ---- Fused fwd+bwd recurrence: S serial steps; one (TB,2H)x(2H,6H) matmul
    #      (kept at f32/HIGHEST precision, review correctness concern) and two
    #      half-lane stores per step.  Bwd time reversal = second pl.ds read.
    def step(t, h):                                      # h = [h_fwd | h_bwd]  (TB, 2H)
        base_nat = pl.multiple_of(t * TB, TB)
        base_rev = pl.multiple_of((S - 1 - t) * TB, TB)
        g_nat = gates_ref[pl.ds(base_nat, TB), :]        # fwd lanes valid at time t
        g_rev = gates_ref[pl.ds(base_rev, TB), :]        # bwd lanes valid at time S-1-t
        gi = jnp.where(fwd_mask, g_nat, g_rev)           # (TB, 6H)

        gh = jnp.dot(h, whh, precision=jax.lax.Precision.HIGHEST,
                     preferred_element_type=jnp.float32)  # (TB, 6H)

        r = jax.nn.sigmoid(gi[:, 0:H2] + gh[:, 0:H2])
        z = jax.nn.sigmoid(gi[:, H2:2 * H2] + gh[:, H2:2 * H2])
        n = jnp.tanh(gi[:, 2 * H2:] + r * (gh[:, 2 * H2:] + bnh))
        h_new = (1.0 - z) * n + z * h

        # Write both halves already time-aligned (no wrapper-side reverse/concat).
        out_ref[t, :, 0:H] = h_new[:, 0:H]               # fwd state of time t
        out_ref[S - 1 - t, :, H:] = h_new[:, H:]         # bwd state of time S-1-t
        return h_new

    jax.lax.fori_loop(0, S, step, jnp.zeros((TB, H2), jnp.float32))


# ------------- Pallas kernel 2: batched attention + select + BN + Linear -----
def _att_tail_kernel(seq_ref, onehot_ref, sents_ref,
                     wq_ref, bq_ref, wkv_ref, bkv_ref, ow_ref, ob_ref,
                     bns_a_ref, bnt_a_ref, bns_b_ref, bnt_b_ref,
                     fcw_a_ref, fcw_b_ref, fcb_ref, res_ref):
    TB, S, D = seq_ref.shape
    x = seq_ref[...]                                               # (TB, S, D)

    # Fused K/V projection: one (TB*S, D) x (D, 2D) MXU matmul for the tile.
    kv = jnp.dot(x.reshape(TB * S, D), wkv_ref[...],
                 preferred_element_type=jnp.float32) + bkv_ref[...]
    k = kv[:, :D].reshape(TB, S, D)
    v = kv[:, D:].reshape(TB, S, D)

    # Only the query row subs[b, 0] is consumed downstream -> batched one-hot
    # gather of the TB selected rows (VPU mul + sublane reduce, tiny).
    onehot = onehot_ref[...]                                       # (TB, S)
    x_sel = jnp.sum(x * onehot[:, :, None], axis=1)                # (TB, D)
    q = jnp.dot(x_sel, wq_ref[...], preferred_element_type=jnp.float32) + bq_ref[...]

    scale = float(D) ** -0.5
    scores = jnp.sum(q[:, None, :] * k, axis=2) * scale            # (TB, S)
    m = jnp.max(scores, axis=-1, keepdims=True)
    e = jnp.exp(scores - m)
    attn = e * pl.reciprocal(jnp.sum(e, axis=-1, keepdims=True), approx=True)

    ctx = jnp.sum(attn[:, :, None] * v, axis=1)                    # (TB, D)
    att_out = jnp.dot(ctx, ow_ref[...], preferred_element_type=jnp.float32) + ob_ref[...]

    weighted = sents_ref[...] * attn                               # (TB, S)

    # BatchNorm1d (eval) folded into an affine, split over the concat halves.
    a_n = att_out * bns_a_ref[...] + bnt_a_ref[...]                # (TB, D)
    s_n = weighted * bns_b_ref[...] + bnt_b_ref[...]               # (TB, S)

    # fc(concat([a, s])) == a @ Wfc[:D] + s @ Wfc[D:] + b
    res_ref[...] = (jnp.dot(a_n, fcw_a_ref[...], preferred_element_type=jnp.float32)
                    + jnp.dot(s_n, fcw_b_ref[...], preferred_element_type=jnp.float32)
                    + fcb_ref[...])


# ------------------------------- wrappers -----------------------------------
def gru_bidirectional(x_sbe, p):
    """Fused bidirectional GRU.  x_sbe: (S, B, E).  Returns (out (S,B,2H), h_n (2,B,H))."""
    S, B, E = x_sbe.shape
    H = p['whh_f'].shape[1]
    H2, H6 = 2 * H, 6 * H
    tb = _batch_tile(B)

    # Fused gate-major input weight (E, 6H): cols [r_f r_b z_f z_b n_f n_b], bf16.
    wf, wb = p['wih_f'].T, p['wih_b'].T                  # (E, 3H), cols [r z n]
    w6 = jnp.concatenate([wf[:, 0:H], wb[:, 0:H],
                          wf[:, H:2 * H], wb[:, H:2 * H],
                          wf[:, 2 * H:], wb[:, 2 * H:]], axis=1).astype(jnp.bfloat16)

    bif, bhf, bib, bhb = p['bih_f'], p['bhh_f'], p['bih_b'], p['bhh_b']
    # r/z carry folded (b_ih + b_hh); n carries b_ih only (hidden-side bias stays
    # inside the r*(.) term).
    b6 = jnp.concatenate([bif[0:H] + bhf[0:H], bib[0:H] + bhb[0:H],
                          bif[H:2 * H] + bhf[H:2 * H], bib[H:2 * H] + bhb[H:2 * H],
                          bif[2 * H:], bib[2 * H:]]).reshape(1, H6)
    b_nh = jnp.concatenate([bhf[2 * H:], bhb[2 * H:]]).reshape(1, H2)

    def gate_cols(w_t):
        return w_t[:, 0:H], w_t[:, H:2 * H], w_t[:, 2 * H:]
    rf, zf, nf = gate_cols(p['whh_f'].T)
    rb, zb, nb = gate_cols(p['whh_b'].T)
    Z = jnp.zeros((H, H), jnp.float32)
    # Block-diagonal hidden->gates weight, gate-major cols [r_f r_b z_f z_b n_f n_b],
    # so the fused [h_f | h_b] state needs a single matmul per timestep.
    whh_blk = jnp.concatenate([
        jnp.concatenate([rf, Z, zf, Z, nf, Z], axis=1),
        jnp.concatenate([Z, rb, Z, zb, Z, nb], axis=1)], axis=0)   # (2H, 6H) f32

    x_bf = x_sbe.astype(jnp.bfloat16)                    # bf16 operands, f32 accumulate

    out_k = pl.pallas_call(
        _gru_bidir_kernel,
        out_shape=jax.ShapeDtypeStruct((S, B, H2), jnp.float32),
        grid_spec=pltpu.PrefetchScalarGridSpec(
            num_scalar_prefetch=0,
            grid=(B // tb,),                              # batch-tiled, parallel grid
            in_specs=[
                pl.BlockSpec((S, tb, E), lambda i: (0, i, 0)),
                pl.BlockSpec((E, H6), lambda i: (0, 0)),
                pl.BlockSpec((1, H6), lambda i: (0, 0)),
                pl.BlockSpec((H2, H6), lambda i: (0, 0)),
                pl.BlockSpec((1, H2), lambda i: (0, 0)),
            ],
            out_specs=pl.BlockSpec((S, tb, H2), lambda i: (0, i, 0)),
            scratch_shapes=[pltpu.VMEM((S * tb, H6), jnp.float32)],
        ),
        compiler_params=pltpu.CompilerParams(
            dimension_semantics=("parallel",),
            vmem_limit_bytes=32 * 1024 * 1024),
    )(x_bf, w6, b6, whh_blk, b_nh)

    # out_k[t] = [h_fwd(t) | h_bwd(t)] already time-aligned for both directions.
    hidden = jnp.stack([out_k[S - 1, :, :H], out_k[0, :, H:]], axis=0)   # (2, B, H)
    return out_k, hidden


def attention_tail(out_bsd, sb, sents, p):
    B, S, D = out_bsd.shape
    O = p['fc_w'].shape[0]
    tb = _batch_tile(B)
    eps = 1e-5
    r2 = lambda v: v.reshape(1, -1)
    bn_scale = p['bn_gamma'] / jnp.sqrt(p['bn_var'] + eps)
    bn_shift = p['bn_beta'] - p['bn_mean'] * bn_scale

    ipw, ipb = p['in_proj_w'], p['in_proj_b']
    wq_t = ipw[:D].T
    wkv_t = jnp.concatenate([ipw[D:2 * D].T, ipw[2 * D:].T], axis=1)     # (D, 2D)
    bq = r2(ipb[:D])
    bkv = r2(jnp.concatenate([ipb[D:2 * D], ipb[2 * D:]]))
    fcw_t = p['fc_w'].T                                                  # (D + S, O)

    onehot = (jax.lax.broadcasted_iota(jnp.int32, (B, S), 1)
              == sb[:, None]).astype(jnp.float32)                       # (B, S)

    def rep(shape):
        n = len(shape)
        return pl.BlockSpec(shape, lambda i, _n=n: (0,) * _n)

    grid_spec = pltpu.PrefetchScalarGridSpec(
        num_scalar_prefetch=0,
        grid=(B // tb,),
        in_specs=[
            pl.BlockSpec((tb, S, D), lambda i: (i, 0, 0)),   # GRU output tile
            pl.BlockSpec((tb, S), lambda i: (i, 0)),         # one-hot of subs[:,0]
            pl.BlockSpec((tb, S), lambda i: (i, 0)),         # sents
            rep((D, D)), rep((1, D)),                        # Wq^T, bq
            rep((D, 2 * D)), rep((1, 2 * D)),                # fused [Wk|Wv]^T, bias
            rep((D, D)), rep((1, D)),                        # out_proj W^T, bias
            rep((1, D)), rep((1, D)),                        # BN affine (attention half)
            rep((1, S)), rep((1, S)),                        # BN affine (sents half)
            rep((D, O)), rep((S, O)), rep((1, O)),           # fc split + bias
        ],
        out_specs=pl.BlockSpec((tb, O), lambda i: (i, 0)),
    )
    res = pl.pallas_call(
        _att_tail_kernel,
        grid_spec=grid_spec,
        out_shape=jax.ShapeDtypeStruct((B, O), jnp.float32),
        compiler_params=pltpu.CompilerParams(
            dimension_semantics=("parallel",),
            vmem_limit_bytes=32 * 1024 * 1024),
    )(out_bsd, onehot, sents,
      wq_t, bq, wkv_t, bkv, p['out_proj_w'].T, r2(p['out_proj_b']),
      r2(bn_scale[:D]), r2(bn_shift[:D]), r2(bn_scale[D:]), r2(bn_shift[D:]),
      fcw_t[:D], fcw_t[D:], r2(p['fc_b']))
    return res


@jax.jit
def absa_gru_forward(params, ids, lbls, subs, sents):
    del lbls  # unused in the original forward as well
    emb = jnp.take(params['embedding'], ids, axis=0).astype(jnp.float32)   # (B, S, E)
    # nn.Dropout(p=0.3): eval-mode identity (deterministic forward).
    x_sbe = jnp.transpose(emb, (1, 0, 2))                                  # (S, B, E)
    out_k, hidden = gru_bidirectional(x_sbe, params)                       # (S,B,2H), (2,B,H)
    out_bsd = jnp.transpose(out_k, (1, 0, 2))                              # single layout pass
    sb = subs[:, 0].astype(jnp.int32)
    out_all = attention_tail(out_bsd, sb, sents.astype(jnp.float32), params)
    return out_all, hidden


# ------------------------------ parameters -----------------------------------
def init_params(key, vocab, E, H, S, O):
    D = 2 * H
    F = D + S
    ks = jax.random.split(key, 12)
    u = lambda k, shape, s: jax.random.uniform(k, shape, jnp.float32, -s, s)
    kH = 1.0 / np.sqrt(H)
    kD = 1.0 / np.sqrt(D)
    return dict(
        embedding=jax.random.normal(ks[0], (vocab, E), jnp.float32) * 0.1,
        wih_f=u(ks[1], (3 * H, E), kH), whh_f=u(ks[2], (3 * H, H), kH),
        bih_f=u(ks[3], (3 * H,), kH), bhh_f=u(ks[4], (3 * H,), kH),
        wih_b=u(ks[5], (3 * H, E), kH), whh_b=u(ks[6], (3 * H, H), kH),
        bih_b=u(ks[7], (3 * H,), kH), bhh_b=u(ks[8], (3 * H,), kH),
        in_proj_w=u(ks[9], (3 * D, D), kD),
        in_proj_b=jnp.zeros((3 * D,), jnp.float32),
        out_proj_w=u(ks[10], (D, D), kD),
        out_proj_b=jnp.zeros((D,), jnp.float32),
        bn_gamma=jnp.ones((F,), jnp.float32), bn_beta=jnp.zeros((F,), jnp.float32),
        bn_mean=jnp.zeros((F,), jnp.float32), bn_var=jnp.ones((F,), jnp.float32),
        fc_w=u(ks[11], (O, F), 1.0 / np.sqrt(F)),
        fc_b=jnp.zeros((O,), jnp.float32),
    )


# ---------------------------- pure-JAX reference -----------------------------
def reference_forward(p, ids, lbls, subs, sents):
    del lbls
    emb = p['embedding'][ids]
    B, S, _ = emb.shape
    H = p['whh_f'].shape[1]
    D = 2 * H

    def cell(x_t, h, wih, whh, bih, bhh):
        gi = x_t @ wih.T + bih
        gh = h @ whh.T + bhh
        r = jax.nn.sigmoid(gi[:, :H] + gh[:, :H])
        z = jax.nn.sigmoid(gi[:, H:2 * H] + gh[:, H:2 * H])
        n = jnp.tanh(gi[:, 2 * H:] + r * gh[:, 2 * H:])
        return (1.0 - z) * n + z * h

    h = jnp.zeros((B, H), jnp.float32)
    outs_f = []
    for t in range(S):
        h = cell(emb[:, t], h, p['wih_f'], p['whh_f'], p['bih_f'], p['bhh_f'])
        outs_f.append(h)
    h_f = h
    h = jnp.zeros((B, H), jnp.float32)
    outs_b = [None] * S
    for t in range(S - 1, -1, -1):
        h = cell(emb[:, t], h, p['wih_b'], p['whh_b'], p['bih_b'], p['bhh_b'])
        outs_b[t] = h
    h_b = h
    out = jnp.concatenate([jnp.stack(outs_f, 1), jnp.stack(outs_b, 1)], axis=-1)

    ipw, ipb = p['in_proj_w'], p['in_proj_b']
    q = out @ ipw[:D].T + ipb[:D]
    k = out @ ipw[D:2 * D].T + ipb[D:2 * D]
    v = out @ ipw[2 * D:].T + ipb[2 * D:]
    scores = jnp.einsum('bsd,btd->bst', q, k) / jnp.sqrt(1.0 * D)
    attn = jax.nn.softmax(scores, axis=-1)
    ctx = jnp.einsum('bst,btd->bsd', attn, v)
    att_out = ctx @ p['out_proj_w'].T + p['out_proj_b']

    sb = subs[:, 0]
    first = jnp.arange(B)
    sel_att = att_out[first, sb]
    sel_w = attn[first, sb]
    weighted = sents * sel_w
    feat = jnp.concatenate([sel_att, weighted], axis=1)
    eps = 1e-5
    feat = (feat - p['bn_mean']) / jnp.sqrt(p['bn_var'] + eps) * p['bn_gamma'] + p['bn_beta']
    res = feat @ p['fc_w'].T + p['fc_b']
    return res, jnp.stack([h_f, h_b], axis=0)


# ---------------------------------- main --------------------------------------
if __name__ == "__main__":
    # D = 2H = 64; fc features = 2H + S = 72.  B=16 -> batch tile 8, 2 grid steps
    # (exercises the parallel batch grid / dual-TC path at small shapes).
    B, S, V, E, H, O = 16, 8, 50, 16, 32, 3
    key = jax.random.PRNGKey(0)
    kp, kid, ksub, ksent = jax.random.split(key, 4)
    params = init_params(kp, V, E, H, S, O)

    ids = jax.random.randint(kid, (B, S), 0, V)
    lbls = jnp.zeros((B,), jnp.int32)           # unused by forward (interface parity)
    subs = jax.random.randint(ksub, (B, 2), 0, S)
    sents = jax.random.normal(ksent, (B, S), jnp.float32)

    out_all, hidden = jax.block_until_ready(
        absa_gru_forward(params, ids, lbls, subs, sents))

    ref_out, ref_hidden = reference_forward(params, ids, lbls, subs, sents)
    assert out_all.shape == (B, O) and hidden.shape == (2, B, H)
    # bf16 input projections + approx softmax reciprocal -> slightly looser
    # tolerance than a pure-f32 run.
    assert np.allclose(np.asarray(out_all), np.asarray(ref_out), atol=2e-2, rtol=2e-2)
    assert np.allclose(np.asarray(hidden), np.asarray(ref_hidden), atol=2e-2, rtol=2e-2)
    print("KERNEL_OK")
</pallas_src>

<mosaic_0001>
module attributes {stable_mosaic.version = 11 : i64} {
  func.func @_gru_bidir_kernel(%arg0: i32, %arg1: memref<8x8x16xbf16, #tpu.memory_space<vmem>>, %arg2: memref<16x192xbf16, #tpu.memory_space<vmem>>, %arg3: memref<1x192xf32, #tpu.memory_space<vmem>>, %arg4: memref<64x192xf32, #tpu.memory_space<vmem>>, %arg5: memref<1x64xf32, #tpu.memory_space<vmem>>, %arg6: memref<8x8x64xf32, #tpu.memory_space<vmem>>, %arg7: memref<64x192xf32, #tpu.memory_space<vmem>>) attributes {dimension_semantics = [#tpu.dimension_semantics<parallel>], iteration_bounds = array<i64: 2>, scalar_prefetch = 0 : i64, scratch_operands = 1 : i64, tpu.core_type = #tpu.core_type<tc>, window_params = [{transform_indices = @transform_0, window_bounds = array<i64: 8, 8, 16>}, {pipeline_mode = #tpu.pipeline_mode<synchronous>, transform_indices = @transform_1, window_bounds = array<i64: 16, 192>}, {pipeline_mode = #tpu.pipeline_mode<synchronous>, transform_indices = @transform_2, window_bounds = array<i64: 1, 192>}, {pipeline_mode = #tpu.pipeline_mode<synchronous>, transform_indices = @transform_3, window_bounds = array<i64: 64, 192>}, {pipeline_mode = #tpu.pipeline_mode<synchronous>, transform_indices = @transform_4, window_bounds = array<i64: 1, 64>}, {transform_indices = @transform_5, window_bounds = array<i64: 8, 8, 64>}]} {
    %c0 = arith.constant 0 : index
    %c0_0 = arith.constant 0 : index
    %c0_1 = arith.constant 0 : index
    %0 = vector.load %arg1[%c0, %c0_0, %c0_1] : memref<8x8x16xbf16, #tpu.memory_space<vmem>>, vector<8x8x16xbf16>
    %1 = vector.shape_cast %0 : vector<8x8x16xbf16> to vector<64x16xbf16>
    %c0_2 = arith.constant 0 : index
    %c0_3 = arith.constant 0 : index
    %2 = vector.load %arg2[%c0_2, %c0_3] : memref<16x192xbf16, #tpu.memory_space<vmem>>, vector<16x192xbf16>
    %cst = arith.constant dense<0.000000e+00> : vector<64x192xf32>
    %3 = tpu.matmul %1, %2, %cst {dimension_numbers = #tpu.dot_dimension_numbers<[1], [0], [0], [1], [0, 0, 1, 1], [], []>} : vector<64x16xbf16>, vector<16x192xbf16>, vector<64x192xf32> -> vector<64x192xf32>
    %c0_4 = arith.constant 0 : index
    %c0_5 = arith.constant 0 : index
    %4 = vector.load %arg3[%c0_4, %c0_5] : memref<1x192xf32, #tpu.memory_space<vmem>>, vector<1x192xf32>
    %5 = vector.broadcast %4 : vector<1x192xf32> to vector<64x192xf32>
    %6 = arith.addf %3, %5 : vector<64x192xf32>
    %c0_6 = arith.constant 0 : index
    %c0_7 = arith.constant 0 : index
    %7 = vector.load %arg7[%c0_6, %c0_7] : memref<64x192xf32, #tpu.memory_space<vmem>>, vector<64x192xf32>
    tpu.vector_store %arg7[%c0_6, %c0_7], %6 {strides = array<i32>} : memref<64x192xf32, #tpu.memory_space<vmem>>, vector<64x192xf32>,
    %c0_8 = arith.constant 0 : index
    %c0_9 = arith.constant 0 : index
    %8 = vector.load %arg4[%c0_8, %c0_9] : memref<64x192xf32, #tpu.memory_space<vmem>>, vector<64x192xf32>
    %c0_10 = arith.constant 0 : index
    %c0_11 = arith.constant 0 : index
    %9 = vector.load %arg5[%c0_10, %c0_11] : memref<1x64xf32, #tpu.memory_space<vmem>>, vector<1x64xf32>
    %10 = vector.shape_cast %9 : vector<1x64xf32> to vector<1x64xf32>
    %11 = vector.broadcast %10 : vector<1x64xf32> to vector<8x64xf32>
    %12 = tpu.iota {dimensions = array<i32: 1>} : vector<8x192xi32>
    %c64_i32 = arith.constant 64 : i32
    %c0_i32 = arith.constant 0 : i32
    %13 = arith.cmpi eq, %c64_i32, %c0_i32 : i32
    %c1_i32 = arith.constant 1 : i32
    %14 = arith.select %13, %c1_i32, %c64_i32 : i32
    %15 = vector.broadcast %14 : i32 to vector<8x192xi32>
    %16 = arith.remsi %12, %15 : vector<8x192xi32>
    %c0_i32_12 = arith.constant 0 : i32
    %17 = vector.broadcast %c0_i32_12 : i32 to vector<8x192xi32>
    %18 = arith.cmpi ne, %16, %17 : vector<8x192xi32>
    %c0_i32_13 = arith.constant 0 : i32
    %19 = vector.broadcast %c0_i32_13 : i32 to vector<8x192xi32>
    %20 = arith.cmpi slt, %16, %19 : vector<8x192xi32>
    %c0_i32_14 = arith.constant 0 : i32
    %21 = arith.cmpi slt, %14, %c0_i32_14 : i32
    %22 = vector.broadcast %21 : i1 to vector<8x192xi1>
    %23 = vector.broadcast %22 : vector<8x192xi1> to vector<8x192xi1>
    %24 = arith.xori %20, %23 : vector<8x192xi1>
    %25 = arith.andi %24, %18 : vector<8x192xi1>
    %26 = vector.broadcast %14 : i32 to vector<8x192xi32>
    %27 = arith.addi %16, %26 : vector<8x192xi32>
    %28 = arith.select %25, %27, %16 : vector<8x192xi1>, vector<8x192xi32>
    %c32_i32 = arith.constant 32 : i32
    %29 = vector.broadcast %c32_i32 : i32 to vector<8x192xi32>
    %30 = arith.cmpi slt, %28, %29 : vector<8x192xi32>
    %cst_15 = arith.constant 0.000000e+00 : f32
    %31 = vector.broadcast %cst_15 : f32 to vector<8x64xf32>
    %c0_i32_16 = arith.constant 0 : i32
    %c8_i32 = arith.constant 8 : i32
    %32 = arith.addi %c0_i32_16, %c8_i32 : i32
    %c1_i32_17 = arith.constant 1 : i32
    %33 = scf.for %arg8 = %c0_i32_16 to %32 step %c1_i32_17 iter_args(%arg9 = %31) -> (vector<8x64xf32>)  : i32 {
      %c8_i32_19 = arith.constant 8 : i32
      %34 = arith.muli %arg8, %c8_i32_19 : i32
      %35 = tpu.assume_multiple %34, 8 : i32
      %c7_i32 = arith.constant 7 : i32
      %36 = arith.subi %c7_i32, %arg8 : i32
      %c8_i32_20 = arith.constant 8 : i32
      %37 = arith.muli %36, %c8_i32_20 : i32
      %38 = tpu.assume_multiple %37, 8 : i32
      %39 = arith.index_cast %35 : i32 to index
      %c0_21 = arith.constant 0 : index
      %40 = vector.load %arg7[%39, %c0_21] : memref<64x192xf32, #tpu.memory_space<vmem>>, vector<8x192xf32>
      %41 = arith.index_cast %38 : i32 to index
      %c0_22 = arith.constant 0 : index
      %42 = vector.load %arg7[%41, %c0_22] : memref<64x192xf32, #tpu.memory_space<vmem>>, vector<8x192xf32>
      %43 = arith.select %30, %40, %42 : vector<8x192xi1>, vector<8x192xf32>
      %cst_23 = arith.constant dense<0.000000e+00> : vector<8x192xf32>
      %44 = tpu.matmul %arg9, %8, %cst_23 {dimension_numbers = #tpu.dot_dimension_numbers<[1], [0], [0], [1], [0, 0, 1, 1], [], []>, precision = #tpu.contract_precision<fp32>} : vector<8x64xf32>, vector<64x192xf32>, vector<8x192xf32> -> vector<8x192xf32>
      %45 = vector.extract_strided_slice %43 {offsets = [0, 0], sizes = [8, 64], strides = [1, 1]} : vector<8x192xf32> to vector<8x64xf32>
      %46 = vector.extract_strided_slice %44 {offsets = [0, 0], sizes = [8, 64], strides = [1, 1]} : vector<8x192xf32> to vector<8x64xf32>
      %47 = arith.addf %45, %46 : vector<8x64xf32>
      %48 = arith.negf %47 : vector<8x64xf32>
      %49 = math.exp %48 : vector<8x64xf32>
      %cst_24 = arith.constant 1.000000e+00 : f32
      %50 = vector.broadcast %cst_24 : f32 to vector<8x64xf32>
      %51 = arith.addf %50, %49 : vector<8x64xf32>
      %52 = arith.divf %50, %51 : vector<8x64xf32>
      %53 = vector.extract_strided_slice %43 {offsets = [0, 64], sizes = [8, 64], strides = [1, 1]} : vector<8x192xf32> to vector<8x64xf32>
      %54 = vector.extract_strided_slice %44 {offsets = [0, 64], sizes = [8, 64], strides = [1, 1]} : vector<8x192xf32> to vector<8x64xf32>
      %55 = arith.addf %53, %54 : vector<8x64xf32>
      %56 = arith.negf %55 : vector<8x64xf32>
      %57 = math.exp %56 : vector<8x64xf32>
      %cst_25 = arith.constant 1.000000e+00 : f32
      %58 = vector.broadcast %cst_25 : f32 to vector<8x64xf32>
      %59 = arith.addf %58, %57 : vector<8x64xf32>
      %60 = arith.divf %58, %59 : vector<8x64xf32>
      %61 = vector.extract_strided_slice %43 {offsets = [0, 128], sizes = [8, 64], strides = [1, 1]} : vector<8x192xf32> to vector<8x64xf32>
      %62 = vector.extract_strided_slice %44 {offsets = [0, 128], sizes = [8, 64], strides = [1, 1]} : vector<8x192xf32> to vector<8x64xf32>
      %63 = arith.addf %62, %11 : vector<8x64xf32>
      %64 = arith.mulf %52, %63 : vector<8x64xf32>
      %65 = arith.addf %61, %64 : vector<8x64xf32>
      %66 = math.tanh %65 : vector<8x64xf32>
      %cst_26 = arith.constant 1.000000e+00 : f32
      %67 = vector.broadcast %cst_26 : f32 to vector<8x64xf32>
      %68 = arith.subf %67, %60 : vector<8x64xf32>
      %69 = arith.mulf %68, %66 : vector<8x64xf32>
      %70 = arith.mulf %60, %arg9 : vector<8x64xf32>
      %71 = arith.addf %69, %70 : vector<8x64xf32>
      %72 = vector.extract_strided_slice %71 {offsets = [0, 0], sizes = [8, 32], strides = [1, 1]} : vector<8x64xf32> to vector<8x32xf32>
      %73 = arith.index_cast %arg8 : i32 to index
      %c0_27 = arith.constant 0 : index
      %c0_28 = arith.constant 0 : index
      %74 = vector.load %arg6[%73, %c0_27, %c0_28] : memref<8x8x64xf32, #tpu.memory_space<vmem>>, vector<1x8x32xf32>
      %75 = vector.shape_cast %74 : vector<1x8x32xf32> to vector<8x32xf32>
      %76 = vector.shape_cast %72 : vector<8x32xf32> to vector<1x8x32xf32>
      tpu.vector_store %arg6[%73, %c0_27, %c0_28], %76 {strides = array<i32>} : memref<8x8x64xf32, #tpu.memory_space<vmem>>, vector<1x8x32xf32>,
      %77 = vector.extract_strided_slice %71 {offsets = [0, 32], sizes = [8, 32], strides = [1, 1]} : vector<8x64xf32> to vector<8x32xf32>
      %c7_i32_29 = arith.constant 7 : i32
      %78 = arith.subi %c7_i32_29, %arg8 : i32
      %79 = arith.index_cast %78 : i32 to index
      %c0_30 = arith.constant 0 : index
      %c32 = arith.constant 32 : index
      %80 = vector.load %arg6[%79, %c0_30, %c32] : memref<8x8x64xf32, #tpu.memory_space<vmem>>, vector<1x8x32xf32>
      %81 = vector.shape_cast %80 : vector<1x8x32xf32> to vector<8x32xf32>
      %82 = vector.shape_cast %77 : vector<8x32xf32> to vector<1x8x32xf32>
      tpu.vector_store %arg6[%79, %c0_30, %c32], %82 {strides = array<i32>} : memref<8x8x64xf32, #tpu.memory_space<vmem>>, vector<1x8x32xf32>,
      scf.yield %71 : vector<8x64xf32>
    }
    %c8_i32_18 = arith.constant 8 : i32
    return
  }
  func.func @transform_0(%arg0: i32) -> (i32, i32, i32) {
    %c0_i32 = arith.constant 0 : i32
    %c0_i32_0 = arith.constant 0 : i32
    %c0_i32_1 = arith.constant 0 : i32
    return %c0_i32, %arg0, %c0_i32_0 : i32, i32, i32
  }
  func.func @transform_1(%arg0: i32) -> (i32, i32) {
    %c0_i32 = arith.constant 0 : i32
    %c0_i32_0 = arith.constant 0 : i32
    %c0_i32_1 = arith.constant 0 : i32
    return %c0_i32, %c0_i32_0 : i32, i32
  }
  func.func @transform_2(%arg0: i32) -> (i32, i32) {
    %c0_i32 = arith.constant 0 : i32
    %c0_i32_0 = arith.constant 0 : i32
    %c0_i32_1 = arith.constant 0 : i32
    return %c0_i32, %c0_i32_0 : i32, i32
  }
  func.func @transform_3(%arg0: i32) -> (i32, i32) {
    %c0_i32 = arith.constant 0 : i32
    %c0_i32_0 = arith.constant 0 : i32
    %c0_i32_1 = arith.constant 0 : i32
    return %c0_i32, %c0_i32_0 : i32, i32
  }
  func.func @transform_4(%arg0: i32) -> (i32, i32) {
    %c0_i32 = arith.constant 0 : i32
    %c0_i32_0 = arith.constant 0 : i32
    %c0_i32_1 = arith.constant 0 : i32
    return %c0_i32, %c0_i32_0 : i32, i32
  }
  func.func @transform_5(%arg0: i32) -> (i32, i32, i32) {
    %c0_i32 = arith.constant 0 : i32
    %c0_i32_0 = arith.constant 0 : i32
    %c0_i32_1 = arith.constant 0 : i32
    return %c0_i32, %arg0, %c0_i32_0 : i32, i32, i32
  }
}

module attributes {stable_mosaic.version = 11 : i64} {
  func.func @_att_tail_kernel(%arg0: i32, %arg1: memref<8x8x64xf32, #tpu.memory_space<vmem>>, %arg2: memref<8x8xf32, #tpu.memory_space<vmem>>, %arg3: memref<8x8xf32, #tpu.memory_space<vmem>>, %arg4: memref<64x64xf32, #tpu.memory_space<vmem>>, %arg5: memref<1x64xf32, #tpu.memory_space<vmem>>, %arg6: memref<64x128xf32, #tpu.memory_space<vmem>>, %arg7: memref<1x128xf32, #tpu.memory_space<vmem>>, %arg8: memref<64x64xf32, #tpu.memory_space<vmem>>, %arg9: memref<1x64xf32, #tpu.memory_space<vmem>>, %arg10: memref<1x64xf32, #tpu.memory_space<vmem>>, %arg11: memref<1x64xf32, #tpu.memory_space<vmem>>, %arg12: memref<1x8xf32, #tpu.memory_space<vmem>>, %arg13: memref<1x8xf32, #tpu.memory_space<vmem>>, %arg14: memref<64x3xf32, #tpu.memory_space<vmem>>, %arg15: memref<8x3xf32, #tpu.memory_space<vmem>>, %arg16: memref<1x3xf32, #tpu.memory_space<vmem>>, %arg17: memref<8x3xf32, #tpu.memory_space<vmem>>) attributes {dimension_semantics = [#tpu.dimension_semantics<parallel>], iteration_bounds = array<i64: 2>, scalar_prefetch = 0 : i64, scratch_operands = 0 : i64, tpu.core_type = #tpu.core_type<tc>, window_params = [{transform_indices = @transform_0, window_bounds = array<i64: 8, 8, 64>}, {transform_indices = @transform_1, window_bounds = array<i64: 8, 8>}, {transform_indices = @transform_2, window_bounds = array<i64: 8, 8>}, {pipeline_mode = #tpu.pipeline_mode<synchronous>, transform_indices = @transform_3, window_bounds = array<i64: 64, 64>}, {pipeline_mode = #tpu.pipeline_mode<synchronous>, transform_indices = @transform_4, window_bounds = array<i64: 1, 64>}, {pipeline_mode = #tpu.pipeline_mode<synchronous>, transform_indices = @transform_5, window_bounds = array<i64: 64, 128>}, {pipeline_mode = #tpu.pipeline_mode<synchronous>, transform_indices = @transform_6, window_bounds = array<i64: 1, 128>}, {pipeline_mode = #tpu.pipeline_mode<synchronous>, transform_indices = @transform_7, window_bounds = array<i64: 64, 64>}, {pipeline_mode = #tpu.pipeline_mode<synchronous>, transform_indices = @transform_8, window_bounds = array<i64: 1, 64>}, {pipeline_mode = #tpu.pipeline_mode<synchronous>, transform_indices = @transform_9, window_bounds = array<i64: 1, 64>}, {pipeline_mode = #tpu.pipeline_mode<synchronous>, transform_indices = @transform_10, window_bounds = array<i64: 1, 64>}, {pipeline_mode = #tpu.pipeline_mode<synchronous>, transform_indices = @transform_11, window_bounds = array<i64: 1, 8>}, {pipeline_mode = #tpu.pipeline_mode<synchronous>, transform_indices = @transform_12, window_bounds = array<i64: 1, 8>}, {pipeline_mode = #tpu.pipeline_mode<synchronous>, transform_indices = @transform_13, window_bounds = array<i64: 64, 3>}, {pipeline_mode = #tpu.pipeline_mode<synchronous>, transform_indices = @transform_14, window_bounds = array<i64: 8, 3>}, {pipeline_mode = #tpu.pipeline_mode<synchronous>, transform_indices = @transform_15, window_bounds = array<i64: 1, 3>}, {transform_indices = @transform_16, window_bounds = array<i64: 8, 3>}]} {
    %c0 = arith.constant 0 : index
    %c0_0 = arith.constant 0 : index
    %c0_1 = arith.constant 0 : index
    %0 = vector.load %arg1[%c0, %c0_0, %c0_1] : memref<8x8x64xf32, #tpu.memory_space<vmem>>, vector<8x8x64xf32>
    %1 = vector.shape_cast %0 : vector<8x8x64xf32> to vector<64x64xf32>
    %c0_2 = arith.constant 0 : index
    %c0_3 = arith.constant 0 : index
    %2 = vector.load %arg6[%c0_2, %c0_3] : memref<64x128xf32, #tpu.memory_space<vmem>>, vector<64x128xf32>
    %cst = arith.constant dense<0.000000e+00> : vector<64x128xf32>
    %3 = tpu.matmul %1, %2, %cst {dimension_numbers = #tpu.dot_dimension_numbers<[1], [0], [0], [1], [0, 0, 1, 1], [], []>} : vector<64x64xf32>, vector<64x128xf32>, vector<64x128xf32> -> vector<64x128xf32>
    %c0_4 = arith.constant 0 : index
    %c0_5 = arith.constant 0 : index
    %4 = vector.load %arg7[%c0_4, %c0_5] : memref<1x128xf32, #tpu.memory_space<vmem>>, vector<1x128xf32>
    %5 = vector.broadcast %4 : vector<1x128xf32> to vector<64x128xf32>
    %6 = arith.addf %3, %5 : vector<64x128xf32>
    %7 = vector.extract_strided_slice %6 {offsets = [0, 0], sizes = [64, 64], strides = [1, 1]} : vector<64x128xf32> to vector<64x64xf32>
    %8 = vector.shape_cast %7 : vector<64x64xf32> to vector<8x8x64xf32>
    %9 = vector.extract_strided_slice %6 {offsets = [0, 64], sizes = [64, 64], strides = [1, 1]} : vector<64x128xf32> to vector<64x64xf32>
    %10 = vector.shape_cast %9 : vector<64x64xf32> to vector<8x8x64xf32>
    %c0_6 = arith.constant 0 : index
    %c0_7 = arith.constant 0 : index
    %11 = vector.load %arg2[%c0_6, %c0_7] : memref<8x8xf32, #tpu.memory_space<vmem>>, vector<8x8xf32>
    %12 = vector.shape_cast %11 : vector<8x8xf32> to vector<8x8x1xf32>
    %13 = vector.broadcast %12 : vector<8x8x1xf32> to vector<8x8x64xf32>
    %14 = arith.mulf %0, %13 : vector<8x8x64xf32>
    %cst_8 = arith.constant dense<0.000000e+00> : vector<8x64xf32>
    %15 = vector.multi_reduction <add>, %14, %cst_8 [1] : vector<8x8x64xf32> to vector<8x64xf32>
    %c0_9 = arith.constant 0 : index
    %c0_10 = arith.constant 0 : index
    %16 = vector.load %arg4[%c0_9, %c0_10] : memref<64x64xf32, #tpu.memory_space<vmem>>, vector<64x64xf32>
    %cst_11 = arith.constant dense<0.000000e+00> : vector<8x64xf32>
    %17 = tpu.matmul %15, %16, %cst_11 {dimension_numbers = #tpu.dot_dimension_numbers<[1], [0], [0], [1], [0, 0, 1, 1], [], []>} : vector<8x64xf32>, vector<64x64xf32>, vector<8x64xf32> -> vector<8x64xf32>
    %c0_12 = arith.constant 0 : index
    %c0_13 = arith.constant 0 : index
    %18 = vector.load %arg5[%c0_12, %c0_13] : memref<1x64xf32, #tpu.memory_space<vmem>>, vector<1x64xf32>
    %19 = vector.broadcast %18 : vector<1x64xf32> to vector<8x64xf32>
    %20 = arith.addf %17, %19 : vector<8x64xf32>
    %21 = vector.shape_cast %20 : vector<8x64xf32> to vector<8x1x64xf32>
    %22 = vector.broadcast %21 : vector<8x1x64xf32> to vector<8x8x64xf32>
    %23 = arith.mulf %22, %8 : vector<8x8x64xf32>
    %cst_14 = arith.constant dense<0.000000e+00> : vector<8x8xf32>
    %24 = vector.multi_reduction <add>, %23, %cst_14 [2] : vector<8x8x64xf32> to vector<8x8xf32>
    %cst_15 = arith.constant 1.250000e-01 : f32
    %25 = vector.broadcast %cst_15 : f32 to vector<8x8xf32>
    %26 = arith.mulf %24, %25 : vector<8x8xf32>
    %cst_16 = arith.constant dense<0xFF800000> : vector<8xf32>
    %27 = vector.multi_reduction <maximumf>, %26, %cst_16 [1] : vector<8x8xf32> to vector<8xf32>
    %28 = vector.shape_cast %27 : vector<8xf32> to vector<8x1xf32>
    %29 = vector.broadcast %28 : vector<8x1xf32> to vector<8x8xf32>
    %30 = arith.subf %26, %29 : vector<8x8xf32>
    %31 = math.exp %30 : vector<8x8xf32>
    %cst_17 = arith.constant dense<0.000000e+00> : vector<8xf32>
    %32 = vector.multi_reduction <add>, %31, %cst_17 [1] : vector<8x8xf32> to vector<8xf32>
    %33 = vector.shape_cast %32 : vector<8xf32> to vector<8x1xf32>
    %34 = tpu.reciprocal %33 {approx = true} : vector<8x1xf32> -> vector<8x1xf32>
    %35 = vector.broadcast %34 : vector<8x1xf32> to vector<8x8xf32>
    %36 = arith.mulf %31, %35 : vector<8x8xf32>
    %37 = vector.shape_cast %36 : vector<8x8xf32> to vector<8x8x1xf32>
    %38 = vector.broadcast %37 : vector<8x8x1xf32> to vector<8x8x64xf32>
    %39 = arith.mulf %38, %10 : vector<8x8x64xf32>
    %cst_18 = arith.constant dense<0.000000e+00> : vector<8x64xf32>
    %40 = vector.multi_reduction <add>, %39, %cst_18 [1] : vector<8x8x64xf32> to vector<8x64xf32>
    %c0_19 = arith.constant 0 : index
    %c0_20 = arith.constant 0 : index
    %41 = vector.load %arg8[%c0_19, %c0_20] : memref<64x64xf32, #tpu.memory_space<vmem>>, vector<64x64xf32>
    %cst_21 = arith.constant dense<0.000000e+00> : vector<8x64xf32>
    %42 = tpu.matmul %40, %41, %cst_21 {dimension_numbers = #tpu.dot_dimension_numbers<[1], [0], [0], [1], [0, 0, 1, 1], [], []>} : vector<8x64xf32>, vector<64x64xf32>, vector<8x64xf32> -> vector<8x64xf32>
    %c0_22 = arith.constant 0 : index
    %c0_23 = arith.constant 0 : index
    %43 = vector.load %arg9[%c0_22, %c0_23] : memref<1x64xf32, #tpu.memory_space<vmem>>, vector<1x64xf32>
    %44 = vector.broadcast %43 : vector<1x64xf32> to vector<8x64xf32>
    %45 = arith.addf %42, %44 : vector<8x64xf32>
    %c0_24 = arith.constant 0 : index
    %c0_25 = arith.constant 0 : index
    %46 = vector.load %arg3[%c0_24, %c0_25] : memref<8x8xf32, #tpu.memory_space<vmem>>, vector<8x8xf32>
    %47 = arith.mulf %46, %36 : vector<8x8xf32>
    %c0_26 = arith.constant 0 : index
    %c0_27 = arith.constant 0 : index
    %48 = vector.load %arg10[%c0_26, %c0_27] : memref<1x64xf32, #tpu.memory_space<vmem>>, vector<1x64xf32>
    %49 = vector.broadcast %48 : vector<1x64xf32> to vector<8x64xf32>
    %50 = arith.mulf %45, %49 : vector<8x64xf32>
    %c0_28 = arith.constant 0 : index
    %c0_29 = arith.constant 0 : index
    %51 = vector.load %arg11[%c0_28, %c0_29] : memref<1x64xf32, #tpu.memory_space<vmem>>, vector<1x64xf32>
    %52 = vector.broadcast %51 : vector<1x64xf32> to vector<8x64xf32>
    %53 = arith.addf %50, %52 : vector<8x64xf32>
    %c0_30 = arith.constant 0 : index
    %c0_31 = arith.constant 0 : index
    %54 = vector.load %arg12[%c0_30, %c0_31] : memref<1x8xf32, #tpu.memory_space<vmem>>, vector<1x8xf32>
    %55 = vector.broadcast %54 : vector<1x8xf32> to vector<8x8xf32>
    %56 = arith.mulf %47, %55 : vector<8x8xf32>
    %c0_32 = arith.constant 0 : index
    %c0_33 = arith.constant 0 : index
    %57 = vector.load %arg13[%c0_32, %c0_33] : memref<1x8xf32, #tpu.memory_space<vmem>>, vector<1x8xf32>
    %58 = vector.broadcast %57 : vector<1x8xf32> to vector<8x8xf32>
    %59 = arith.addf %56, %58 : vector<8x8xf32>
    %c0_34 = arith.constant 0 : index
    %c0_35 = arith.constant 0 : index
    %60 = vector.load %arg14[%c0_34, %c0_35] : memref<64x3xf32, #tpu.memory_space<vmem>>, vector<64x3xf32>
    %cst_36 = arith.constant dense<0.000000e+00> : vector<8x3xf32>
    %61 = tpu.matmul %53, %60, %cst_36 {dimension_numbers = #tpu.dot_dimension_numbers<[1], [0], [0], [1], [0, 0, 1, 1], [], []>} : vector<8x64xf32>, vector<64x3xf32>, vector<8x3xf32> -> vector<8x3xf32>
    %c0_37 = arith.constant 0 : index
    %c0_38 = arith.constant 0 : index
    %62 = vector.load %arg15[%c0_37, %c0_38] : memref<8x3xf32, #tpu.memory_space<vmem>>, vector<8x3xf32>
    %cst_39 = arith.constant dense<0.000000e+00> : vector<8x3xf32>
    %63 = tpu.matmul %59, %62, %cst_39 {dimension_numbers = #tpu.dot_dimension_numbers<[1], [0], [0], [1], [0, 0, 1, 1], [], []>} : vector<8x8xf32>, vector<8x3xf32>, vector<8x3xf32> -> vector<8x3xf32>
    %64 = arith.addf %61, %63 : vector<8x3xf32>
    %c0_40 = arith.constant 0 : index
    %c0_41 = arith.constant 0 : index
    %65 = vector.load %arg16[%c0_40, %c0_41] : memref<1x3xf32, #tpu.memory_space<vmem>>, vector<1x3xf32>
    %66 = vector.broadcast %65 : vector<1x3xf32> to vector<8x3xf32>
    %67 = arith.addf %64, %66 : vector<8x3xf32>
    %c0_42 = arith.constant 0 : index
    %c0_43 = arith.constant 0 : index
    %68 = vector.load %arg17[%c0_42, %c0_43] : memref<8x3xf32, #tpu.memory_space<vmem>>, vector<8x3xf32>
    tpu.vector_store %arg17[%c0_42, %c0_43], %67 {strides = array<i32>} : memref<8x3xf32, #tpu.memory_space<vmem>>, vector<8x3xf32>,
    return
  }
  func.func @transform_0(%arg0: i32) -> (i32, i32, i32) {
    %c0_i32 = arith.constant 0 : i32
    %c0_i32_0 = arith.constant 0 : i32
    %c0_i32_1 = arith.constant 0 : i32
    return %arg0, %c0_i32, %c0_i32_0 : i32, i32, i32
  }
  func.func @transform_1(%arg0: i32) -> (i32, i32) {
    %c0_i32 = arith.constant 0 : i32
    %c0_i32_0 = arith.constant 0 : i32
    return %arg0, %c0_i32 : i32, i32
  }
  func.func @transform_2(%arg0: i32) -> (i32, i32) {
    %c0_i32 = arith.constant 0 : i32
    %c0_i32_0 = arith.constant 0 : i32
    return %arg0, %c0_i32 : i32, i32
  }
  func.func @transform_3(%arg0: i32) -> (i32, i32) {
    %c0_i32 = arith.constant 0 : i32
    %c0_i32_0 = arith.constant 0 : i32
    %c0_i32_1 = arith.constant 0 : i32
    return %c0_i32, %c0_i32_0 : i32, i32
  }
  func.func @transform_4(%arg0: i32) -> (i32, i32) {
    %c0_i32 = arith.constant 0 : i32
    %c0_i32_0 = arith.constant 0 : i32
    %c0_i32_1 = arith.constant 0 : i32
    return %c0_i32, %c0_i32_0 : i32, i32
  }
  func.func @transform_5(%arg0: i32) -> (i32, i32) {
    %c0_i32 = arith.constant 0 : i32
    %c0_i32_0 = arith.constant 0 : i32
    %c0_i32_1 = arith.constant 0 : i32
    return %c0_i32, %c0_i32_0 : i32, i32
  }
  func.func @transform_6(%arg0: i32) -> (i32, i32) {
    %c0_i32 = arith.constant 0 : i32
    %c0_i32_0 = arith.constant 0 : i32
    %c0_i32_1 = arith.constant 0 : i32
    return %c0_i32, %c0_i32_0 : i32, i32
  }
  func.func @transform_7(%arg0: i32) -> (i32, i32) {
    %c0_i32 = arith.constant 0 : i32
    %c0_i32_0 = arith.constant 0 : i32
    %c0_i32_1 = arith.constant 0 : i32
    return %c0_i32, %c0_i32_0 : i32, i32
  }
  func.func @transform_8(%arg0: i32) -> (i32, i32) {
    %c0_i32 = arith.constant 0 : i32
    %c0_i32_0 = arith.constant 0 : i32
    %c0_i32_1 = arith.constant 0 : i32
    return %c0_i32, %c0_i32_0 : i32, i32
  }
  func.func @transform_9(%arg0: i32) -> (i32, i32) {
    %c0_i32 = arith.constant 0 : i32
    %c0_i32_0 = arith.constant 0 : i32
    %c0_i32_1 = arith.constant 0 : i32
    return %c0_i32, %c0_i32_0 : i32, i32
  }
  func.func @transform_10(%arg0: i32) -> (i32, i32) {
    %c0_i32 = arith.constant 0 : i32
    %c0_i32_0 = arith.constant 0 : i32
    %c0_i32_1 = arith.constant 0 : i32
    return %c0_i32, %c0_i32_0 : i32, i32
  }
  func.func @transform_11(%arg0: i32) -> (i32, i32) {
    %c0_i32 = arith.constant 0 : i32
    %c0_i32_0 = arith.constant 0 : i32
    %c0_i32_1 = arith.constant 0 : i32
    return %c0_i32, %c0_i32_0 : i32, i32
  }
  func.func @transform_12(%arg0: i32) -> (i32, i32) {
    %c0_i32 = arith.constant 0 : i32
    %c0_i32_0 = arith.constant 0 : i32
    %c0_i32_1 = arith.constant 0 : i32
    return %c0_i32, %c0_i32_0 : i32, i32
  }
  func.func @transform_13(%arg0: i32) -> (i32, i32) {
    %c0_i32 = arith.constant 0 : i32
    %c0_i32_0 = arith.constant 0 : i32
    %c0_i32_1 = arith.constant 0 : i32
    return %c0_i32, %c0_i32_0 : i32, i32
  }
  func.func @transform_14(%arg0: i32) -> (i32, i32) {
    %c0_i32 = arith.constant 0 : i32
    %c0_i32_0 = arith.constant 0 : i32
    %c0_i32_1 = arith.constant 0 : i32
    return %c0_i32, %c0_i32_0 : i32, i32
  }
  func.func @transform_15(%arg0: i32) -> (i32, i32) {
    %c0_i32 = arith.constant 0 : i32
    %c0_i32_0 = arith.constant 0 : i32
    %c0_i32_1 = arith.constant 0 : i32
    return %c0_i32, %c0_i32_0 : i32, i32
  }
  func.func @transform_16(%arg0: i32) -> (i32, i32) {
    %c0_i32 = arith.constant 0 : i32
    %c0_i32_0 = arith.constant 0 : i32
    return %arg0, %c0_i32 : i32, i32
  }
}

</mosaic_0001>

<llo_original>
// kernel: absa_gru_forward.2
$region0: #{absa_gru_forward.2}
  #allocation0 [shape = 'u32[]', space=smem, size = 0x4, offset = 0x4, fixed_abs, tag = 'smem constant byte address 0x4 - core index']
  #allocation1 [shape = 'u32[144,128]{1,0:T(1,128)}', space=vmem, size = 0x12000, scoped, tag = 'internal scratch']
  #allocation2 [shape = 'f32[64,192]{1,0:T(8,128)}', space=vmem, size = 0x10000, scoped, tag = 'scratch operand']
  %s0 = inlined_call_operand.vmem [shape: bf16[8,16,16], index: 0, kind: input, shape index: {}]
  %s1 = inlined_call_operand.vmem [shape: bf16[16,192], index: 1, kind: input, shape index: {}]
  %s2 = inlined_call_operand.vmem [shape: f32[1,192], index: 2, kind: input, shape index: {}]
  %s3 = inlined_call_operand.vmem [shape: f32[64,192], index: 3, kind: input, shape index: {}]
  %s4 = inlined_call_operand.vmem [shape: f32[1,64], index: 4, kind: input, shape index: {}]
  %s5 = inlined_call_operand.vmem [shape: f32[8,16,64], index: 5, kind: output, shape index: {}]
  %s6 = sld [smem:[#allocation0]]
  $region135: #{absa_gru_forward.2} parent=0
    _
  %s8 = ssub.s32 1, %s6
  %s9 = scalar_select 0, %s8, %s6
  $region1: #{absa_gru_forward.2} parent=0
    #allocation3 [shape = 'u8[32768]{0}', space=vmem, size = 0x8000, scoped, tag = 'input window, operand 0']
    #allocation4 [shape = 'u8[65536]{0}', space=vmem, size = 0x10000, scoped, tag = 'output window, operand 0']
    loop: start=0, step=1, limit=4
    $region2: #{absa_gru_forward.2} parent=1 // loop_pre_header
      _
    $region3: #{absa_gru_forward.2} parent=1 // loop_header
      %s11 = sphi 0, %s15
      %p12 = scmp.ge.s32.totalorder %s11, 4
      %s21 = sphi 0, %s23
      %s24 = sphi 0, %s21
      %s25 = sphi 0, %s24
      %s41 = sphi 0, %s25
      %s45 = sphi 0, %s45
      %s47 = sphi 0, %s45
      %s48 = sphi 0, %s47
      %s62 = sphi 0, %s48
      %s66 = sphi 0, %s66
      %s68 = sphi 0, %s66
      %s69 = sphi 0, %s68
      %s83 = sphi 0, %s69
      %s87 = sphi 0, %s87
      %s89 = sphi 0, %s87
      %s90 = sphi 0, %s89
      %s104 = sphi 0, %s90
      %s108 = sphi 0, %s108
      %s110 = sphi 0, %s108
      %s111 = sphi 0, %s110
      %s125 = sphi 0, %s111
      %s131 = sphi 0, %s133
      %s134 = sphi 0, %s131
      %s135 = sphi 0, %s134
      %s151 = sphi 0, %s135
    $region4: #{absa_gru_forward.2} parent=1 // loop_header_branch
      %14 = sbr.rel (%p12) target = $region8
    $region5: #{absa_gru_forward.2} parent=1 // loop_body
      %s16 = ssub.s32 %s11, 1
      %s17 = ssub.s32 %s11, 2
      %s18 = sadd.s32 %s11, 1
      %s19 = ssub.s32 %s11, %s18
      %p20 = scmp.eq.s32.totalorder %s19, 0
      %s22 = sadd.s32 %s21, 1
      %s23 = scalar_select %p20, %s21, %s22
      %p26 = pneg %p20
      %p27 = scmp.eq.s32.totalorder %s11, 1
      %p28 = por %p26, %p27
      %p29 = scmp.ne.s32.totalorder %s21, %s24
      %p30 = scmp.eq.s32.totalorder %s11, 0
      %p31 = por %p29, %p30
      %p32 = scmp.ne.s32.totalorder %s21, %s24
      %p33 = scmp.eq.s32.totalorder %s16, 1
      %p34 = por %p32, %p33
      %p35 = scmp.ne.s32.totalorder %s24, %s25
      %p36 = scmp.eq.s32.totalorder %s16, 0
      %p37 = por %p35, %p36
      %p38 = scmp.ne.s32.totalorder %s24, %s25
      %p39 = scmp.eq.s32.totalorder %s17, 1
      %p40 = por %p38, %p39
      %p42 = scmp.ne.s32.totalorder %s25, %s41
      %p43 = scmp.eq.s32.totalorder %s17, 0
      %p44 = por %p42, %p43
      %s46 = sadd.s32 %s45, 1
      %p49 = scmp.eq.s32.totalorder %s11, 1
      %p50 = scmp.ne.s32.totalorder %s45, %s47
      %p51 = scmp.eq.s32.totalorder %s11, 0
      %p52 = por %p50, %p51
      %p53 = scmp.ne.s32.totalorder %s45, %s47
      %p54 = scmp.eq.s32.totalorder %s16, 1
      %p55 = por %p53, %p54
      %p56 = scmp.ne.s32.totalorder %s47, %s48
      %p57 = scmp.eq.s32.totalorder %s16, 0
      %p58 = por %p56, %p57
      %p59 = scmp.ne.s32.totalorder %s47, %s48
      %p60 = scmp.eq.s32.totalorder %s17, 1
      %p61 = por %p59, %p60
      %p63 = scmp.ne.s32.totalorder %s48, %s62
      %p64 = scmp.eq.s32.totalorder %s17, 0
      %p65 = por %p63, %p64
      %s67 = sadd.s32 %s66, 1
      %p70 = scmp.eq.s32.totalorder %s11, 1
      %p71 = scmp.ne.s32.totalorder %s66, %s68
      %p72 = scmp.eq.s32.totalorder %s11, 0
      %p73 = por %p71, %p72
      %p74 = scmp.ne.s32.totalorder %s66, %s68
      %p75 = scmp.eq.s32.totalorder %s16, 1
      %p76 = por %p74, %p75
      %p77 = scmp.ne.s32.totalorder %s68, %s69
      %p78 = scmp.eq.s32.totalorder %s16, 0
      %p79 = por %p77, %p78
      %p80 = scmp.ne.s32.totalorder %s68, %s69
      %p81 = scmp.eq.s32.totalorder %s17, 1
      %p82 = por %p80, %p81
      %p84 = scmp.ne.s32.totalorder %s69, %s83
      %p85 = scmp.eq.s32.totalorder %s17, 0
      %p86 = por %p84, %p85
      %s88 = sadd.s32 %s87, 1
      %p91 = scmp.eq.s32.totalorder %s11, 1
      %p92 = scmp.ne.s32.totalorder %s87, %s89
      %p93 = scmp.eq.s32.totalorder %s11, 0
      %p94 = por %p92, %p93
      %p95 = scmp.ne.s32.totalorder %s87, %s89
      %p96 = scmp.eq.s32.totalorder %s16, 1
      %p97 = por %p95, %p96
      %p98 = scmp.ne.s32.totalorder %s89, %s90
      %p99 = scmp.eq.s32.totalorder %s16, 0
      %p100 = por %p98, %p99
      %p101 = scmp.ne.s32.totalorder %s89, %s90
      %p102 = scmp.eq.s32.totalorder %s17, 1
      %p103 = por %p101, %p102
      %p105 = scmp.ne.s32.totalorder %s90, %s104
      %p106 = scmp.eq.s32.totalorder %s17, 0
      %p107 = por %p105, %p106
      %s109 = sadd.s32 %s108, 1
      %p112 = scmp.eq.s32.totalorder %s11, 1
      %p113 = scmp.ne.s32.totalorder %s108, %s110
      %p114 = scmp.eq.s32.totalorder %s11, 0
      %p115 = por %p113, %p114
      %p116 = scmp.ne.s32.totalorder %s108, %s110
      %p117 = scmp.eq.s32.totalorder %s16, 1
      %p118 = por %p116, %p117
      %p119 = scmp.ne.s32.totalorder %s110, %s111
      %p120 = scmp.eq.s32.totalorder %s16, 0
      %p121 = por %p119, %p120
      %p122 = scmp.ne.s32.totalorder %s110, %s111
      %p123 = scmp.eq.s32.totalorder %s17, 1
      %p124 = por %p122, %p123
      %p126 = scmp.ne.s32.totalorder %s111, %s125
      %p127 = scmp.eq.s32.totalorder %s17, 0
      %p128 = por %p126, %p127
      %s129 = ssub.s32 %s11, %s18
      %p130 = scmp.eq.s32.totalorder %s129, 0
      %s132 = sadd.s32 %s131, 1
      %s133 = scalar_select %p130, %s131, %s132
      %p136 = pneg %p130
      %p137 = scmp.eq.s32.totalorder %s11, 1
      %p138 = por %p136, %p137
      %p139 = scmp.ne.s32.totalorder %s131, %s134
      %p140 = scmp.eq.s32.totalorder %s11, 0
      %p141 = por %p139, %p140
      %p142 = scmp.ne.s32.totalorder %s131, %s134
      %p143 = scmp.eq.s32.totalorder %s16, 1
      %p144 = por %p142, %p143
      %p145 = scmp.ne.s32.totalorder %s134, %s135
      %p146 = scmp.eq.s32.totalorder %s16, 0
      %p147 = por %p145, %p146
      %p148 = scmp.ne.s32.totalorder %s134, %s135
      %p149 = scmp.eq.s32.totalorder %s17, 1
      %p150 = por %p148, %p149
      %p152 = scmp.ne.s32.totalorder %s135, %s151
      %p153 = scmp.eq.s32.totalorder %s17, 0
      %p154 = por %p152, %p153
      %p155 = scmp.le.s32.totalorder 1, %s11
      %p156 = scmp.lt.s32.totalorder %s11, 3
      %p157 = pnand %p155, %p156
      %p158 = pneg %p157
      // Predicated region
      $region9: #{absa_gru_forward.2} parent=5 // pred_check
        _
      $region10: #{absa_gru_forward.2} parent=5 // pred_check_branch
        %160 = sbr.rel (%p157) target = $region12
      $region11: #{absa_gru_forward.2} parent=5 // pred_region
        %s161 = ssub.s32 %s11, 1
        // Predicated region
        $region13: #{absa_gru_forward.2} parent=11 // pred_check
          %p162 = pneg %p58
        $region14: #{absa_gru_forward.2} parent=11 // pred_check_branch
          %164 = sbr.rel (%p162) target = $region16
        $region15: #{absa_gru_forward.2} parent=11 // pred_region
          _
        $region16: #{absa_gru_forward.2} parent=11 // pred_fallthru
          _
        // Predicated region
        $region17: #{absa_gru_forward.2} parent=11 // pred_check
          %p165 = pneg %p79
        $region18: #{absa_gru_forward.2} parent=11 // pred_check_branch
          %167 = sbr.rel (%p165) target = $region20
        $region19: #{absa_gru_forward.2} parent=11 // pred_region
          _
        $region20: #{absa_gru_forward.2} parent=11 // pred_fallthru
          _
        // Predicated region
        $region21: #{absa_gru_forward.2} parent=11 // pred_check
          %p168 = pneg %p100
        $region22: #{absa_gru_forward.2} parent=11 // pred_check_branch
          %170 = sbr.rel (%p168) target = $region24
        $region23: #{absa_gru_forward.2} parent=11 // pred_region
          _
        $region24: #{absa_gru_forward.2} parent=11 // pred_fallthru
          _
        // Predicated region
        $region25: #{absa_gru_forward.2} parent=11 // pred_check
          %p171 = pneg %p121
        $region26: #{absa_gru_forward.2} parent=11 // pred_check_branch
          %173 = sbr.rel (%p171) target = $region28
        $region27: #{absa_gru_forward.2} parent=11 // pred_region
          _
        $region28: #{absa_gru_forward.2} parent=11 // pred_fallthru
          _
      $region12: #{absa_gru_forward.2} parent=5 // pred_fallthru
        _
      %p174 = scmp.lt.s32.totalorder %s11, 2
      // Predicated region
      $region29: #{absa_gru_forward.2} parent=5 // pred_check
        %p175 = pneg %p174
      $region30: #{absa_gru_forward.2} parent=5 // pred_check_branch
        %177 = sbr.rel (%p175) target = $region32
      $region31: #{absa_gru_forward.2} parent=5 // pred_region
        // Predicated region
        $region33: #{absa_gru_forward.2} parent=31 // pred_check
          %p178 = pneg %p31
        $region34: #{absa_gru_forward.2} parent=31 // pred_check_branch
          %180 = sbr.rel (%p178) target = $region36
        $region35: #{absa_gru_forward.2} parent=31 // pred_region
          %s181 = sand.u32 %s21, 1
          %s182 = sand.u32 %s21, 1
          %s183 = smul.addr %s182, 32
          %s184 = scalar_lea.vmem [#allocation3], %s183
          %s185 = smul.addr %s11, 4
          %s186 = scalar_lea.vmem %s0, %s185
          // Predicated region
          $region37: #{absa_gru_forward.2} parent=35 // pred_check
            _
          $region38: #{absa_gru_forward.2} parent=35 // pred_check_branch
            %188 = sbr.rel (0) target = $region40
          $region39: #{absa_gru_forward.2} parent=35 // pred_region
            // Predicated region
            $region41: #{absa_gru_forward.2} parent=39 // pred_check
              _
            $region42: #{absa_gru_forward.2} parent=39 // pred_check_branch
              %190 = sbr.rel target = $region44
            $region43: #{absa_gru_forward.2} parent=39 // pred_region
              // Predicated region
              $region56: #{absa_gru_forward.2} parent=43 // pred_check
                _
              $region57: #{absa_gru_forward.2} parent=43 // pred_check_branch
                %219 = sbr.rel (0) target = $region59
              $region58: #{absa_gru_forward.2} parent=43 // pred_region
                loop: start=0, step=1, limit=1
                $region60: #{absa_gru_forward.2} parent=58 // loop_pre_header
                  _
                $region61: #{absa_gru_forward.2} parent=58 // loop_header
                  %s221 = sphi 0, %s225
                  %p222 = scmp.ge.s32.totalorder %s221, 1
                  %s226 = sphi %s186, %s186
                  %s227 = sphi %s184, %s184
                $region62: #{absa_gru_forward.2} parent=58 // loop_header_branch
                  %224 = sbr.rel (%p222) target = $region66
                $region63: #{absa_gru_forward.2} parent=58 // loop_body
                  _
                $region64: #{absa_gru_forward.2} parent=58 // loop_footer
                  %s225 = sadd.s32 1, %s221
                $region65: #{absa_gru_forward.2} parent=58 // loop_footer_branch
                  %220 = sbr.rel target = $region61
                $region66: #{absa_gru_forward.2} parent=58 // loop_exit
                  _
                loop: start=0, step=1, limit=1
                $region67: #{absa_gru_forward.2} parent=58 // loop_pre_header
                  _
                $region68: #{absa_gru_forward.2} parent=58 // loop_header
                  %s230 = sphi 0, %s234
                  %p231 = scmp.ge.s32.totalorder %s230, 1
                  %s235 = sphi %s186, %s186
                  %s236 = sphi %s184, %s184
                $region69: #{absa_gru_forward.2} parent=58 // loop_header_branch
                  %233 = sbr.rel (%p231) target = $region73
                $region70: #{absa_gru_forward.2} parent=58 // loop_body
                  %v237 = vld [vmem:[%s235] sm:$0xf]
                  %238 = vst [vmem:[%s236] sm:$0xf] %v237
                  %v239 = vld [vmem:[%s235 + $0x8] sm:$0xf]
                  %240 = vst [vmem:[%s236 + $0x4] sm:$0xf] %v239
                  %v241 = vld [vmem:[%s235 + $0x10] sm:$0xf]
                  %242 = vst [vmem:[%s236 + $0x8] sm:$0xf] %v241
                  %v243 = vld [vmem:[%s235 + $0x18] sm:$0xf]
                  %244 = vst [vmem:[%s236 + $0xc] sm:$0xf] %v243
                  %v245 = vld [vmem:[%s235 + $0x20] sm:$0xf]
                  %246 = vst [vmem:[%s236 + $0x10] sm:$0xf] %v245
                  %v247 = vld [vmem:[%s235 + $0x28] sm:$0xf]
                  %248 = vst [vmem:[%s236 + $0x14] sm:$0xf] %v247
                  %v249 = vld [vmem:[%s235 + $0x30] sm:$0xf]
                  %250 = vst [vmem:[%s236 + $0x18] sm:$0xf] %v249
                  %v251 = vld [vmem:[%s235 + $0x38] sm:$0xf]
                  %252 = vst [vmem:[%s236 + $0x1c] sm:$0xf] %v251
                $region71: #{absa_gru_forward.2} parent=58 // loop_footer
                  %s234 = sadd.s32 1, %s230
                $region72: #{absa_gru_forward.2} parent=58 // loop_footer_branch
                  %229 = sbr.rel target = $region68
                $region73: #{absa_gru_forward.2} parent=58 // loop_exit
                  _
              $region59: #{absa_gru_forward.2} parent=43 // pred_fallthru
                _
            $region44: #{absa_gru_forward.2} parent=39 // pred_fallthru
              _
            // Predicated region
            $region45: #{absa_gru_forward.2} parent=39 // pred_check
              _
            $region46: #{absa_gru_forward.2} parent=39 // pred_check_branch
              %192 = sbr.rel (0) target = $region48
            $region47: #{absa_gru_forward.2} parent=39 // pred_region
              loop: start=0, step=1, limit=1
              $region49: #{absa_gru_forward.2} parent=47 // loop_pre_header
                _
              $region50: #{absa_gru_forward.2} parent=47 // loop_header
                %s195 = sphi 0, %s199
                %p196 = scmp.ge.s32.totalorder %s195, 1
                %s200 = sphi %s186, %s186
                %s201 = sphi %s184, %s184
              $region51: #{absa_gru_forward.2} parent=47 // loop_header_branch
                %198 = sbr.rel (%p196) target = $region55
              $region52: #{absa_gru_forward.2} parent=47 // loop_body
                %v202 = vld [vmem:[%s200] sm:$0xf]
                %203 = vst [vmem:[%s201] sm:$0xf] %v202
                %v204 = vld [vmem:[%s200 + $0x8] sm:$0xf]
                %205 = vst [vmem:[%s201 + $0x4] sm:$0xf] %v204
                %v206 = vld [vmem:[%s200 + $0x10] sm:$0xf]
                %207 = vst [vmem:[%s201 + $0x8] sm:$0xf] %v206
                %v208 = vld [vmem:[%s200 + $0x18] sm:$0xf]
                %209 = vst [vmem:[%s201 + $0xc] sm:$0xf] %v208
                %v210 = vld [vmem:[%s200 + $0x20] sm:$0xf]
                %211 = vst [vmem:[%s201 + $0x10] sm:$0xf] %v210
                %v212 = vld [vmem:[%s200 + $0x28] sm:$0xf]
                %213 = vst [vmem:[%s201 + $0x14] sm:$0xf] %v212
                %v214 = vld [vmem:[%s200 + $0x30] sm:$0xf]
                %215 = vst [vmem:[%s201 + $0x18] sm:$0xf] %v214
                %v216 = vld [vmem:[%s200 + $0x38] sm:$0xf]
                %217 = vst [vmem:[%s201 + $0x1c] sm:$0xf] %v216
              $region53: #{absa_gru_forward.2} parent=47 // loop_footer
                %s199 = sadd.s32 1, %s195
              $region54: #{absa_gru_forward.2} parent=47 // loop_footer_branch
                %194 = sbr.rel target = $region50
              $region55: #{absa_gru_forward.2} parent=47 // loop_exit
                _
            $region48: #{absa_gru_forward.2} parent=39 // pred_fallthru
              _
          $region40: #{absa_gru_forward.2} parent=35 // pred_fallthru
            _
          %253 = vnop
        $region36: #{absa_gru_forward.2} parent=31 // pred_fallthru
          _
      $region32: #{absa_gru_forward.2} parent=5 // pred_fallthru
        _
      %p254 = scmp.le.s32.totalorder 1, %s11
      %p255 = scmp.lt.s32.totalorder %s11, 3
      %p256 = pnand %p254, %p255
      %p257 = pneg %p256
      // Predicated region
      $region74: #{absa_gru_forward.2} parent=5 // pred_check
        _
      $region75: #{absa_gru_forward.2} parent=5 // pred_check_branch
        %259 = sbr.rel (%p256) target = $region77
      $region76: #{absa_gru_forward.2} parent=5 // pred_region
        %s260 = ssub.s32 %s11, 1
        %s261 = sand.u32 %s24, 1
        %s262 = sand.u32 %s24, 1
        %s263 = smul.addr %s262, 32
        %s264 = scalar_lea.vmem [#allocation3], %s263
        // Predicated region
        $region78: #{absa_gru_forward.2} parent=76 // pred_check
          %p265 = pneg %p37
        $region79: #{absa_gru_forward.2} parent=76 // pred_check_branch
          %267 = sbr.rel (%p265) target = $region81
        $region80: #{absa_gru_forward.2} parent=76 // pred_region
          _
        $region81: #{absa_gru_forward.2} parent=76 // pred_fallthru
          _
        %s268 = sand.u32 %s24, 1
        %s269 = sand.u32 %s24, 1
        %s270 = smul.addr %s269, 32
        %s271 = scalar_lea.vmem [#allocation3], %s270
        %p272 = pneg %p37
        %p273 = pneg %p34
        %p274 = pneg %p58
        %p275 = pneg %p55
        %p276 = pneg %p79
        %p277 = pneg %p76
        %p278 = pneg %p100
        %p279 = pneg %p97
        %p280 = pneg %p121
        %p281 = pneg %p118
        %p282 = pneg %p147
        %p283 = pneg %p144
        %s284 = sand.u32 %s134, 1
        %s285 = sand.u32 %s134, 1
        %s286 = smul.addr %s285, 64
        %s287 = scalar_lea.vmem [#allocation4], %s286
        %v289 = vld [vmem:[%s264] sm:$0xf]
        %v290 = vld [vmem:[%s264 + $0x4] sm:$0xf]
        %v291 = vld [vmem:[%s264 + $0x8] sm:$0xf]
        %v292 = vld [vmem:[%s264 + $0xc] sm:$0xf]
        %v293 = vld [vmem:[%s264 + $0x10] sm:$0xf]
        %v294 = vld [vmem:[%s264 + $0x14] sm:$0xf]
        %v295 = vld [vmem:[%s264 + $0x18] sm:$0xf]
        %v296 = vld [vmem:[%s264 + $0x1c] sm:$0xf]
        %v297 = vld [vmem:[%s1] sm:$0xff]
        %v298 = vld [vmem:[%s1 + $0x8] sm:$0xff]
        %v299 = vld [vmem:[%s2] sm:$0x3]
        %v301 = vlaneseq
        %v302 = vshrl.u32 %v301, 7
        %v303 = vsub.s32 0, %v302
        %v304 = vrot.slane %v299, %v303
        %v305 = vlaneseq
        %v306 = vshrl.u32 %v305, 7
        %v307 = vsub.s32 1, %v306
        %v308 = vrot.slane %v299, %v307
        %v319 = vunpack.c.l.b16 %v289
        %v320 = vunpack.c.l.b16 %v290
        %v321 = vunpack.c.l.b16 %v291
        %v322 = vunpack.c.l.b16 %v292
        %v323 = vunpack.c.l.b16 %v293
        %v324 = vunpack.c.l.b16 %v294
        %v325 = vunpack.c.l.b16 %v295
        %v326 = vunpack.c.l.b16 %v296
        %v327 = vpack.c.b16 %v320, %v319
        %v328 = vpack.c.b16 %v322, %v321
        %v329 = vpack.c.b16 %v324, %v323
        %v330 = vpack.c.b16 %v326, %v325
        %v333 = vunpack.c.l.b16 %v297
        %v334 = vunpack.c.h.b16 %v297
        %v335 = vunpack.c.l.b16 %v298
        %v336 = vunpack.c.h.b16 %v298
        %v337 = vpack.c.b16 %v335, %v333
        %v338 = vpack.c.b16 %v336, %v334
        %vm341 = vcmask 130048
        %v343 = vsel %vm341, %v327, 0
        %v346 = vsel %vm341, %v328, 0
        %v349 = vsel %vm341, %v329, 0
        %v352 = vsel %vm341, %v330, 0
        %354 = vmatprep.subr.bf16.mxu0 %v338
        %355 = vmatpush1.bf16.msra.mxu0 %v337
        %356 = vmatprep.subr.bf16.mxu0 0
        %357 = vmatpush1.bf16.msra.mxu0 0
        %358 = vmatprep.subr.bf16.mxu0 0
        %359 = vmatpush1.bf16.msra.mxu0 0
        %360 = vmatprep.subr.bf16.mxu0 0
        %361 = vmatpush1.bf16.msra.mxu0 0
        %362 = vmatprep.subr.bf16.mxu0 0
        %363 = vmatpush1.bf16.msra.mxu0 0
        %364 = vmatprep.subr.bf16.mxu0 0
        %365 = vmatpush1.bf16.msra.mxu0 0
        %366 = vmatprep.subr.bf16.mxu0 0
        %367 = vmatpush1.bf16.msra.mxu0 0
        %368 = vmatprep.subr.bf16.mxu0 0
        %369 = vmatpush1.bf16.msra.mxu0 0
        %370 = vmatprep.subr.bf16.mxu0 0
        %371 = vmatpush1.bf16.msra.mxu0 0
        %372 = vmatprep.subr.bf16.mxu0 0
        %373 = vmatpush1.bf16.msra.mxu0 0
        %374 = vmatprep.subr.bf16.mxu0 0
        %375 = vmatpush1.bf16.msra.mxu0 0
        %376 = vmatprep.subr.bf16.mxu0 0
        %377 = vmatpush1.bf16.msra.mxu0 0
        %378 = vmatprep.subr.bf16.mxu0 0
        %379 = vmatpush1.bf16.msra.mxu0 0
        %380 = vmatprep.subr.bf16.mxu0 0
        %381 = vmatpush1.bf16.msra.mxu0 0
        %382 = vmatprep.subr.bf16.mxu0 0
        %383 = vmatpush1.bf16.msra.mxu0 0
        %384 = vmatprep.subr.bf16.mxu0 0
        %385 = vmatpush1.bf16.msra.mxu0 0
        %386 = vmatprep.mubr.bf16.mxu0 0
        %387 = vmatmul.mubr.bf16.gmra.mrb[0].mxu0 %v343
        %v388 = vpop.f32.mrb[0].mxu0
        %v389 = vadd.f32 %v304, %v388
        %v390 = vpop.f32.mrb[0].mxu0
        %v391 = vadd.f32 %v308, %v390
        %v392 = vpop.f32.mrb[0].mxu0
        %v393 = vadd.f32 %v304, %v392
        %v394 = vpop.f32.mrb[0].mxu0
        %v395 = vadd.f32 %v308, %v394
        %396 = vmatprep.mubr.bf16.mxu0 0
        %397 = vmatmul.mubr.bf16.gmra.mrb[0].mxu0 %v346
        %v398 = vpop.f32.mrb[0].mxu0
        %v399 = vadd.f32 %v304, %v398
        %v400 = vpop.f32.mrb[0].mxu0
        %v401 = vadd.f32 %v308, %v400
        %v402 = vpop.f32.mrb[0].mxu0
        %v403 = vadd.f32 %v304, %v402
        %v404 = vpop.f32.mrb[0].mxu0
        %v405 = vadd.f32 %v308, %v404
        %406 = vmatprep.mubr.bf16.mxu0 0
        %407 = vmatmul.mubr.bf16.gmra.mrb[0].mxu0 %v349
        %v408 = vpop.f32.mrb[0].mxu0
        %v409 = vadd.f32 %v304, %v408
        %v410 = vpop.f32.mrb[0].mxu0
        %v411 = vadd.f32 %v308, %v410
        %v412 = vpop.f32.mrb[0].mxu0
        %v413 = vadd.f32 %v304, %v412
        %v414 = vpop.f32.mrb[0].mxu0
        %v415 = vadd.f32 %v308, %v414
        %416 = vmatprep.mubr.bf16.mxu0 0
        %417 = vmatmul.mubr.bf16.gmra.mrb[0].mxu0 %v352
        %v418 = vpop.f32.mrb[0].mxu0
        %v419 = vadd.f32 %v304, %v418
        %v420 = vpop.f32.mrb[0].mxu0
        %v421 = vadd.f32 %v308, %v420
        %v422 = vpop.f32.mrb[0].mxu0
        %v423 = vadd.f32 %v304, %v422
        %v424 = vpop.f32.mrb[0].mxu0
        %v425 = vadd.f32 %v308, %v424
        %426 = vdwg.mxu0
        %427 = vst [vmem:[#allocation2] sm:$0xff] %v389
        %vm428 = vcmask 523264
        %429 = vst.msk [vmem:[#allocation2 + $0x8] sm:$0xff] %vm428, %v391
        %430 = vst [vmem:[#allocation2 + $0x10] sm:$0xff] %v393
        %431 = vst.msk [vmem:[#allocation2 + $0x18] sm:$0xff] %vm428, %v395
        %432 = vst [vmem:[#allocation2 + $0x20] sm:$0xff] %v399
        %433 = vst.msk [vmem:[#allocation2 + $0x28] sm:$0xff] %vm428, %v401
        %434 = vst [vmem:[#allocation2 + $0x30] sm:$0xff] %v403
        %435 = vst.msk [vmem:[#allocation2 + $0x38] sm:$0xff] %vm428, %v405
        %436 = vst [vmem:[#allocation2 + $0x40] sm:$0xff] %v409
        %437 = vst.msk [vmem:[#allocation2 + $0x48] sm:$0xff] %vm428, %v411
        %438 = vst [vmem:[#allocation2 + $0x50] sm:$0xff] %v413
        %439 = vst.msk [vmem:[#allocation2 + $0x58] sm:$0xff] %vm428, %v415
        %440 = vst [vmem:[#allocation2 + $0x60] sm:$0xff] %v419
        %441 = vst.msk [vmem:[#allocation2 + $0x68] sm:$0xff] %vm428, %v421
        %442 = vst [vmem:[#allocation2 + $0x70] sm:$0xff] %v423
        %443 = vst.msk [vmem:[#allocation2 + $0x78] sm:$0xff] %vm428, %v425
        %v444 = vld [vmem:[%s3] sm:$0xff]
        %v445 = vld [vmem:[%s3 + $0x8] sm:$0xff]
        %v446 = vld [vmem:[%s3 + $0x10] sm:$0xff]
        %v447 = vld [vmem:[%s3 + $0x18] sm:$0xff]
        %v448 = vld [vmem:[%s3 + $0x20] sm:$0xff]
        %v449 = vld [vmem:[%s3 + $0x28] sm:$0xff]
        %v450 = vld [vmem:[%s3 + $0x30] sm:$0xff]
        %v451 = vld [vmem:[%s3 + $0x38] sm:$0xff]
        %v452 = vld [vmem:[%s3 + $0x40] sm:$0xff]
        %v453 = vld [vmem:[%s3 + $0x48] sm:$0xff]
        %v454 = vld [vmem:[%s3 + $0x50] sm:$0xff]
        %v455 = vld [vmem:[%s3 + $0x58] sm:$0xff]
        %v456 = vld [vmem:[%s3 + $0x60] sm:$0xff]
        %v457 = vld [vmem:[%s3 + $0x68] sm:$0xff]
        %v458 = vld [vmem:[%s3 + $0x70] sm:$0xff]
        %v459 = vld [vmem:[%s3 + $0x78] sm:$0xff]
        %v460 = vld [vmem:[%s4] sm:$0x1]
        %v462 = vlaneseq
        %v463 = vshrl.u32 %v462, 7
        %v464 = vsub.s32 0, %v463
        %v465 = vrot.slane %v460, %v464
        %v467 = vlaneseq
        %v468 = vand.u32 %v467, 127
        %v469 = vadd.s32 %v468, 128
        %vm470 = vcmp.lt.s32.totalorder %v468, 0
        %v471 = vsub.s32 0, %v468
        %v472 = vsel %vm470, %v471, %v468
        %v473 = vshrl.u32 %v472, 6
        %v474 = vand.u32 %v472, 63
        %v475 = vsub.s32 0, %v474
        %v476 = vsel %vm470, %v475, %v474
        %vm477 = vcmp.lt.s32.totalorder %v469, 0
        %v478 = vsub.s32 0, %v469
        %v479 = vsel %vm477, %v478, %v469
        %v480 = vshrl.u32 %v479, 6
        %v481 = vand.u32 %v479, 63
        %v482 = vsub.s32 0, %v481
        %v483 = vsel %vm477, %v482, %v481
        %vm484 = vcmp.ne.s32.totalorder %v476, 0
        %vm485 = vcmp.ne.s32.totalorder %v483, 0
        %vm486 = vcmp.lt.s32.totalorder %v476, 0
        %vm487 = vcmp.lt.s32.totalorder %v483, 0
        %vm488 = vmand %vm486, %vm484
        %vm489 = vmand %vm487, %vm485
        %v490 = vadd.s32 %v476, 64
        %v491 = vadd.s32 %v483, 64
        %v492 = vsel %vm488, %v490, %v476
        %v493 = vsel %vm489, %v491, %v483
        %vm494 = vcmp.lt.s32.totalorder %v492, 32
        %vm495 = vcmp.lt.s32.totalorder %v493, 32
        loop: start=0, step=1, limit=8
        $region82: #{absa_gru_forward.2} parent=76 // loop_pre_header
          _
        $region83: #{absa_gru_forward.2} parent=76 // loop_header
          %s497 = sphi 0, %s501
          %p498 = scmp.ge.s32.totalorder %s497, 8
          %v502 = vphi 0.0, %v1192
        $region84: #{absa_gru_forward.2} parent=76 // loop_header_branch
          %500 = sbr.rel (%p498) target = $region88
        $region85: #{absa_gru_forward.2} parent=76 // loop_body
          %s503 = smul.u32 %s497, 8
          %s504 = ssub.s32 7, %s497
          %s505 = smul.u32 %s504, 8
          %s506 = sshra.s32 %s503, 3
          %s507 = sand.u32 %s503, 7
          %s508 = smul.u32 %s506, 2
          %s509 = smul.addr %s508, 8
          %s510 = scalar_lea.vmem [#allocation2], %s509
          %v511 = vld [vmem:[%s510] sm:$0xff]
          %v512 = vld [vmem:[%s510 + $0x8] sm:$0xff]
          %s513 = sshra.s32 %s505, 3
          %s514 = sand.u32 %s505, 7
          %s515 = smul.u32 %s513, 2
          %s516 = smul.addr %s515, 8
          %s517 = scalar_lea.vmem [#allocation2], %s516
          %v518 = vld [vmem:[%s517] sm:$0xff]
          %v519 = vld [vmem:[%s517 + $0x8] sm:$0xff]
          %v520 = vsel %vm494, %v511, %v518
          %v521 = vsel %vm495, %v512, %v519
          %523 = vrot.lane.b32.xlu0 %v502, 64
          %v524 = vpop.permute.xlu0 %523
          %v525 = vsel %vm428, %v524, 0
          %v527 = vand.u32 %v445, 4294901760
          %528 = vmatprep.subr.mxu0 %v527
          %v529 = vand.u32 %v444, 4294901760
          %530 = vmatpush1.msra.mxu0 %v529
          %v531 = vand.u32 %v447, 4294901760
          %532 = vmatprep.subr.mxu0 %v531
          %v533 = vand.u32 %v446, 4294901760
          %534 = vmatpush1.msra.mxu0 %v533
          %v535 = vand.u32 %v449, 4294901760
          %536 = vmatprep.subr.mxu0 %v535
          %v537 = vand.u32 %v448, 4294901760
          %538 = vmatpush1.msra.mxu0 %v537
          %v539 = vand.u32 %v451, 4294901760
          %540 = vmatprep.subr.mxu0 %v539
          %v541 = vand.u32 %v450, 4294901760
          %542 = vmatpush1.msra.mxu0 %v541
          %v543 = vand.u32 %v453, 4294901760
          %544 = vmatprep.subr.mxu0 %v543
          %v545 = vand.u32 %v452, 4294901760
          %546 = vmatpush1.msra.mxu0 %v545
          %v547 = vand.u32 %v455, 4294901760
          %548 = vmatprep.subr.mxu0 %v547
          %v549 = vand.u32 %v454, 4294901760
          %550 = vmatpush1.msra.mxu0 %v549
          %v551 = vand.u32 %v457, 4294901760
          %552 = vmatprep.subr.mxu0 %v551
          %v553 = vand.u32 %v456, 4294901760
          %554 = vmatpush1.msra.mxu0 %v553
          %v555 = vand.u32 %v459, 4294901760
          %556 = vmatprep.subr.mxu0 %v555
          %v557 = vand.u32 %v458, 4294901760
          %558 = vmatpush1.msra.mxu0 %v557
          %559 = vmatprep.subr.mxu0 0.0
          %560 = vmatpush1.msra.mxu0 0.0
          %561 = vmatprep.subr.mxu0 0.0
          %562 = vmatpush1.msra.mxu0 0.0
          %563 = vmatprep.subr.mxu0 0.0
          %564 = vmatpush1.msra.mxu0 0.0
          %565 = vmatprep.subr.mxu0 0.0
          %566 = vmatpush1.msra.mxu0 0.0
          %567 = vmatprep.subr.mxu0 0.0
          %568 = vmatpush1.msra.mxu0 0.0
          %569 = vmatprep.subr.mxu0 0.0
          %570 = vmatpush1.msra.mxu0 0.0
          %571 = vmatprep.subr.mxu0 0.0
          %572 = vmatpush1.msra.mxu0 0.0
          %573 = vmatprep.subr.mxu0 0.0
          %574 = vmatpush1.msra.mxu0 0.0
          %575 = vmatprep.subr.mxu0 0.0
          %576 = vmatpush1.msra.mxu0 0.0
          %577 = vmatprep.subr.mxu0 0.0
          %578 = vmatpush1.msra.mxu0 0.0
          %579 = vmatprep.subr.mxu0 0.0
          %580 = vmatpush1.msra.mxu0 0.0
          %581 = vmatprep.subr.mxu0 0.0
          %582 = vmatpush1.msra.mxu0 0.0
          %583 = vmatprep.subr.mxu0 0.0
          %584 = vmatpush1.msra.mxu0 0.0
          %585 = vmatprep.subr.mxu0 0.0
          %586 = vmatpush1.msra.mxu0 0.0
          %587 = vmatprep.subr.mxu0 0.0
          %588 = vmatpush1.msra.mxu0 0.0
          %589 = vmatprep.subr.mxu0 0.0
          %590 = vmatpush1.msra.mxu0 0.0
          %591 = vmatprep.subr.mxu0 0.0
          %592 = vmatpush1.msra.mxu0 0.0
          %593 = vmatprep.subr.mxu0 0.0
          %594 = vmatpush1.msra.mxu0 0.0
          %595 = vmatprep.subr.mxu0 0.0
          %596 = vmatpush1.msra.mxu0 0.0
          %597 = vmatprep.subr.mxu0 0.0
          %598 = vmatpush1.msra.mxu0 0.0
          %599 = vmatprep.subr.mxu0 0.0
          %600 = vmatpush1.msra.mxu0 0.0
          %601 = vmatprep.subr.mxu0 0.0
          %602 = vmatpush1.msra.mxu0 0.0
          %603 = vmatprep.subr.mxu0 0.0
          %604 = vmatpush1.msra.mxu0 0.0
          %605 = vmatprep.subr.mxu0 0.0
          %606 = vmatpush1.msra.mxu0 0.0
          %607 = vmatprep.mubr.f32.mxu0 0.0
          %v608 = vand.u32 %v525, 4294901760
          %v609 = vsub.f32 %v525, %v608
          %v610 = vand.u32 %v609, 4294901760
          %v611 = vsub.f32 %v609, %v610
          %v612 = vand.u32 %v611, 4294901760
          %613 = vmatmul.mubr.f32.gmra.mrb[0].mxu0 %v612
          %v614 = vpop.f32.mrb[0].mxu0
          %v615 = vadd.f32 0.0, %v614
          %v616 = vpop.f32.mrb[0].mxu0
          %v617 = vadd.f32 0.0, %v616
          %618 = vdwg.mxu0
          %v619 = vand.u32 %v445, 4294901760
          %v620 = vsub.f32 %v445, %v619
          %v621 = vand.u32 %v620, 4294901760
          %v622 = vsub.f32 %v620, %v621
          %v623 = vand.u32 %v622, 4294901760
          %624 = vmatprep.subr.mxu0 %v623
          %v625 = vand.u32 %v444, 4294901760
          %v626 = vsub.f32 %v444, %v625
          %v627 = vand.u32 %v626, 4294901760
          %v628 = vsub.f32 %v626, %v627
          %v629 = vand.u32 %v628, 4294901760
          %630 = vmatpush1.msra.mxu0 %v629
          %v631 = vand.u32 %v447, 4294901760
          %v632 = vsub.f32 %v447, %v631
          %v633 = vand.u32 %v632, 4294901760
          %v634 = vsub.f32 %v632, %v633
          %v635 = vand.u32 %v634, 4294901760
          %636 = vmatprep.subr.mxu0 %v635
          %v637 = vand.u32 %v446, 4294901760
          %v638 = vsub.f32 %v446, %v637
          %v639 = vand.u32 %v638, 4294901760
          %v640 = vsub.f32 %v638, %v639
          %v641 = vand.u32 %v640, 4294901760
          %642 = vmatpush1.msra.mxu0 %v641
          %v643 = vand.u32 %v449, 4294901760
          %v644 = vsub.f32 %v449, %v643
          %v645 = vand.u32 %v644, 4294901760
          %v646 = vsub.f32 %v644, %v645
          %v647 = vand.u32 %v646, 4294901760
          %648 = vmatprep.subr.mxu0 %v647
          %v649 = vand.u32 %v448, 4294901760
          %v650 = vsub.f32 %v448, %v649
          %v651 = vand.u32 %v650, 4294901760
          %v652 = vsub.f32 %v650, %v651
          %v653 = vand.u32 %v652, 4294901760
          %654 = vmatpush1.msra.mxu0 %v653
          %v655 = vand.u32 %v451, 4294901760
          %v656 = vsub.f32 %v451, %v655
          %v657 = vand.u32 %v656, 4294901760
          %v658 = vsub.f32 %v656, %v657
          %v659 = vand.u32 %v658, 4294901760
          %660 = vmatprep.subr.mxu0 %v659
          %v661 = vand.u32 %v450, 4294901760
          %v662 = vsub.f32 %v450, %v661
          %v663 = vand.u32 %v662, 4294901760
          %v664 = vsub.f32 %v662, %v663
          %v665 = vand.u32 %v664, 4294901760
          %666 = vmatpush1.msra.mxu0 %v665
          %v667 = vand.u32 %v453, 4294901760
          %v668 = vsub.f32 %v453, %v667
          %v669 = vand.u32 %v668, 4294901760
          %v670 = vsub.f32 %v668, %v669
          %v671 = vand.u32 %v670, 4294901760
          %672 = vmatprep.subr.mxu0 %v671
          %v673 = vand.u32 %v452, 4294901760
          %v674 = vsub.f32 %v452, %v673
          %v675 = vand.u32 %v674, 4294901760
          %v676 = vsub.f32 %v674, %v675
          %v677 = vand.u32 %v676, 4294901760
          %678 = vmatpush1.msra.mxu0 %v677
          %v679 = vand.u32 %v455, 4294901760
          %v680 = vsub.f32 %v455, %v679
          %v681 = vand.u32 %v680, 4294901760
          %v682 = vsub.f32 %v680, %v681
          %v683 = vand.u32 %v682, 4294901760
          %684 = vmatprep.subr.mxu0 %v683
          %v685 = vand.u32 %v454, 4294901760
          %v686 = vsub.f32 %v454, %v685
          %v687 = vand.u32 %v686, 4294901760
          %v688 = vsub.f32 %v686, %v687
          %v689 = vand.u32 %v688, 4294901760
          %690 = vmatpush1.msra.mxu0 %v689
          %v691 = vand.u32 %v457, 4294901760
          %v692 = vsub.f32 %v457, %v691
          %v693 = vand.u32 %v692, 4294901760
          %v694 = vsub.f32 %v692, %v693
          %v695 = vand.u32 %v694, 4294901760
          %696 = vmatprep.subr.mxu0 %v695
          %v697 = vand.u32 %v456, 4294901760
          %v698 = vsub.f32 %v456, %v697
          %v699 = vand.u32 %v698, 4294901760
          %v700 = vsub.f32 %v698, %v699
          %v701 = vand.u32 %v700, 4294901760
          %702 = vmatpush1.msra.mxu0 %v701
          %v703 = vand.u32 %v459, 4294901760
          %v704 = vsub.f32 %v459, %v703
          %v705 = vand.u32 %v704, 4294901760
          %v706 = vsub.f32 %v704, %v705
          %v707 = vand.u32 %v706, 4294901760
          %708 = vmatprep.subr.mxu0 %v707
          %v709 = vand.u32 %v458, 4294901760
          %v710 = vsub.f32 %v458, %v709
          %v711 = vand.u32 %v710, 4294901760
          %v712 = vsub.f32 %v710, %v711
          %v713 = vand.u32 %v712, 4294901760
          %714 = vmatpush1.msra.mxu0 %v713
          %715 = vmatprep.subr.mxu0 0.0
          %716 = vmatpush1.msra.mxu0 0.0
          %717 = vmatprep.subr.mxu0 0.0
          %718 = vmatpush1.msra.mxu0 0.0
          %719 = vmatprep.subr.mxu0 0.0
          %720 = vmatpush1.msra.mxu0 0.0
          %721 = vmatprep.subr.mxu0 0.0
          %722 = vmatpush1.msra.mxu0 0.0
          %723 = vmatprep.subr.mxu0 0.0
          %724 = vmatpush1.msra.mxu0 0.0
          %725 = vmatprep.subr.mxu0 0.0
          %726 = vmatpush1.msra.mxu0 0.0
          %727 = vmatprep.subr.mxu0 0.0
          %728 = vmatpush1.msra.mxu0 0.0
          %729 = vmatprep.subr.mxu0 0.0
          %730 = vmatpush1.msra.mxu0 0.0
          %731 = vmatprep.subr.mxu0 0.0
          %732 = vmatpush1.msra.mxu0 0.0
          %733 = vmatprep.subr.mxu0 0.0
          %734 = vmatpush1.msra.mxu0 0.0
          %735 = vmatprep.subr.mxu0 0.0
          %736 = vmatpush1.msra.mxu0 0.0
          %737 = vmatprep.subr.mxu0 0.0
          %738 = vmatpush1.msra.mxu0 0.0
          %739 = vmatprep.subr.mxu0 0.0
          %740 = vmatpush1.msra.mxu0 0.0
          %741 = vmatprep.subr.mxu0 0.0
          %742 = vmatpush1.msra.mxu0 0.0
          %743 = vmatprep.subr.mxu0 0.0
          %744 = vmatpush1.msra.mxu0 0.0
          %745 = vmatprep.subr.mxu0 0.0
          %746 = vmatpush1.msra.mxu0 0.0
          %747 = vmatprep.subr.mxu0 0.0
          %748 = vmatpush1.msra.mxu0 0.0
          %749 = vmatprep.subr.mxu0 0.0
          %750 = vmatpush1.msra.mxu0 0.0
          %751 = vmatprep.subr.mxu0 0.0
          %752 = vmatpush1.msra.mxu0 0.0
          %753 = vmatprep.subr.mxu0 0.0
          %754 = vmatpush1.msra.mxu0 0.0
          %755 = vmatprep.subr.mxu0 0.0
          %756 = vmatpush1.msra.mxu0 0.0
          %757 = vmatprep.subr.mxu0 0.0
          %758 = vmatpush1.msra.mxu0 0.0
          %759 = vmatprep.subr.mxu0 0.0
          %760 = vmatpush1.msra.mxu0 0.0
          %761 = vmatprep.subr.mxu0 0.0
          %762 = vmatpush1.msra.mxu0 0.0
          %763 = vmatprep.mubr.f32.mxu0 0.0
          %v764 = vand.u32 %v525, 4294901760
          %765 = vmatmul.mubr.f32.gmra.mrb[0].mxu0 %v764
          %v766 = vpop.f32.mrb[0].mxu0
          %v767 = vadd.f32 %v615, %v766
          %v768 = vpop.f32.mrb[0].mxu0
          %v769 = vadd.f32 %v617, %v768
          %770 = vdwg.mxu0
          %v771 = vand.u32 %v445, 4294901760
          %v772 = vsub.f32 %v445, %v771
          %773 = vmatprep.subr.mxu0 %v772
          %v774 = vand.u32 %v444, 4294901760
          %v775 = vsub.f32 %v444, %v774
          %776 = vmatpush1.msra.mxu0 %v775
          %v777 = vand.u32 %v447, 4294901760
          %v778 = vsub.f32 %v447, %v777
          %779 = vmatprep.subr.mxu0 %v778
          %v780 = vand.u32 %v446, 4294901760
          %v781 = vsub.f32 %v446, %v780
          %782 = vmatpush1.msra.mxu0 %v781
          %v783 = vand.u32 %v449, 4294901760
          %v784 = vsub.f32 %v449, %v783
          %785 = vmatprep.subr.mxu0 %v784
          %v786 = vand.u32 %v448, 4294901760
          %v787 = vsub.f32 %v448, %v786
          %788 = vmatpush1.msra.mxu0 %v787
          %v789 = vand.u32 %v451, 4294901760
          %v790 = vsub.f32 %v451, %v789
          %791 = vmatprep.subr.mxu0 %v790
          %v792 = vand.u32 %v450, 4294901760
          %v793 = vsub.f32 %v450, %v792
          %794 = vmatpush1.msra.mxu0 %v793
          %v795 = vand.u32 %v453, 4294901760
          %v796 = vsub.f32 %v453, %v795
          %797 = vmatprep.subr.mxu0 %v796
          %v798 = vand.u32 %v452, 4294901760
          %v799 = vsub.f32 %v452, %v798
          %800 = vmatpush1.msra.mxu0 %v799
          %v801 = vand.u32 %v455, 4294901760
          %v802 = vsub.f32 %v455, %v801
          %803 = vmatprep.subr.mxu0 %v802
          %v804 = vand.u32 %v454, 4294901760
          %v805 = vsub.f32 %v454, %v804
          %806 = vmatpush1.msra.mxu0 %v805
          %v807 = vand.u32 %v457, 4294901760
          %v808 = vsub.f32 %v457, %v807
          %809 = vmatprep.subr.mxu0 %v808
          %v810 = vand.u32 %v456, 4294901760
          %v811 = vsub.f32 %v456, %v810
          %812 = vmatpush1.msra.mxu0 %v811
          %v813 = vand.u32 %v459, 4294901760
          %v814 = vsub.f32 %v459, %v813
          %815 = vmatprep.subr.mxu0 %v814
          %v816 = vand.u32 %v458, 4294901760
          %v817 = vsub.f32 %v458, %v816
          %818 = vmatpush1.msra.mxu0 %v817
          %819 = vmatprep.subr.mxu0 0.0
          %820 = vmatpush1.msra.mxu0 0.0
          %821 = vmatprep.subr.mxu0 0.0
          %822 = vmatpush1.msra.mxu0 0.0
          %823 = vmatprep.subr.mxu0 0.0
          %824 = vmatpush1.msra.mxu0 0.0
          %825 = vmatprep.subr.mxu0 0.0
          %826 = vmatpush1.msra.mxu0 0.0
          %827 = vmatprep.subr.mxu0 0.0
          %828 = vmatpush1.msra.mxu0 0.0
          %829 = vmatprep.subr.mxu0 0.0
          %830 = vmatpush1.msra.mxu0 0.0
          %831 = vmatprep.subr.mxu0 0.0
          %832 = vmatpush1.msra.mxu0 0.0
          %833 = vmatprep.subr.mxu0 0.0
          %834 = vmatpush1.msra.mxu0 0.0
          %835 = vmatprep.subr.mxu0 0.0
          %836 = vmatpush1.msra.mxu0 0.0
          %837 = vmatprep.subr.mxu0 0.0
          %838 = vmatpush1.msra.mxu0 0.0
          %839 = vmatprep.subr.mxu0 0.0
          %840 = vmatpush1.msra.mxu0 0.0
          %841 = vmatprep.subr.mxu0 0.0
          %842 = vmatpush1.msra.mxu0 0.0
          %843 = vmatprep.subr.mxu0 0.0
          %844 = vmatpush1.msra.mxu0 0.0
          %845 = vmatprep.subr.mxu0 0.0
          %846 = vmatpush1.msra.mxu0 0.0
          %847 = vmatprep.subr.mxu0 0.0
          %848 = vmatpush1.msra.mxu0 0.0
          %849 = vmatprep.subr.mxu0 0.0
          %850 = vmatpush1.msra.mxu0 0.0
          %851 = vmatprep.subr.mxu0 0.0
          %852 = vmatpush1.msra.mxu0 0.0
          %853 = vmatprep.subr.mxu0 0.0
          %854 = vmatpush1.msra.mxu0 0.0
          %855 = vmatprep.subr.mxu0 0.0
          %856 = vmatpush1.msra.mxu0 0.0
          %857 = vmatprep.subr.mxu0 0.0
          %858 = vmatpush1.msra.mxu0 0.0
          %859 = vmatprep.subr.mxu0 0.0
          %860 = vmatpush1.msra.mxu0 0.0
          %861 = vmatprep.subr.mxu0 0.0
          %862 = vmatpush1.msra.mxu0 0.0
          %863 = vmatprep.subr.mxu0 0.0
          %864 = vmatpush1.msra.mxu0 0.0
          %865 = vmatprep.subr.mxu0 0.0
          %866 = vmatpush1.msra.mxu0 0.0
          %867 = vmatprep.mubr.f32.mxu0 0.0
          %v868 = vand.u32 %v525, 4294901760
          %v869 = vsub.f32 %v525, %v868
          %870 = vmatmul.mubr.f32.gmra.mrb[0].mxu0 %v869
          %v871 = vpop.f32.mrb[0].mxu0
          %v872 = vadd.f32 %v767, %v871
          %v873 = vpop.f32.mrb[0].mxu0
          %v874 = vadd.f32 %v769, %v873
          %875 = vdwg.mxu0
          %v876 = vand.u32 %v445, 4294901760
          %877 = vmatprep.subr.mxu0 %v876
          %v878 = vand.u32 %v444, 4294901760
          %879 = vmatpush1.msra.mxu0 %v878
          %v880 = vand.u32 %v447, 4294901760
          %881 = vmatprep.subr.mxu0 %v880
          %v882 = vand.u32 %v446, 4294901760
          %883 = vmatpush1.msra.mxu0 %v882
          %v884 = vand.u32 %v449, 4294901760
          %885 = vmatprep.subr.mxu0 %v884
          %v886 = vand.u32 %v448, 4294901760
          %887 = vmatpush1.msra.mxu0 %v886
          %v888 = vand.u32 %v451, 4294901760
          %889 = vmatprep.subr.mxu0 %v888
          %v890 = vand.u32 %v450, 4294901760
          %891 = vmatpush1.msra.mxu0 %v890
          %v892 = vand.u32 %v453, 4294901760
          %893 = vmatprep.subr.mxu0 %v892
          %v894 = vand.u32 %v452, 4294901760
          %895 = vmatpush1.msra.mxu0 %v894
          %v896 = vand.u32 %v455, 4294901760
          %897 = vmatprep.subr.mxu0 %v896
          %v898 = vand.u32 %v454, 4294901760
          %899 = vmatpush1.msra.mxu0 %v898
          %v900 = vand.u32 %v457, 4294901760
          %901 = vmatprep.subr.mxu0 %v900
          %v902 = vand.u32 %v456, 4294901760
          %903 = vmatpush1.msra.mxu0 %v902
          %v904 = vand.u32 %v459, 4294901760
          %905 = vmatprep.subr.mxu0 %v904
          %v906 = vand.u32 %v458, 4294901760
          %907 = vmatpush1.msra.mxu0 %v906
          %908 = vmatprep.subr.mxu0 0.0
          %909 = vmatpush1.msra.mxu0 0.0
          %910 = vmatprep.subr.mxu0 0.0
          %911 = vmatpush1.msra.mxu0 0.0
          %912 = vmatprep.subr.mxu0 0.0
          %913 = vmatpush1.msra.mxu0 0.0
          %914 = vmatprep.subr.mxu0 0.0
          %915 = vmatpush1.msra.mxu0 0.0
          %916 = vmatprep.subr.mxu0 0.0
          %917 = vmatpush1.msra.mxu0 0.0
          %918 = vmatprep.subr.mxu0 0.0
          %919 = vmatpush1.msra.mxu0 0.0
          %920 = vmatprep.subr.mxu0 0.0
          %921 = vmatpush1.msra.mxu0 0.0
          %922 = vmatprep.subr.mxu0 0.0
          %923 = vmatpush1.msra.mxu0 0.0
          %924 = vmatprep.subr.mxu0 0.0
          %925 = vmatpush1.msra.mxu0 0.0
          %926 = vmatprep.subr.mxu0 0.0
          %927 = vmatpush1.msra.mxu0 0.0
          %928 = vmatprep.subr.mxu0 0.0
          %929 = vmatpush1.msra.mxu0 0.0
          %930 = vmatprep.subr.mxu0 0.0
          %931 = vmatpush1.msra.mxu0 0.0
          %932 = vmatprep.subr.mxu0 0.0
          %933 = vmatpush1.msra.mxu0 0.0
          %934 = vmatprep.subr.mxu0 0.0
          %935 = vmatpush1.msra.mxu0 0.0
          %936 = vmatprep.subr.mxu0 0.0
          %937 = vmatpush1.msra.mxu0 0.0
          %938 = vmatprep.subr.mxu0 0.0
          %939 = vmatpush1.msra.mxu0 0.0
          %940 = vmatprep.subr.mxu0 0.0
          %941 = vmatpush1.msra.mxu0 0.0
          %942 = vmatprep.subr.mxu0 0.0
          %943 = vmatpush1.msra.mxu0 0.0
          %944 = vmatprep.subr.mxu0 0.0
          %945 = vmatpush1.msra.mxu0 0.0
          %946 = vmatprep.subr.mxu0 0.0
          %947 = vmatpush1.msra.mxu0 0.0
          %948 = vmatprep.subr.mxu0 0.0
          %949 = vmatpush1.msra.mxu0 0.0
          %950 = vmatprep.subr.mxu0 0.0
          %951 = vmatpush1.msra.mxu0 0.0
          %952 = vmatprep.subr.mxu0 0.0
          %953 = vmatpush1.msra.mxu0 0.0
          %954 = vmatprep.subr.mxu0 0.0
          %955 = vmatpush1.msra.mxu0 0.0
          %956 = vmatprep.mubr.f32.mxu0 0.0
          %v957 = vand.u32 %v525, 4294901760
          %v958 = vsub.f32 %v525, %v957
          %v959 = vand.u32 %v958, 4294901760
          %960 = vmatmul.mubr.f32.gmra.mrb[0].mxu0 %v959
          %v961 = vpop.f32.mrb[0].mxu0
          %v962 = vadd.f32 %v872, %v961
          %v963 = vpop.f32.mrb[0].mxu0
          %v964 = vadd.f32 %v874, %v963
          %965 = vdwg.mxu0
          %v966 = vand.u32 %v445, 4294901760
          %v967 = vsub.f32 %v445, %v966
          %v968 = vand.u32 %v967, 4294901760
          %969 = vmatprep.subr.mxu0 %v968
          %v970 = vand.u32 %v444, 4294901760
          %v971 = vsub.f32 %v444, %v970
          %v972 = vand.u32 %v971, 4294901760
          %973 = vmatpush1.msra.mxu0 %v972
          %v974 = vand.u32 %v447, 4294901760
          %v975 = vsub.f32 %v447, %v974
          %v976 = vand.u32 %v975, 4294901760
          %977 = vmatprep.subr.mxu0 %v976
          %v978 = vand.u32 %v446, 4294901760
          %v979 = vsub.f32 %v446, %v978
          %v980 = vand.u32 %v979, 4294901760
          %981 = vmatpush1.msra.mxu0 %v980
          %v982 = vand.u32 %v449, 4294901760
          %v983 = vsub.f32 %v449, %v982
          %v984 = vand.u32 %v983, 4294901760
          %985 = vmatprep.subr.mxu0 %v984
          %v986 = vand.u32 %v448, 4294901760
          %v987 = vsub.f32 %v448, %v986
          %v988 = vand.u32 %v987, 4294901760
          %989 = vmatpush1.msra.mxu0 %v988
          %v990 = vand.u32 %v451, 4294901760
          %v991 = vsub.f32 %v451, %v990
          %v992 = vand.u32 %v991, 4294901760
          %993 = vmatprep.subr.mxu0 %v992
          %v994 = vand.u32 %v450, 4294901760
          %v995 = vsub.f32 %v450, %v994
          %v996 = vand.u32 %v995, 4294901760
          %997 = vmatpush1.msra.mxu0 %v996
          %v998 = vand.u32 %v453, 4294901760
          %v999 = vsub.f32 %v453, %v998
          %v1000 = vand.u32 %v999, 4294901760
          %1001 = vmatprep.subr.mxu0 %v1000
          %v1002 = vand.u32 %v452, 4294901760
          %v1003 = vsub.f32 %v452, %v1002
          %v1004 = vand.u32 %v1003, 4294901760
          %1005 = vmatpush1.msra.mxu0 %v1004
          %v1006 = vand.u32 %v455, 4294901760
          %v1007 = vsub.f32 %v455, %v1006
          %v1008 = vand.u32 %v1007, 4294901760
          %1009 = vmatprep.subr.mxu0 %v1008
          %v1010 = vand.u32 %v454, 4294901760
          %v1011 = vsub.f32 %v454, %v1010
          %v1012 = vand.u32 %v1011, 4294901760
          %1013 = vmatpush1.msra.mxu0 %v1012
          %v1014 = vand.u32 %v457, 4294901760
          %v1015 = vsub.f32 %v457, %v1014
          %v1016 = vand.u32 %v1015, 4294901760
          %1017 = vmatprep.subr.mxu0 %v1016
          %v1018 = vand.u32 %v456, 4294901760
          %v1019 = vsub.f32 %v456, %v1018
          %v1020 = vand.u32 %v1019, 4294901760
          %1021 = vmatpush1.msra.mxu0 %v1020
          %v1022 = vand.u32 %v459, 4294901760
          %v1023 = vsub.f32 %v459, %v1022
          %v1024 = vand.u32 %v1023, 4294901760
          %1025 = vmatprep.subr.mxu0 %v1024
          %v1026 = vand.u32 %v458, 4294901760
          %v1027 = vsub.f32 %v458, %v1026
          %v1028 = vand.u32 %v1027, 4294901760
          %1029 = vmatpush1.msra.mxu0 %v1028
          %1030 = vmatprep.subr.mxu0 0.0
          %1031 = vmatpush1.msra.mxu0 0.0
          %1032 = vmatprep.subr.mxu0 0.0
          %1033 = vmatpush1.msra.mxu0 0.0
          %1034 = vmatprep.subr.mxu0 0.0
          %1035 = vmatpush1.msra.mxu0 0.0
          %1036 = vmatprep.subr.mxu0 0.0
          %1037 = vmatpush1.msra.mxu0 0.0
          %1038 = vmatprep.subr.mxu0 0.0
          %1039 = vmatpush1.msra.mxu0 0.0
          %1040 = vmatprep.subr.mxu0 0.0
          %1041 = vmatpush1.msra.mxu0 0.0
          %1042 = vmatprep.subr.mxu0 0.0
          %1043 = vmatpush1.msra.mxu0 0.0
          %1044 = vmatprep.subr.mxu0 0.0
          %1045 = vmatpush1.msra.mxu0 0.0
          %1046 = vmatprep.subr.mxu0 0.0
          %1047 = vmatpush1.msra.mxu0 0.0
          %1048 = vmatprep.subr.mxu0 0.0
          %1049 = vmatpush1.msra.mxu0 0.0
          %1050 = vmatprep.subr.mxu0 0.0
          %1051 = vmatpush1.msra.mxu0 0.0
          %1052 = vmatprep.subr.mxu0 0.0
          %1053 = vmatpush1.msra.mxu0 0.0
          %1054 = vmatprep.subr.mxu0 0.0
          %1055 = vmatpush1.msra.mxu0 0.0
          %1056 = vmatprep.subr.mxu0 0.0
          %1057 = vmatpush1.msra.mxu0 0.0
          %1058 = vmatprep.subr.mxu0 0.0
          %1059 = vmatpush1.msra.mxu0 0.0
          %1060 = vmatprep.subr.mxu0 0.0
          %1061 = vmatpush1.msra.mxu0 0.0
          %1062 = vmatprep.subr.mxu0 0.0
          %1063 = vmatpush1.msra.mxu0 0.0
          %1064 = vmatprep.subr.mxu0 0.0
          %1065 = vmatpush1.msra.mxu0 0.0
          %1066 = vmatprep.subr.mxu0 0.0
          %1067 = vmatpush1.msra.mxu0 0.0
          %1068 = vmatprep.subr.mxu0 0.0
          %1069 = vmatpush1.msra.mxu0 0.0
          %1070 = vmatprep.subr.mxu0 0.0
          %1071 = vmatpush1.msra.mxu0 0.0
          %1072 = vmatprep.subr.mxu0 0.0
          %1073 = vmatpush1.msra.mxu0 0.0
          %1074 = vmatprep.subr.mxu0 0.0
          %1075 = vmatpush1.msra.mxu0 0.0
          %1076 = vmatprep.subr.mxu0 0.0
          %1077 = vmatpush1.msra.mxu0 0.0
          %1078 = vmatprep.mubr.f32.mxu0 0.0
          %v1079 = vand.u32 %v525, 4294901760
          %1080 = vmatmul.mubr.f32.gmra.mrb[0].mxu0 %v1079
          %v1081 = vpop.f32.mrb[0].mxu0
          %v1082 = vadd.f32 %v962, %v1081
          %v1083 = vpop.f32.mrb[0].mxu0
          %v1084 = vadd.f32 %v964, %v1083
          %1085 = vdwg.mxu0
          %v1086 = vand.u32 %v445, 4294901760
          %1087 = vmatprep.subr.mxu0 %v1086
          %v1088 = vand.u32 %v444, 4294901760
          %1089 = vmatpush1.msra.mxu0 %v1088
          %v1090 = vand.u32 %v447, 4294901760
          %1091 = vmatprep.subr.mxu0 %v1090
          %v1092 = vand.u32 %v446, 4294901760
          %1093 = vmatpush1.msra.mxu0 %v1092
          %v1094 = vand.u32 %v449, 4294901760
          %1095 = vmatprep.subr.mxu0 %v1094
          %v1096 = vand.u32 %v448, 4294901760
          %1097 = vmatpush1.msra.mxu0 %v1096
          %v1098 = vand.u32 %v451, 4294901760
          %1099 = vmatprep.subr.mxu0 %v1098
          %v1100 = vand.u32 %v450, 4294901760
          %1101 = vmatpush1.msra.mxu0 %v1100
          %v1102 = vand.u32 %v453, 4294901760
          %1103 = vmatprep.subr.mxu0 %v1102
          %v1104 = vand.u32 %v452, 4294901760
          %1105 = vmatpush1.msra.mxu0 %v1104
          %v1106 = vand.u32 %v455, 4294901760
          %1107 = vmatprep.subr.mxu0 %v1106
          %v1108 = vand.u32 %v454, 4294901760
          %1109 = vmatpush1.msra.mxu0 %v1108
          %v1110 = vand.u32 %v457, 4294901760
          %1111 = vmatprep.subr.mxu0 %v1110
          %v1112 = vand.u32 %v456, 4294901760
          %1113 = vmatpush1.msra.mxu0 %v1112
          %v1114 = vand.u32 %v459, 4294901760
          %1115 = vmatprep.subr.mxu0 %v1114
          %v1116 = vand.u32 %v458, 4294901760
          %1117 = vmatpush1.msra.mxu0 %v1116
          %1118 = vmatprep.subr.mxu0 0.0
          %1119 = vmatpush1.msra.mxu0 0.0
          %1120 = vmatprep.subr.mxu0 0.0
          %1121 = vmatpush1.msra.mxu0 0.0
          %1122 = vmatprep.subr.mxu0 0.0
          %1123 = vmatpush1.msra.mxu0 0.0
          %1124 = vmatprep.subr.mxu0 0.0
          %1125 = vmatpush1.msra.mxu0 0.0
          %1126 = vmatprep.subr.mxu0 0.0
          %1127 = vmatpush1.msra.mxu0 0.0
          %1128 = vmatprep.subr.mxu0 0.0
          %1129 = vmatpush1.msra.mxu0 0.0
          %1130 = vmatprep.subr.mxu0 0.0
          %1131 = vmatpush1.msra.mxu0 0.0
          %1132 = vmatprep.subr.mxu0 0.0
          %1133 = vmatpush1.msra.mxu0 0.0
          %1134 = vmatprep.subr.mxu0 0.0
          %1135 = vmatpush1.msra.mxu0 0.0
          %1136 = vmatprep.subr.mxu0 0.0
          %1137 = vmatpush1.msra.mxu0 0.0
          %1138 = vmatprep.subr.mxu0 0.0
          %1139 = vmatpush1.msra.mxu0 0.0
          %1140 = vmatprep.subr.mxu0 0.0
          %1141 = vmatpush1.msra.mxu0 0.0
          %1142 = vmatprep.subr.mxu0 0.0
          %1143 = vmatpush1.msra.mxu0 0.0
          %1144 = vmatprep.subr.mxu0 0.0
          %1145 = vmatpush1.msra.mxu0 0.0
          %1146 = vmatprep.subr.mxu0 0.0
          %1147 = vmatpush1.msra.mxu0 0.0
          %1148 = vmatprep.subr.mxu0 0.0
          %1149 = vmatpush1.msra.mxu0 0.0
          %1150 = vmatprep.subr.mxu0 0.0
          %1151 = vmatpush1.msra.mxu0 0.0
          %1152 = vmatprep.subr.mxu0 0.0
          %1153 = vmatpush1.msra.mxu0 0.0
          %1154 = vmatprep.subr.mxu0 0.0
          %1155 = vmatpush1.msra.mxu0 0.0
          %1156 = vmatprep.subr.mxu0 0.0
          %1157 = vmatpush1.msra.mxu0 0.0
          %1158 = vmatprep.subr.mxu0 0.0
          %1159 = vmatpush1.msra.mxu0 0.0
          %1160 = vmatprep.subr.mxu0 0.0
          %1161 = vmatpush1.msra.mxu0 0.0
          %1162 = vmatprep.subr.mxu0 0.0
          %1163 = vmatpush1.msra.mxu0 0.0
          %1164 = vmatprep.subr.mxu0 0.0
          %1165 = vmatpush1.msra.mxu0 0.0
          %1166 = vmatprep.mubr.f32.mxu0 0.0
          %v1167 = vand.u32 %v525, 4294901760
          %1168 = vmatmul.mubr.f32.gmra.mrb[0].mxu0 %v1167
          %v1169 = vpop.f32.mrb[0].mxu0
          %v1170 = vadd.f32 %v1082, %v1169
          %v1171 = vpop.f32.mrb[0].mxu0
          %v1172 = vadd.f32 %v1084, %v1171
          %1173 = vdwg.mxu0
          %v1174 = vadd.f32 %v520, %v1170
          %v1175 = vxor.u32 %v1174, 2147483648
          %v1176 = vmul.f32 %v1175, 1.442695
          %v1177 = vpow.pop %v1176
          %v1178 = vadd.f32 %v1177, 1.0
          %v1179 = vrcp.pop %v1178
          %v1180 = vmul.f32 1.0, %v1179
          %v1181 = vadd.f32 %v1172, %v465
          %v1182 = vmul.f32 %v1180, %v1181
          %v1183 = vadd.f32 %v521, %v1182
          %v1184 = vtanh.pop %v1183
          %v1185 = vsub.f32 1.0, %v1180
          %1187 = vrot.lane.b32.xlu0 %v1184, 64
          %v1188 = vpop.permute.xlu0 %1187
          %v1190 = vmul.f32 %v1185, %v1188
          %v1191 = vmul.f32 %v1180, %v502
          %v1192 = vadd.f32 %v1190, %v1191
          %1194 = vrot.lane.b32.xlu0 %v1192, 64
          %v1195 = vpop.permute.xlu0 %1194
          %s1197 = scalar_lea.vmem %s287, %s503 [#allocation4]
          %vm1198 = vcmask 261120
          %1199 = vst.msk [vmem:[%s1197] sm:$0xff] %vm1198, %v1195
          %s1200 = scalar_lea.vmem %s287, %s505 [#allocation4]
          %vm1201 = vcmask 523520
          %1202 = vst.msk [vmem:[%s1200] sm:$0xff] %vm1201, %v1195
        $region86: #{absa_gru_forward.2} parent=76 // loop_footer
          %s501 = sadd.s32 1, %s497
        $region87: #{absa_gru_forward.2} parent=76 // loop_footer_branch
          %496 = sbr.rel target = $region83
        $region88: #{absa_gru_forward.2} parent=76 // loop_exit
          _
        %s1203 = sand.u32 %s134, 1
        %s1204 = sand.u32 %s134, 1
        %s1205 = smul.addr %s1204, 64
        %s1206 = scalar_lea.vmem [#allocation4], %s1205
        // Predicated region
        $region89: #{absa_gru_forward.2} parent=76 // pred_check
          %p1207 = pneg %p144
        $region90: #{absa_gru_forward.2} parent=76 // pred_check_branch
          %1209 = sbr.rel (%p1207) target = $region92
        $region91: #{absa_gru_forward.2} parent=76 // pred_region
          %s1210 = smul.addr %s16, 8
          %s1211 = scalar_lea.vmem %s5, %s1210
          // Predicated region
          $region93: #{absa_gru_forward.2} parent=91 // pred_check
            _
          $region94: #{absa_gru_forward.2} parent=91 // pred_check_branch
            %1213 = sbr.rel (0) target = $region96
          $region95: #{absa_gru_forward.2} parent=91 // pred_region
            // Predicated region
            $region97: #{absa_gru_forward.2} parent=95 // pred_check
              _
            $region98: #{absa_gru_forward.2} parent=95 // pred_check_branch
              %1215 = sbr.rel (0) target = $region100
            $region99: #{absa_gru_forward.2} parent=95 // pred_region
              // Predicated region
              $region112: #{absa_gru_forward.2} parent=99 // pred_check
                _
              $region113: #{absa_gru_forward.2} parent=99 // pred_check_branch
                %1244 = sbr.rel (0) target = $region115
              $region114: #{absa_gru_forward.2} parent=99 // pred_region
                loop: start=0, step=1, limit=1
                $region116: #{absa_gru_forward.2} parent=114 // loop_pre_header
                  _
                $region117: #{absa_gru_forward.2} parent=114 // loop_header
                  %s1246 = sphi 0, %s1250
                  %p1247 = scmp.ge.s32.totalorder %s1246, 1
                  %s1251 = sphi %s1206, %s1206
                  %s1252 = sphi %s1211, %s1211
                $region118: #{absa_gru_forward.2} parent=114 // loop_header_branch
                  %1249 = sbr.rel (%p1247) target = $region122
                $region119: #{absa_gru_forward.2} parent=114 // loop_body
                  %v1253 = vld [vmem:[%s1251] sm:$0xff]
                  %1254 = vst [vmem:[%s1252] sm:$0xff] %v1253
                  %v1255 = vld [vmem:[%s1251 + $0x8] sm:$0xff]
                  %1256 = vst [vmem:[%s1252 + $0x10] sm:$0xff] %v1255
                  %v1257 = vld [vmem:[%s1251 + $0x10] sm:$0xff]
                  %1258 = vst [vmem:[%s1252 + $0x20] sm:$0xff] %v1257
                  %v1259 = vld [vmem:[%s1251 + $0x18] sm:$0xff]
                  %1260 = vst [vmem:[%s1252 + $0x30] sm:$0xff] %v1259
                  %v1261 = vld [vmem:[%s1251 + $0x20] sm:$0xff]
                  %1262 = vst [vmem:[%s1252 + $0x40] sm:$0xff] %v1261
                  %v1263 = vld [vmem:[%s1251 + $0x28] sm:$0xff]
                  %1264 = vst [vmem:[%s1252 + $0x50] sm:$0xff] %v1263
                  %v1265 = vld [vmem:[%s1251 + $0x30] sm:$0xff]
                  %1266 = vst [vmem:[%s1252 + $0x60] sm:$0xff] %v1265
                  %v1267 = vld [vmem:[%s1251 + $0x38] sm:$0xff]
                  %1268 = vst [vmem:[%s1252 + $0x70] sm:$0xff] %v1267
                $region120: #{absa_gru_forward.2} parent=114 // loop_footer
                  %s1250 = sadd.s32 1, %s1246
                $region121: #{absa_gru_forward.2} parent=114 // loop_footer_branch
                  %1245 = sbr.rel target = $region117
                $region122: #{absa_gru_forward.2} parent=114 // loop_exit
                  _
              $region115: #{absa_gru_forward.2} parent=99 // pred_fallthru
                _
              // Predicated region
              $region123: #{absa_gru_forward.2} parent=99 // pred_check
                _
              $region124: #{absa_gru_forward.2} parent=99 // pred_check_branch
                %1270 = sbr.rel target = $region126
              $region125: #{absa_gru_forward.2} parent=99 // pred_region
                _
              $region126: #{absa_gru_forward.2} parent=99 // pred_fallthru
                _
            $region100: #{absa_gru_forward.2} parent=95 // pred_fallthru
              _
            // Predicated region
            $region101: #{absa_gru_forward.2} parent=95 // pred_check
              _
            $region102: #{absa_gru_forward.2} parent=95 // pred_check_branch
              %1217 = sbr.rel target = $region104
            $region103: #{absa_gru_forward.2} parent=95 // pred_region
              loop: start=0, step=1, limit=1
              $region105: #{absa_gru_forward.2} parent=103 // loop_pre_header
                _
              $region106: #{absa_gru_forward.2} parent=103 // loop_header
                %s1220 = sphi 0, %s1224
                %p1221 = scmp.ge.s32.totalorder %s1220, 1
                %s1225 = sphi %s1206, %s1206
                %s1226 = sphi %s1211, %s1211
              $region107: #{absa_gru_forward.2} parent=103 // loop_header_branch
                %1223 = sbr.rel (%p1221) target = $region111
              $region108: #{absa_gru_forward.2} parent=103 // loop_body
                %v1227 = vld [vmem:[%s1225] sm:$0xff]
                %1228 = vst [vmem:[%s1226] sm:$0xff] %v1227
                %v1229 = vld [vmem:[%s1225 + $0x8] sm:$0xff]
                %1230 = vst [vmem:[%s1226 + $0x10] sm:$0xff] %v1229
                %v1231 = vld [vmem:[%s1225 + $0x10] sm:$0xff]
                %1232 = vst [vmem:[%s1226 + $0x20] sm:$0xff] %v1231
                %v1233 = vld [vmem:[%s1225 + $0x18] sm:$0xff]
                %1234 = vst [vmem:[%s1226 + $0x30] sm:$0xff] %v1233
                %v1235 = vld [vmem:[%s1225 + $0x20] sm:$0xff]
                %1236 = vst [vmem:[%s1226 + $0x40] sm:$0xff] %v1235
                %v1237 = vld [vmem:[%s1225 + $0x28] sm:$0xff]
                %1238 = vst [vmem:[%s1226 + $0x50] sm:$0xff] %v1237
                %v1239 = vld [vmem:[%s1225 + $0x30] sm:$0xff]
                %1240 = vst [vmem:[%s1226 + $0x60] sm:$0xff] %v1239
                %v1241 = vld [vmem:[%s1225 + $0x38] sm:$0xff]
                %1242 = vst [vmem:[%s1226 + $0x70] sm:$0xff] %v1241
              $region109: #{absa_gru_forward.2} parent=103 // loop_footer
                %s1224 = sadd.s32 1, %s1220
              $region110: #{absa_gru_forward.2} parent=103 // loop_footer_branch
                %1219 = sbr.rel target = $region106
              $region111: #{absa_gru_forward.2} parent=103 // loop_exit
                _
            $region104: #{absa_gru_forward.2} parent=95 // pred_fallthru
              _
          $region96: #{absa_gru_forward.2} parent=91 // pred_fallthru
            _
          %1271 = vnop
        $region92: #{absa_gru_forward.2} parent=76 // pred_fallthru
          _
      $region77: #{absa_gru_forward.2} parent=5 // pred_fallthru
        _
      %p1272 = scmp.le.s32.totalorder 2, %s11
      // Predicated region
      $region127: #{absa_gru_forward.2} parent=5 // pred_check
        %p1273 = pneg %p1272
      $region128: #{absa_gru_forward.2} parent=5 // pred_check_branch
        %1275 = sbr.rel (%p1273) target = $region130
      $region129: #{absa_gru_forward.2} parent=5 // pred_region
        %s1276 = ssub.s32 %s11, 2
        // Predicated region
        $region131: #{absa_gru_forward.2} parent=129 // pred_check
          %p1277 = pneg %p150
        $region132: #{absa_gru_forward.2} parent=129 // pred_check_branch
          %1279 = sbr.rel (%p1277) target = $region134
        $region133: #{absa_gru_forward.2} parent=129 // pred_region
          %s1280 = sand.u32 %s135, 1
          %s1281 = sand.u32 %s135, 1
          %s1282 = smul.addr %s1281, 64
          %s1283 = scalar_lea.vmem [#allocation4], %s1282
        $region134: #{absa_gru_forward.2} parent=129 // pred_fallthru
          _
      $region130: #{absa_gru_forward.2} parent=5 // pred_fallthru
        _
    $region6: #{absa_gru_forward.2} parent=1 // loop_footer
      %s15 = sadd.s32 1, %s11
    $region7: #{absa_gru_forward.2} parent=1 // loop_footer_branch
      %10 = sbr.rel target = $region3
    $region8: #{absa_gru_forward.2} parent=1 // loop_exit
      _

// kernel: absa_gru_forward.3
$region0: #{absa_gru_forward.3}
  #allocation0 [shape = 'u32[]', space=smem, size = 0x4, offset = 0x4, fixed_abs, tag = 'smem constant byte address 0x4 - core index']
  #allocation1 [shape = 'u32[144,128]{1,0:T(1,128)}', space=vmem, size = 0x12000, scoped, tag = 'internal scratch']
  %s0 = inlined_call_operand.vmem [shape: f32[16,8,64], index: 0, kind: input, shape index: {}]
  %s1 = inlined_call_operand.vmem [shape: f32[16,8], index: 1, kind: input, shape index: {}]
  %s2 = inlined_call_operand.vmem [shape: f32[16,8], index: 2, kind: input, shape index: {}]
  %s3 = inlined_call_operand.vmem [shape: f32[64,64], index: 3, kind: input, shape index: {}]
  %s4 = inlined_call_operand.vmem [shape: f32[1,64], index: 4, kind: input, shape index: {}]
  %s5 = inlined_call_operand.vmem [shape: f32[64,128], index: 5, kind: input, shape index: {}]
  %s6 = inlined_call_operand.vmem [shape: f32[1,128], index: 6, kind: input, shape index: {}]
  %s7 = inlined_call_operand.vmem [shape: f32[64,64], index: 7, kind: input, shape index: {}]
  %s8 = inlined_call_operand.vmem [shape: f32[1,64], index: 8, kind: input, shape index: {}]
  %s9 = inlined_call_operand.vmem [shape: f32[1,64], index: 9, kind: input, shape index: {}]
  %s10 = inlined_call_operand.vmem [shape: f32[1,64], index: 10, kind: input, shape index: {}]
  %s11 = inlined_call_operand.vmem [shape: f32[1,8], index: 11, kind: input, shape index: {}]
  %s12 = inlined_call_operand.vmem [shape: f32[1,8], index: 12, kind: input, shape index: {}]
  %s13 = inlined_call_operand.vmem [shape: f32[64,3], index: 13, kind: input, shape index: {}]
  %s14 = inlined_call_operand.vmem [shape: f32[8,3], index: 14, kind: input, shape index: {}]
  %s15 = inlined_call_operand.vmem [shape: f32[1,3], index: 15, kind: input, shape index: {}]
  %s16 = inlined_call_operand.vmem [shape: f32[16,3], index: 16, kind: output, shape index: {}]
  %s17 = sld [smem:[#allocation0]]
  $region97: #{absa_gru_forward.3} parent=0
    _
  %s19 = ssub.s32 1, %s17
  %s20 = scalar_select 0, %s19, %s17
  loop: start=0, step=1, limit=4
  $region2: #{absa_gru_forward.3} parent=0 // loop_pre_header
    _
  $region3: #{absa_gru_forward.3} parent=0 // loop_header
    %s22 = sphi 0, %s26
    %p23 = scmp.ge.s32.totalorder %s22, 4
    %s32 = sphi 0, %s34
    %s35 = sphi 0, %s32
    %s36 = sphi 0, %s35
    %s52 = sphi 0, %s36
    %s58 = sphi 0, %s60
    %s61 = sphi 0, %s58
    %s62 = sphi 0, %s61
    %s78 = sphi 0, %s62
    %s84 = sphi 0, %s86
    %s87 = sphi 0, %s84
    %s88 = sphi 0, %s87
    %s104 = sphi 0, %s88
    %s108 = sphi 0, %s108
    %s110 = sphi 0, %s108
    %s111 = sphi 0, %s110
    %s125 = sphi 0, %s111
    %s129 = sphi 0, %s129
    %s131 = sphi 0, %s129
    %s132 = sphi 0, %s131
    %s146 = sphi 0, %s132
    %s150 = sphi 0, %s150
    %s152 = sphi 0, %s150
    %s153 = sphi 0, %s152
    %s167 = sphi 0, %s153
    %s171 = sphi 0, %s171
    %s173 = sphi 0, %s171
    %s174 = sphi 0, %s173
    %s188 = sphi 0, %s174
    %s192 = sphi 0, %s192
    %s194 = sphi 0, %s192
    %s195 = sphi 0, %s194
    %s209 = sphi 0, %s195
    %s213 = sphi 0, %s213
    %s215 = sphi 0, %s213
    %s216 = sphi 0, %s215
    %s230 = sphi 0, %s216
    %s234 = sphi 0, %s234
    %s236 = sphi 0, %s234
    %s237 = sphi 0, %s236
    %s251 = sphi 0, %s237
    %s255 = sphi 0, %s255
    %s257 = sphi 0, %s255
    %s258 = sphi 0, %s257
    %s272 = sphi 0, %s258
    %s276 = sphi 0, %s276
    %s278 = sphi 0, %s276
    %s279 = sphi 0, %s278
    %s293 = sphi 0, %s279
    %s297 = sphi 0, %s297
    %s299 = sphi 0, %s297
    %s300 = sphi 0, %s299
    %s314 = sphi 0, %s300
    %s318 = sphi 0, %s318
    %s320 = sphi 0, %s318
    %s321 = sphi 0, %s320
    %s335 = sphi 0, %s321
    %s339 = sphi 0, %s339
    %s341 = sphi 0, %s339
    %s342 = sphi 0, %s341
    %s356 = sphi 0, %s342
    %s360 = sphi 0, %s360
    %s362 = sphi 0, %s360
    %s363 = sphi 0, %s362
    %s377 = sphi 0, %s363
    %s383 = sphi 0, %s385
    %s386 = sphi 0, %s383
    %s387 = sphi 0, %s386
    %s403 = sphi 0, %s387
  $region4: #{absa_gru_forward.3} parent=0 // loop_header_branch
    %25 = sbr.rel (%p23) target = $region8
  $region5: #{absa_gru_forward.3} parent=0 // loop_body
    %s27 = ssub.s32 %s22, 1
    %s28 = ssub.s32 %s22, 2
    %s29 = sadd.s32 %s22, 1
    %s30 = ssub.s32 %s22, %s29
    %p31 = scmp.eq.s32.totalorder %s30, 0
    %s33 = sadd.s32 %s32, 1
    %s34 = scalar_select %p31, %s32, %s33
    %p37 = pneg %p31
    %p38 = scmp.eq.s32.totalorder %s22, 1
    %p39 = por %p37, %p38
    %p40 = scmp.ne.s32.totalorder %s32, %s35
    %p41 = scmp.eq.s32.totalorder %s22, 0
    %p42 = por %p40, %p41
    %p43 = scmp.ne.s32.totalorder %s32, %s35
    %p44 = scmp.eq.s32.totalorder %s27, 1
    %p45 = por %p43, %p44
    %p46 = scmp.ne.s32.totalorder %s35, %s36
    %p47 = scmp.eq.s32.totalorder %s27, 0
    %p48 = por %p46, %p47
    %p49 = scmp.ne.s32.totalorder %s35, %s36
    %p50 = scmp.eq.s32.totalorder %s28, 1
    %p51 = por %p49, %p50
    %p53 = scmp.ne.s32.totalorder %s36, %s52
    %p54 = scmp.eq.s32.totalorder %s28, 0
    %p55 = por %p53, %p54
    %s56 = ssub.s32 %s22, %s29
    %p57 = scmp.eq.s32.totalorder %s56, 0
    %s59 = sadd.s32 %s58, 1
    %s60 = scalar_select %p57, %s58, %s59
    %p63 = pneg %p57
    %p64 = scmp.eq.s32.totalorder %s22, 1
    %p65 = por %p63, %p64
    %p66 = scmp.ne.s32.totalorder %s58, %s61
    %p67 = scmp.eq.s32.totalorder %s22, 0
    %p68 = por %p66, %p67
    %p69 = scmp.ne.s32.totalorder %s58, %s61
    %p70 = scmp.eq.s32.totalorder %s27, 1
    %p71 = por %p69, %p70
    %p72 = scmp.ne.s32.totalorder %s61, %s62
    %p73 = scmp.eq.s32.totalorder %s27, 0
    %p74 = por %p72, %p73
    %p75 = scmp.ne.s32.totalorder %s61, %s62
    %p76 = scmp.eq.s32.totalorder %s28, 1
    %p77 = por %p75, %p76
    %p79 = scmp.ne.s32.totalorder %s62, %s78
    %p80 = scmp.eq.s32.totalorder %s28, 0
    %p81 = por %p79, %p80
    %s82 = ssub.s32 %s22, %s29
    %p83 = scmp.eq.s32.totalorder %s82, 0
    %s85 = sadd.s32 %s84, 1
    %s86 = scalar_select %p83, %s84, %s85
    %p89 = pneg %p83
    %p90 = scmp.eq.s32.totalorder %s22, 1
    %p91 = por %p89, %p90
    %p92 = scmp.ne.s32.totalorder %s84, %s87
    %p93 = scmp.eq.s32.totalorder %s22, 0
    %p94 = por %p92, %p93
    %p95 = scmp.ne.s32.totalorder %s84, %s87
    %p96 = scmp.eq.s32.totalorder %s27, 1
    %p97 = por %p95, %p96
    %p98 = scmp.ne.s32.totalorder %s87, %s88
    %p99 = scmp.eq.s32.totalorder %s27, 0
    %p100 = por %p98, %p99
    %p101 = scmp.ne.s32.totalorder %s87, %s88
    %p102 = scmp.eq.s32.totalorder %s28, 1
    %p103 = por %p101, %p102
    %p105 = scmp.ne.s32.totalorder %s88, %s104
    %p106 = scmp.eq.s32.totalorder %s28, 0
    %p107 = por %p105, %p106
    %s109 = sadd.s32 %s108, 1
    %p112 = scmp.eq.s32.totalorder %s22, 1
    %p113 = scmp.ne.s32.totalorder %s108, %s110
    %p114 = scmp.eq.s32.totalorder %s22, 0
    %p115 = por %p113, %p114
    %p116 = scmp.ne.s32.totalorder %s108, %s110
    %p117 = scmp.eq.s32.totalorder %s27, 1
    %p118 = por %p116, %p117
    %p119 = scmp.ne.s32.totalorder %s110, %s111
    %p120 = scmp.eq.s32.totalorder %s27, 0
    %p121 = por %p119, %p120
    %p122 = scmp.ne.s32.totalorder %s110, %s111
    %p123 = scmp.eq.s32.totalorder %s28, 1
    %p124 = por %p122, %p123
    %p126 = scmp.ne.s32.totalorder %s111, %s125
    %p127 = scmp.eq.s32.totalorder %s28, 0
    %p128 = por %p126, %p127
    %s130 = sadd.s32 %s129, 1
    %p133 = scmp.eq.s32.totalorder %s22, 1
    %p134 = scmp.ne.s32.totalorder %s129, %s131
    %p135 = scmp.eq.s32.totalorder %s22, 0
    %p136 = por %p134, %p135
    %p137 = scmp.ne.s32.totalorder %s129, %s131
    %p138 = scmp.eq.s32.totalorder %s27, 1
    %p139 = por %p137, %p138
    %p140 = scmp.ne.s32.totalorder %s131, %s132
    %p141 = scmp.eq.s32.totalorder %s27, 0
    %p142 = por %p140, %p141
    %p143 = scmp.ne.s32.totalorder %s131, %s132
    %p144 = scmp.eq.s32.totalorder %s28, 1
    %p145 = por %p143, %p144
    %p147 = scmp.ne.s32.totalorder %s132, %s146
    %p148 = scmp.eq.s32.totalorder %s28, 0
    %p149 = por %p147, %p148
    %s151 = sadd.s32 %s150, 1
    %p154 = scmp.eq.s32.totalorder %s22, 1
    %p155 = scmp.ne.s32.totalorder %s150, %s152
    %p156 = scmp.eq.s32.totalorder %s22, 0
    %p157 = por %p155, %p156
    %p158 = scmp.ne.s32.totalorder %s150, %s152
    %p159 = scmp.eq.s32.totalorder %s27, 1
    %p160 = por %p158, %p159
    %p161 = scmp.ne.s32.totalorder %s152, %s153
    %p162 = scmp.eq.s32.totalorder %s27, 0
    %p163 = por %p161, %p162
    %p164 = scmp.ne.s32.totalorder %s152, %s153
    %p165 = scmp.eq.s32.totalorder %s28, 1
    %p166 = por %p164, %p165
    %p168 = scmp.ne.s32.totalorder %s153, %s167
    %p169 = scmp.eq.s32.totalorder %s28, 0
    %p170 = por %p168, %p169
    %s172 = sadd.s32 %s171, 1
    %p175 = scmp.eq.s32.totalorder %s22, 1
    %p176 = scmp.ne.s32.totalorder %s171, %s173
    %p177 = scmp.eq.s32.totalorder %s22, 0
    %p178 = por %p176, %p177
    %p179 = scmp.ne.s32.totalorder %s171, %s173
    %p180 = scmp.eq.s32.totalorder %s27, 1
    %p181 = por %p179, %p180
    %p182 = scmp.ne.s32.totalorder %s173, %s174
    %p183 = scmp.eq.s32.totalorder %s27, 0
    %p184 = por %p182, %p183
    %p185 = scmp.ne.s32.totalorder %s173, %s174
    %p186 = scmp.eq.s32.totalorder %s28, 1
    %p187 = por %p185, %p186
    %p189 = scmp.ne.s32.totalorder %s174, %s188
    %p190 = scmp.eq.s32.totalorder %s28, 0
    %p191 = por %p189, %p190
    %s193 = sadd.s32 %s192, 1
    %p196 = scmp.eq.s32.totalorder %s22, 1
    %p197 = scmp.ne.s32.totalorder %s192, %s194
    %p198 = scmp.eq.s32.totalorder %s22, 0
    %p199 = por %p197, %p198
    %p200 = scmp.ne.s32.totalorder %s192, %s194
    %p201 = scmp.eq.s32.totalorder %s27, 1
    %p202 = por %p200, %p201
    %p203 = scmp.ne.s32.totalorder %s194, %s195
    %p204 = scmp.eq.s32.totalorder %s27, 0
    %p205 = por %p203, %p204
    %p206 = scmp.ne.s32.totalorder %s194, %s195
    %p207 = scmp.eq.s32.totalorder %s28, 1
    %p208 = por %p206, %p207
    %p210 = scmp.ne.s32.totalorder %s195, %s209
    %p211 = scmp.eq.s32.totalorder %s28, 0
    %p212 = por %p210, %p211
    %s214 = sadd.s32 %s213, 1
    %p217 = scmp.eq.s32.totalorder %s22, 1
    %p218 = scmp.ne.s32.totalorder %s213, %s215
    %p219 = scmp.eq.s32.totalorder %s22, 0
    %p220 = por %p218, %p219
    %p221 = scmp.ne.s32.totalorder %s213, %s215
    %p222 = scmp.eq.s32.totalorder %s27, 1
    %p223 = por %p221, %p222
    %p224 = scmp.ne.s32.totalorder %s215, %s216
    %p225 = scmp.eq.s32.totalorder %s27, 0
    %p226 = por %p224, %p225
    %p227 = scmp.ne.s32.totalorder %s215, %s216
    %p228 = scmp.eq.s32.totalorder %s28, 1
    %p229 = por %p227, %p228
    %p231 = scmp.ne.s32.totalorder %s216, %s230
    %p232 = scmp.eq.s32.totalorder %s28, 0
    %p233 = por %p231, %p232
    %s235 = sadd.s32 %s234, 1
    %p238 = scmp.eq.s32.totalorder %s22, 1
    %p239 = scmp.ne.s32.totalorder %s234, %s236
    %p240 = scmp.eq.s32.totalorder %s22, 0
    %p241 = por %p239, %p240
    %p242 = scmp.ne.s32.totalorder %s234, %s236
    %p243 = scmp.eq.s32.totalorder %s27, 1
    %p244 = por %p242, %p243
    %p245 = scmp.ne.s32.totalorder %s236, %s237
    %p246 = scmp.eq.s32.totalorder %s27, 0
    %p247 = por %p245, %p246
    %p248 = scmp.ne.s32.totalorder %s236, %s237
    %p249 = scmp.eq.s32.totalorder %s28, 1
    %p250 = por %p248, %p249
    %p252 = scmp.ne.s32.totalorder %s237, %s251
    %p253 = scmp.eq.s32.totalorder %s28, 0
    %p254 = por %p252, %p253
    %s256 = sadd.s32 %s255, 1
    %p259 = scmp.eq.s32.totalorder %s22, 1
    %p260 = scmp.ne.s32.totalorder %s255, %s257
    %p261 = scmp.eq.s32.totalorder %s22, 0
    %p262 = por %p260, %p261
    %p263 = scmp.ne.s32.totalorder %s255, %s257
    %p264 = scmp.eq.s32.totalorder %s27, 1
    %p265 = por %p263, %p264
    %p266 = scmp.ne.s32.totalorder %s257, %s258
    %p267 = scmp.eq.s32.totalorder %s27, 0
    %p268 = por %p266, %p267
    %p269 = scmp.ne.s32.totalorder %s257, %s258
    %p270 = scmp.eq.s32.totalorder %s28, 1
    %p271 = por %p269, %p270
    %p273 = scmp.ne.s32.totalorder %s258, %s272
    %p274 = scmp.eq.s32.totalorder %s28, 0
    %p275 = por %p273, %p274
    %s277 = sadd.s32 %s276, 1
    %p280 = scmp.eq.s32.totalorder %s22, 1
    %p281 = scmp.ne.s32.totalorder %s276, %s278
    %p282 = scmp.eq.s32.totalorder %s22, 0
    %p283 = por %p281, %p282
    %p284 = scmp.ne.s32.totalorder %s276, %s278
    %p285 = scmp.eq.s32.totalorder %s27, 1
    %p286 = por %p284, %p285
    %p287 = scmp.ne.s32.totalorder %s278, %s279
    %p288 = scmp.eq.s32.totalorder %s27, 0
    %p289 = por %p287, %p288
    %p290 = scmp.ne.s32.totalorder %s278, %s279
    %p291 = scmp.eq.s32.totalorder %s28, 1
    %p292 = por %p290, %p291
    %p294 = scmp.ne.s32.totalorder %s279, %s293
    %p295 = scmp.eq.s32.totalorder %s28, 0
    %p296 = por %p294, %p295
    %s298 = sadd.s32 %s297, 1
    %p301 = scmp.eq.s32.totalorder %s22, 1
    %p302 = scmp.ne.s32.totalorder %s297, %s299
    %p303 = scmp.eq.s32.totalorder %s22, 0
    %p304 = por %p302, %p303
    %p305 = scmp.ne.s32.totalorder %s297, %s299
    %p306 = scmp.eq.s32.totalorder %s27, 1
    %p307 = por %p305, %p306
    %p308 = scmp.ne.s32.totalorder %s299, %s300
    %p309 = scmp.eq.s32.totalorder %s27, 0
    %p310 = por %p308, %p309
    %p311 = scmp.ne.s32.totalorder %s299, %s300
    %p312 = scmp.eq.s32.totalorder %s28, 1
    %p313 = por %p311, %p312
    %p315 = scmp.ne.s32.totalorder %s300, %s314
    %p316 = scmp.eq.s32.totalorder %s28, 0
    %p317 = por %p315, %p316
    %s319 = sadd.s32 %s318, 1
    %p322 = scmp.eq.s32.totalorder %s22, 1
    %p323 = scmp.ne.s32.totalorder %s318, %s320
    %p324 = scmp.eq.s32.totalorder %s22, 0
    %p325 = por %p323, %p324
    %p326 = scmp.ne.s32.totalorder %s318, %s320
    %p327 = scmp.eq.s32.totalorder %s27, 1
    %p328 = por %p326, %p327
    %p329 = scmp.ne.s32.totalorder %s320, %s321
    %p330 = scmp.eq.s32.totalorder %s27, 0
    %p331 = por %p329, %p330
    %p332 = scmp.ne.s32.totalorder %s320, %s321
    %p333 = scmp.eq.s32.totalorder %s28, 1
    %p334 = por %p332, %p333
    %p336 = scmp.ne.s32.totalorder %s321, %s335
    %p337 = scmp.eq.s32.totalorder %s28, 0
    %p338 = por %p336, %p337
    %s340 = sadd.s32 %s339, 1
    %p343 = scmp.eq.s32.totalorder %s22, 1
    %p344 = scmp.ne.s32.totalorder %s339, %s341
    %p345 = scmp.eq.s32.totalorder %s22, 0
    %p346 = por %p344, %p345
    %p347 = scmp.ne.s32.totalorder %s339, %s341
    %p348 = scmp.eq.s32.totalorder %s27, 1
    %p349 = por %p347, %p348
    %p350 = scmp.ne.s32.totalorder %s341, %s342
    %p351 = scmp.eq.s32.totalorder %s27, 0
    %p352 = por %p350, %p351
    %p353 = scmp.ne.s32.totalorder %s341, %s342
    %p354 = scmp.eq.s32.totalorder %s28, 1
    %p355 = por %p353, %p354
    %p357 = scmp.ne.s32.totalorder %s342, %s356
    %p358 = scmp.eq.s32.totalorder %s28, 0
    %p359 = por %p357, %p358
    %s361 = sadd.s32 %s360, 1
    %p364 = scmp.eq.s32.totalorder %s22, 1
    %p365 = scmp.ne.s32.totalorder %s360, %s362
    %p366 = scmp.eq.s32.totalorder %s22, 0
    %p367 = por %p365, %p366
    %p368 = scmp.ne.s32.totalorder %s360, %s362
    %p369 = scmp.eq.s32.totalorder %s27, 1
    %p370 = por %p368, %p369
    %p371 = scmp.ne.s32.totalorder %s362, %s363
    %p372 = scmp.eq.s32.totalorder %s27, 0
    %p373 = por %p371, %p372
    %p374 = scmp.ne.s32.totalorder %s362, %s363
    %p375 = scmp.eq.s32.totalorder %s28, 1
    %p376 = por %p374, %p375
    %p378 = scmp.ne.s32.totalorder %s363, %s377
    %p379 = scmp.eq.s32.totalorder %s28, 0
    %p380 = por %p378, %p379
    %s381 = ssub.s32 %s22, %s29
    %p382 = scmp.eq.s32.totalorder %s381, 0
    %s384 = sadd.s32 %s383, 1
    %s385 = scalar_select %p382, %s383, %s384
    %p388 = pneg %p382
    %p389 = scmp.eq.s32.totalorder %s22, 1
    %p390 = por %p388, %p389
    %p391 = scmp.ne.s32.totalorder %s383, %s386
    %p392 = scmp.eq.s32.totalorder %s22, 0
    %p393 = por %p391, %p392
    %p394 = scmp.ne.s32.totalorder %s383, %s386
    %p395 = scmp.eq.s32.totalorder %s27, 1
    %p396 = por %p394, %p395
    %p397 = scmp.ne.s32.totalorder %s386, %s387
    %p398 = scmp.eq.s32.totalorder %s27, 0
    %p399 = por %p397, %p398
    %p400 = scmp.ne.s32.totalorder %s386, %s387
    %p401 = scmp.eq.s32.totalorder %s28, 1
    %p402 = por %p400, %p401
    %p404 = scmp.ne.s32.totalorder %s387, %s403
    %p405 = scmp.eq.s32.totalorder %s28, 0
    %p406 = por %p404, %p405
    %p407 = scmp.le.s32.totalorder 1, %s22
    %p408 = scmp.lt.s32.totalorder %s22, 3
    %p409 = pnand %p407, %p408
    %p410 = pneg %p409
    // Predicated region
    $region9: #{absa_gru_forward.3} parent=5 // pred_check
      _
    $region10: #{absa_gru_forward.3} parent=5 // pred_check_branch
      %412 = sbr.rel (%p409) target = $region12
    $region11: #{absa_gru_forward.3} parent=5 // pred_region
      %s413 = ssub.s32 %s22, 1
      // Predicated region
      $region13: #{absa_gru_forward.3} parent=11 // pred_check
        %p414 = pneg %p121
      $region14: #{absa_gru_forward.3} parent=11 // pred_check_branch
        %416 = sbr.rel (%p414) target = $region16
      $region15: #{absa_gru_forward.3} parent=11 // pred_region
        _
      $region16: #{absa_gru_forward.3} parent=11 // pred_fallthru
        _
      // Predicated region
      $region17: #{absa_gru_forward.3} parent=11 // pred_check
        %p417 = pneg %p142
      $region18: #{absa_gru_forward.3} parent=11 // pred_check_branch
        %419 = sbr.rel (%p417) target = $region20
      $region19: #{absa_gru_forward.3} parent=11 // pred_region
        _
      $region20: #{absa_gru_forward.3} parent=11 // pred_fallthru
        _
      // Predicated region
      $region21: #{absa_gru_forward.3} parent=11 // pred_check
        %p420 = pneg %p163
      $region22: #{absa_gru_forward.3} parent=11 // pred_check_branch
        %422 = sbr.rel (%p420) target = $region24
      $region23: #{absa_gru_forward.3} parent=11 // pred_region
        _
      $region24: #{absa_gru_forward.3} parent=11 // pred_fallthru
        _
      // Predicated region
      $region25: #{absa_gru_forward.3} parent=11 // pred_check
        %p423 = pneg %p184
      $region26: #{absa_gru_forward.3} parent=11 // pred_check_branch
        %425 = sbr.rel (%p423) target = $region28
      $region27: #{absa_gru_forward.3} parent=11 // pred_region
        _
      $region28: #{absa_gru_forward.3} parent=11 // pred_fallthru
        _
      // Predicated region
      $region29: #{absa_gru_forward.3} parent=11 // pred_check
        %p426 = pneg %p205
      $region30: #{absa_gru_forward.3} parent=11 // pred_check_branch
        %428 = sbr.rel (%p426) target = $region32
      $region31: #{absa_gru_forward.3} parent=11 // pred_region
        _
      $region32: #{absa_gru_forward.3} parent=11 // pred_fallthru
        _
      // Predicated region
      $region33: #{absa_gru_forward.3} parent=11 // pred_check
        %p429 = pneg %p226
      $region34: #{absa_gru_forward.3} parent=11 // pred_check_branch
        %431 = sbr.rel (%p429) target = $region36
      $region35: #{absa_gru_forward.3} parent=11 // pred_region
        _
      $region36: #{absa_gru_forward.3} parent=11 // pred_fallthru
        _
      // Predicated region
      $region37: #{absa_gru_forward.3} parent=11 // pred_check
        %p432 = pneg %p247
      $region38: #{absa_gru_forward.3} parent=11 // pred_check_branch
        %434 = sbr.rel (%p432) target = $region40
      $region39: #{absa_gru_forward.3} parent=11 // pred_region
        _
      $region40: #{absa_gru_forward.3} parent=11 // pred_fallthru
        _
      // Predicated region
      $region41: #{absa_gru_forward.3} parent=11 // pred_check
        %p435 = pneg %p268
      $region42: #{absa_gru_forward.3} parent=11 // pred_check_branch
        %437 = sbr.rel (%p435) target = $region44
      $region43: #{absa_gru_forward.3} parent=11 // pred_region
        _
      $region44: #{absa_gru_forward.3} parent=11 // pred_fallthru
        _
      // Predicated region
      $region45: #{absa_gru_forward.3} parent=11 // pred_check
        %p438 = pneg %p289
      $region46: #{absa_gru_forward.3} parent=11 // pred_check_branch
        %440 = sbr.rel (%p438) target = $region48
      $region47: #{absa_gru_forward.3} parent=11 // pred_region
        _
      $region48: #{absa_gru_forward.3} parent=11 // pred_fallthru
        _
      // Predicated region
      $region49: #{absa_gru_forward.3} parent=11 // pred_check
        %p441 = pneg %p310
      $region50: #{absa_gru_forward.3} parent=11 // pred_check_branch
        %443 = sbr.rel (%p441) target = $region52
      $region51: #{absa_gru_forward.3} parent=11 // pred_region
        _
      $region52: #{absa_gru_forward.3} parent=11 // pred_fallthru
        _
      // Predicated region
      $region53: #{absa_gru_forward.3} parent=11 // pred_check
        %p444 = pneg %p331
      $region54: #{absa_gru_forward.3} parent=11 // pred_check_branch
        %446 = sbr.rel (%p444) target = $region56
      $region55: #{absa_gru_forward.3} parent=11 // pred_region
        _
      $region56: #{absa_gru_forward.3} parent=11 // pred_fallthru
        _
      // Predicated region
      $region57: #{absa_gru_forward.3} parent=11 // pred_check
        %p447 = pneg %p352
      $region58: #{absa_gru_forward.3} parent=11 // pred_check_branch
        %449 = sbr.rel (%p447) target = $region60
      $region59: #{absa_gru_forward.3} parent=11 // pred_region
        _
      $region60: #{absa_gru_forward.3} parent=11 // pred_fallthru
        _
      // Predicated region
      $region61: #{absa_gru_forward.3} parent=11 // pred_check
        %p450 = pneg %p373
      $region62: #{absa_gru_forward.3} parent=11 // pred_check_branch
        %452 = sbr.rel (%p450) target = $region64
      $region63: #{absa_gru_forward.3} parent=11 // pred_region
        _
      $region64: #{absa_gru_forward.3} parent=11 // pred_fallthru
        _
    $region12: #{absa_gru_forward.3} parent=5 // pred_fallthru
      _
    %p453 = scmp.lt.s32.totalorder %s22, 2
    // Predicated region
    $region65: #{absa_gru_forward.3} parent=5 // pred_check
      %p454 = pneg %p453
    $region66: #{absa_gru_forward.3} parent=5 // pred_check_branch
      %456 = sbr.rel (%p454) target = $region68
    $region67: #{absa_gru_forward.3} parent=5 // pred_region
      // Predicated region
      $region69: #{absa_gru_forward.3} parent=67 // pred_check
        %p457 = pneg %p42
      $region70: #{absa_gru_forward.3} parent=67 // pred_check_branch
        %459 = sbr.rel (%p457) target = $region72
      $region71: #{absa_gru_forward.3} parent=67 // pred_region
        %s460 = smul.u32 8, %s22
        %p461 = scmp.lt.s32.totalorder %s460, 15
        %s462 = scalar_select %p461, %s460, 15
        %s463 = smul.addr %s462, 8
        %s464 = scalar_lea.vmem %s0, %s463
        %s465 = smul.u32 8, %s22
      $region72: #{absa_gru_forward.3} parent=67 // pred_fallthru
        _
      // Predicated region
      $region73: #{absa_gru_forward.3} parent=67 // pred_check
        %p466 = pneg %p68
      $region74: #{absa_gru_forward.3} parent=67 // pred_check_branch
        %468 = sbr.rel (%p466) target = $region76
      $region75: #{absa_gru_forward.3} parent=67 // pred_region
        %p469 = scmp.lt.s32.totalorder %s22, 1
        %s470 = scalar_select %p469, %s22, 1
        %s471 = smul.addr %s470, 8
        %s472 = scalar_lea.vmem %s1, %s471
      $region76: #{absa_gru_forward.3} parent=67 // pred_fallthru
        _
      // Predicated region
      $region77: #{absa_gru_forward.3} parent=67 // pred_check
        %p473 = pneg %p94
      $region78: #{absa_gru_forward.3} parent=67 // pred_check_branch
        %475 = sbr.rel (%p473) target = $region80
      $region79: #{absa_gru_forward.3} parent=67 // pred_region
        %p476 = scmp.lt.s32.totalorder %s22, 1
        %s477 = scalar_select %p476, %s22, 1
        %s478 = smul.addr %s477, 8
        %s479 = scalar_lea.vmem %s2, %s478
      $region80: #{absa_gru_forward.3} parent=67 // pred_fallthru
        _
    $region68: #{absa_gru_forward.3} parent=5 // pred_fallthru
      _
    %p480 = scmp.le.s32.totalorder 1, %s22
    %p481 = scmp.lt.s32.totalorder %s22, 3
    %p482 = pnand %p480, %p481
    %p483 = pneg %p482
    // Predicated region
    $region81: #{absa_gru_forward.3} parent=5 // pred_check
      _
    $region82: #{absa_gru_forward.3} parent=5 // pred_check_branch
      %485 = sbr.rel (%p482) target = $region84
    $region83: #{absa_gru_forward.3} parent=5 // pred_region
      %s486 = ssub.s32 %s22, 1
      %s487 = smul.u32 8, %s27
      %p488 = scmp.lt.s32.totalorder %s487, 15
      %s489 = scalar_select %p488, %s487, 15
      %s490 = smul.addr %s489, 8
      %s491 = scalar_lea.vmem %s0, %s490
      %p492 = pneg %p48
      %p493 = pneg %p45
      %p494 = scmp.lt.s32.totalorder %s27, 1
      %s495 = scalar_select %p494, %s27, 1
      %s496 = smul.addr %s495, 8
      %s497 = scalar_lea.vmem %s1, %s496
      %p498 = pneg %p74
      %p499 = pneg %p71
      %p500 = scmp.lt.s32.totalorder %s27, 1
      %s501 = scalar_select %p500, %s27, 1
      %s502 = smul.addr %s501, 8
      %s503 = scalar_lea.vmem %s2, %s502
      %p504 = pneg %p100
      %p505 = pneg %p97
      %p506 = pneg %p121
      %p507 = pneg %p118
      %p508 = pneg %p142
      %p509 = pneg %p139
      %p510 = pneg %p163
      %p511 = pneg %p160
      %p512 = pneg %p184
      %p513 = pneg %p181
      %p514 = pneg %p205
      %p515 = pneg %p202
      %p516 = pneg %p226
      %p517 = pneg %p223
      %p518 = pneg %p247
      %p519 = pneg %p244
      %p520 = pneg %p268
      %p521 = pneg %p265
      %p522 = pneg %p289
      %p523 = pneg %p286
      %p524 = pneg %p310
      %p525 = pneg %p307
      %p526 = pneg %p331
      %p527 = pneg %p328
      %p528 = pneg %p352
      %p529 = pneg %p349
      %p530 = pneg %p373
      %p531 = pneg %p370
      %p532 = pneg %p399
      %p533 = pneg %p396
      %p534 = scmp.lt.s32.totalorder %s27, 1
      %s535 = scalar_select %p534, %s27, 1
      %s536 = smul.addr %s535, 8
      %s537 = scalar_lea.vmem %s16, %s536
      %s538 = smul.u32 8, %s27
      %p539 = scmp.lt.s32.totalorder %s538, 15
      %s540 = scalar_select %p539, %s538, 15
      %s541 = smul.addr %s540, 8
      %s542 = scalar_lea.vmem %s0, %s541
      %s543 = smul.u32 8, %s27
      %p544 = scmp.lt.s32.totalorder %s27, 1
      %s545 = scalar_select %p544, %s27, 1
      %s546 = smul.addr %s545, 8
      %s547 = scalar_lea.vmem %s1, %s546
      %p548 = scmp.lt.s32.totalorder %s27, 1
      %s549 = scalar_select %p548, %s27, 1
      %s550 = smul.addr %s549, 8
      %s551 = scalar_lea.vmem %s2, %s550
      %p552 = scmp.lt.s32.totalorder %s27, 1
      %s553 = scalar_select %p552, %s27, 1
      %s554 = smul.addr %s553, 8
      %s555 = scalar_lea.vmem %s16, %s554
      %v556 = vld [vmem:[%s542] sm:$0xff]
      %v557 = vld [vmem:[%s542 + $0x8] sm:$0xff]
      %v558 = vld [vmem:[%s542 + $0x10] sm:$0xff]
      %v559 = vld [vmem:[%s542 + $0x18] sm:$0xff]
      %v560 = vld [vmem:[%s542 + $0x20] sm:$0xff]
      %v561 = vld [vmem:[%s542 + $0x28] sm:$0xff]
      %v562 = vld [vmem:[%s542 + $0x30] sm:$0xff]
      %v563 = vld [vmem:[%s542 + $0x38] sm:$0xff]
      %v564 = vld [vmem:[%s5] sm:$0xff]
      %v565 = vld [vmem:[%s5 + $0x8] sm:$0xff]
      %v566 = vld [vmem:[%s5 + $0x10] sm:$0xff]
      %v567 = vld [vmem:[%s5 + $0x18] sm:$0xff]
      %v568 = vld [vmem:[%s5 + $0x20] sm:$0xff]
      %v569 = vld [vmem:[%s5 + $0x28] sm:$0xff]
      %v570 = vld [vmem:[%s5 + $0x30] sm:$0xff]
      %v571 = vld [vmem:[%s5 + $0x38] sm:$0xff]
      %v572 = vld [vmem:[%s6] sm:$0x1]
      %v574 = vlaneseq
      %v575 = vshrl.u32 %v574, 7
      %v576 = vsub.s32 0, %v575
      %v577 = vrot.slane %v572, %v576
      %vm579 = vcmask 523264
      %v581 = vsel %vm579, %v556, 0
      %v584 = vsel %vm579, %v557, 0
      %v587 = vsel %vm579, %v558, 0
      %v590 = vsel %vm579, %v559, 0
      %v593 = vsel %vm579, %v560, 0
      %v596 = vsel %vm579, %v561, 0
      %v599 = vsel %vm579, %v562, 0
      %v602 = vsel %vm579, %v563, 0
      %604 = vmatprep.subr.mxu0 0.0
      %605 = vmatpush1.msra.mxu0 %v564
      %606 = vmatprep.subr.mxu0 0.0
      %607 = vmatpush1.msra.mxu0 %v565
      %608 = vmatprep.subr.mxu0 0.0
      %609 = vmatpush1.msra.mxu0 %v566
      %610 = vmatprep.subr.mxu0 0.0
      %611 = vmatpush1.msra.mxu0 %v567
      %612 = vmatprep.subr.mxu0 0.0
      %613 = vmatpush1.msra.mxu0 %v568
      %614 = vmatprep.subr.mxu0 0.0
      %615 = vmatpush1.msra.mxu0 %v569
      %616 = vmatprep.subr.mxu0 0.0
      %617 = vmatpush1.msra.mxu0 %v570
      %618 = vmatprep.subr.mxu0 0.0
      %619 = vmatpush1.msra.mxu0 %v571
      %620 = vmatprep.subr.mxu0 0.0
      %621 = vmatpush1.msra.mxu0 0.0
      %622 = vmatprep.subr.mxu0 0.0
      %623 = vmatpush1.msra.mxu0 0.0
      %624 = vmatprep.subr.mxu0 0.0
      %625 = vmatpush1.msra.mxu0 0.0
      %626 = vmatprep.subr.mxu0 0.0
      %627 = vmatpush1.msra.mxu0 0.0
      %628 = vmatprep.subr.mxu0 0.0
      %629 = vmatpush1.msra.mxu0 0.0
      %630 = vmatprep.subr.mxu0 0.0
      %631 = vmatpush1.msra.mxu0 0.0
      %632 = vmatprep.subr.mxu0 0.0
      %633 = vmatpush1.msra.mxu0 0.0
      %634 = vmatprep.subr.mxu0 0.0
      %635 = vmatpush1.msra.mxu0 0.0
      %636 = vmatprep.subr.mxu0 0.0
      %637 = vmatpush1.msra.mxu0 0.0
      %638 = vmatprep.subr.mxu0 0.0
      %639 = vmatpush1.msra.mxu0 0.0
      %640 = vmatprep.subr.mxu0 0.0
      %641 = vmatpush1.msra.mxu0 0.0
      %642 = vmatprep.subr.mxu0 0.0
      %643 = vmatpush1.msra.mxu0 0.0
      %644 = vmatprep.subr.mxu0 0.0
      %645 = vmatpush1.msra.mxu0 0.0
      %646 = vmatprep.subr.mxu0 0.0
      %647 = vmatpush1.msra.mxu0 0.0
      %648 = vmatprep.subr.mxu0 0.0
      %649 = vmatpush1.msra.mxu0 0.0
      %650 = vmatprep.subr.mxu0 0.0
      %651 = vmatpush1.msra.mxu0 0.0
      %652 = vmatprep.subr.mxu0 0.0
      %653 = vmatpush1.msra.mxu0 0.0
      %654 = vmatprep.subr.mxu0 0.0
      %655 = vmatpush1.msra.mxu0 0.0
      %656 = vmatprep.subr.mxu0 0.0
      %657 = vmatpush1.msra.mxu0 0.0
      %658 = vmatprep.subr.mxu0 0.0
      %659 = vmatpush1.msra.mxu0 0.0
      %660 = vmatprep.subr.mxu0 0.0
      %661 = vmatpush1.msra.mxu0 0.0
      %662 = vmatprep.subr.mxu0 0.0
      %663 = vmatpush1.msra.mxu0 0.0
      %664 = vmatprep.subr.mxu0 0.0
      %665 = vmatpush1.msra.mxu0 0.0
      %666 = vmatprep.subr.mxu0 0.0
      %667 = vmatpush1.msra.mxu0 0.0
      %668 = vmatprep.mubr.f32.mxu0 0.0
      %669 = vmatmul.mubr.f32.gmra.mrb[0].mxu0 %v581
      %v670 = vpop.f32.mrb[0].mxu0
      %v671 = vadd.f32 %v577, %v670
      %v672 = vpop.f32.mrb[0].mxu0
      %673 = vmatprep.mubr.f32.mxu0 0.0
      %674 = vmatmul.mubr.f32.gmra.mrb[0].mxu0 %v584
      %v675 = vpop.f32.mrb[0].mxu0
      %v676 = vadd.f32 %v577, %v675
      %v677 = vpop.f32.mrb[0].mxu0
      %678 = vmatprep.mubr.f32.mxu0 0.0
      %679 = vmatmul.mubr.f32.gmra.mrb[0].mxu0 %v587
      %v680 = vpop.f32.mrb[0].mxu0
      %v681 = vadd.f32 %v577, %v680
      %v682 = vpop.f32.mrb[0].mxu0
      %683 = vmatprep.mubr.f32.mxu0 0.0
      %684 = vmatmul.mubr.f32.gmra.mrb[0].mxu0 %v590
      %v685 = vpop.f32.mrb[0].mxu0
      %v686 = vadd.f32 %v577, %v685
      %v687 = vpop.f32.mrb[0].mxu0
      %688 = vmatprep.mubr.f32.mxu0 0.0
      %689 = vmatmul.mubr.f32.gmra.mrb[0].mxu0 %v593
      %v690 = vpop.f32.mrb[0].mxu0
      %v691 = vadd.f32 %v577, %v690
      %v692 = vpop.f32.mrb[0].mxu0
      %693 = vmatprep.mubr.f32.mxu0 0.0
      %694 = vmatmul.mubr.f32.gmra.mrb[0].mxu0 %v596
      %v695 = vpop.f32.mrb[0].mxu0
      %v696 = vadd.f32 %v577, %v695
      %v697 = vpop.f32.mrb[0].mxu0
      %698 = vmatprep.mubr.f32.mxu0 0.0
      %699 = vmatmul.mubr.f32.gmra.mrb[0].mxu0 %v599
      %v700 = vpop.f32.mrb[0].mxu0
      %v701 = vadd.f32 %v577, %v700
      %v702 = vpop.f32.mrb[0].mxu0
      %703 = vmatprep.mubr.f32.mxu0 0.0
      %704 = vmatmul.mubr.f32.gmra.mrb[0].mxu0 %v602
      %v705 = vpop.f32.mrb[0].mxu0
      %v706 = vadd.f32 %v577, %v705
      %v707 = vpop.f32.mrb[0].mxu0
      %708 = vdwg.mxu0
      %v709 = vld [vmem:[%s547] sm:$0xff]
      %v710 = vlaneseq
      %v711 = vshrl.u32 %v710, 7
      %v712 = vsub.s32 0, %v711
      %v713 = vrot.slane %v709, %v712
      %715 = vbcast.lane.b32.xlu0 %v713, 256
      %v716 = vpop.permute.xlu0 %715
      %v717 = vlaneseq
      %v718 = vshrl.u32 %v717, 7
      %v719 = vsub.s32 1, %v718
      %v720 = vrot.slane %v709, %v719
      %722 = vbcast.lane.b32.xlu0 %v720, 256
      %v723 = vpop.permute.xlu0 %722
      %v724 = vlaneseq
      %v725 = vshrl.u32 %v724, 7
      %v726 = vsub.s32 2, %v725
      %v727 = vrot.slane %v709, %v726
      %729 = vbcast.lane.b32.xlu0 %v727, 256
      %v730 = vpop.permute.xlu0 %729
      %v731 = vlaneseq
      %v732 = vshrl.u32 %v731, 7
      %v733 = vsub.s32 3, %v732
      %v734 = vrot.slane %v709, %v733
      %736 = vbcast.lane.b32.xlu0 %v734, 256
      %v737 = vpop.permute.xlu0 %736
      %v738 = vlaneseq
      %v739 = vshrl.u32 %v738, 7
      %v740 = vsub.s32 4, %v739
      %v741 = vrot.slane %v709, %v740
      %743 = vbcast.lane.b32.xlu0 %v741, 256
      %v744 = vpop.permute.xlu0 %743
      %v745 = vlaneseq
      %v746 = vshrl.u32 %v745, 7
      %v747 = vsub.s32 5, %v746
      %v748 = vrot.slane %v709, %v747
      %750 = vbcast.lane.b32.xlu0 %v748, 256
      %v751 = vpop.permute.xlu0 %750
      %v752 = vlaneseq
      %v753 = vshrl.u32 %v752, 7
      %v754 = vsub.s32 6, %v753
      %v755 = vrot.slane %v709, %v754
      %757 = vbcast.lane.b32.xlu0 %v755, 256
      %v758 = vpop.permute.xlu0 %757
      %v759 = vlaneseq
      %v760 = vshrl.u32 %v759, 7
      %v761 = vsub.s32 7, %v760
      %v762 = vrot.slane %v709, %v761
      %764 = vbcast.lane.b32.xlu0 %v762, 256
      %v765 = vpop.permute.xlu0 %764
      %v766 = vmul.f32 %v556, %v716
      %v767 = vmul.f32 %v557, %v723
      %v768 = vmul.f32 %v558, %v730
      %v769 = vmul.f32 %v559, %v737
      %v770 = vmul.f32 %v560, %v744
      %v771 = vmul.f32 %v561, %v751
      %v772 = vmul.f32 %v562, %v758
      %v773 = vmul.f32 %v563, %v765
      %v774 = vsel %vm579, %v766, 0.0
      %v775 = vrot.slane %v774, 4
      %v776 = vadd.f32 %v774, %v775
      %v777 = vrot.slane %v776, 2
      %v778 = vadd.f32 %v776, %v777
      %v779 = vrot.slane %v778, 1
      %v780 = vadd.f32 %v778, %v779
      %v781 = vsel %vm579, %v767, 0.0
      %v782 = vrot.slane %v781, 4
      %v783 = vadd.f32 %v781, %v782
      %v784 = vrot.slane %v783, 2
      %v785 = vadd.f32 %v783, %v784
      %v786 = vrot.slane %v785, 1
      %v787 = vadd.f32 %v785, %v786
      %v788 = vsel %vm579, %v768, 0.0
      %v789 = vrot.slane %v788, 4
      %v790 = vadd.f32 %v788, %v789
      %v791 = vrot.slane %v790, 2
      %v792 = vadd.f32 %v790, %v791
      %v793 = vrot.slane %v792, 1
      %v794 = vadd.f32 %v792, %v793
      %v795 = vsel %vm579, %v769, 0.0
      %v796 = vrot.slane %v795, 4
      %v797 = vadd.f32 %v795, %v796
      %v798 = vrot.slane %v797, 2
      %v799 = vadd.f32 %v797, %v798
      %v800 = vrot.slane %v799, 1
      %v801 = vadd.f32 %v799, %v800
      %v802 = vsel %vm579, %v770, 0.0
      %v803 = vrot.slane %v802, 4
      %v804 = vadd.f32 %v802, %v803
      %v805 = vrot.slane %v804, 2
      %v806 = vadd.f32 %v804, %v805
      %v807 = vrot.slane %v806, 1
      %v808 = vadd.f32 %v806, %v807
      %v809 = vsel %vm579, %v771, 0.0
      %v810 = vrot.slane %v809, 4
      %v811 = vadd.f32 %v809, %v810
      %v812 = vrot.slane %v811, 2
      %v813 = vadd.f32 %v811, %v812
      %v814 = vrot.slane %v813, 1
      %v815 = vadd.f32 %v813, %v814
      %v816 = vsel %vm579, %v772, 0.0
      %v817 = vrot.slane %v816, 4
      %v818 = vadd.f32 %v816, %v817
      %v819 = vrot.slane %v818, 2
      %v820 = vadd.f32 %v818, %v819
      %v821 = vrot.slane %v820, 1
      %v822 = vadd.f32 %v820, %v821
      %v823 = vsel %vm579, %v773, 0.0
      %v824 = vrot.slane %v823, 4
      %v825 = vadd.f32 %v823, %v824
      %v826 = vrot.slane %v825, 2
      %v827 = vadd.f32 %v825, %v826
      %v828 = vrot.slane %v827, 1
      %v829 = vadd.f32 %v827, %v828
      %v830 = vld [vmem:[%s3] sm:$0xff]
      %v831 = vld [vmem:[%s3 + $0x8] sm:$0xff]
      %v832 = vld [vmem:[%s3 + $0x10] sm:$0xff]
      %v833 = vld [vmem:[%s3 + $0x18] sm:$0xff]
      %v834 = vld [vmem:[%s3 + $0x20] sm:$0xff]
      %v835 = vld [vmem:[%s3 + $0x28] sm:$0xff]
      %v836 = vld [vmem:[%s3 + $0x30] sm:$0xff]
      %v837 = vld [vmem:[%s3 + $0x38] sm:$0xff]
      %v838 = vld [vmem:[%s4] sm:$0x1]
      %v840 = vlaneseq
      %v841 = vshrl.u32 %v840, 7
      %v842 = vsub.s32 0, %v841
      %v843 = vrot.slane %v838, %v842
      %vm853 = vcmask 1041409
      %v854 = vsel %vm853, %v787, %v780
      %vm855 = vcmask 1042434
      %v856 = vsel %vm855, %v794, %v854
      %vm857 = vcmask 1043459
      %v858 = vsel %vm857, %v801, %v856
      %vm859 = vcmask 1044484
      %v860 = vsel %vm859, %v808, %v858
      %vm861 = vcmask 1045509
      %v862 = vsel %vm861, %v815, %v860
      %vm863 = vcmask 1046534
      %v864 = vsel %vm863, %v822, %v862
      %vm865 = vcmask 1047559
      %v866 = vsel %vm865, %v829, %v864
      %v867 = vsel %vm579, %v866, 0
      %869 = vmatprep.subr.mxu0 0.0
      %870 = vmatpush1.msra.mxu0 %v830
      %871 = vmatprep.subr.mxu0 0.0
      %872 = vmatpush1.msra.mxu0 %v831
      %873 = vmatprep.subr.mxu0 0.0
      %874 = vmatpush1.msra.mxu0 %v832
      %875 = vmatprep.subr.mxu0 0.0
      %876 = vmatpush1.msra.mxu0 %v833
      %877 = vmatprep.subr.mxu0 0.0
      %878 = vmatpush1.msra.mxu0 %v834
      %879 = vmatprep.subr.mxu0 0.0
      %880 = vmatpush1.msra.mxu0 %v835
      %881 = vmatprep.subr.mxu0 0.0
      %882 = vmatpush1.msra.mxu0 %v836
      %883 = vmatprep.subr.mxu0 0.0
      %884 = vmatpush1.msra.mxu0 %v837
      %885 = vmatprep.subr.mxu0 0.0
      %886 = vmatpush1.msra.mxu0 0.0
      %887 = vmatprep.subr.mxu0 0.0
      %888 = vmatpush1.msra.mxu0 0.0
      %889 = vmatprep.subr.mxu0 0.0
      %890 = vmatpush1.msra.mxu0 0.0
      %891 = vmatprep.subr.mxu0 0.0
      %892 = vmatpush1.msra.mxu0 0.0
      %893 = vmatprep.subr.mxu0 0.0
      %894 = vmatpush1.msra.mxu0 0.0
      %895 = vmatprep.subr.mxu0 0.0
      %896 = vmatpush1.msra.mxu0 0.0
      %897 = vmatprep.subr.mxu0 0.0
      %898 = vmatpush1.msra.mxu0 0.0
      %899 = vmatprep.subr.mxu0 0.0
      %900 = vmatpush1.msra.mxu0 0.0
      %901 = vmatprep.subr.mxu0 0.0
      %902 = vmatpush1.msra.mxu0 0.0
      %903 = vmatprep.subr.mxu0 0.0
      %904 = vmatpush1.msra.mxu0 0.0
      %905 = vmatprep.subr.mxu0 0.0
      %906 = vmatpush1.msra.mxu0 0.0
      %907 = vmatprep.subr.mxu0 0.0
      %908 = vmatpush1.msra.mxu0 0.0
      %909 = vmatprep.subr.mxu0 0.0
      %910 = vmatpush1.msra.mxu0 0.0
      %911 = vmatprep.subr.mxu0 0.0
      %912 = vmatpush1.msra.mxu0 0.0
      %913 = vmatprep.subr.mxu0 0.0
      %914 = vmatpush1.msra.mxu0 0.0
      %915 = vmatprep.subr.mxu0 0.0
      %916 = vmatpush1.msra.mxu0 0.0
      %917 = vmatprep.subr.mxu0 0.0
      %918 = vmatpush1.msra.mxu0 0.0
      %919 = vmatprep.subr.mxu0 0.0
      %920 = vmatpush1.msra.mxu0 0.0
      %921 = vmatprep.subr.mxu0 0.0
      %922 = vmatpush1.msra.mxu0 0.0
      %923 = vmatprep.subr.mxu0 0.0
      %924 = vmatpush1.msra.mxu0 0.0
      %925 = vmatprep.subr.mxu0 0.0
      %926 = vmatpush1.msra.mxu0 0.0
      %927 = vmatprep.subr.mxu0 0.0
      %928 = vmatpush1.msra.mxu0 0.0
      %929 = vmatprep.subr.mxu0 0.0
      %930 = vmatpush1.msra.mxu0 0.0
      %931 = vmatprep.subr.mxu0 0.0
      %932 = vmatpush1.msra.mxu0 0.0
      %933 = vmatprep.mubr.f32.mxu0 0.0
      %934 = vmatmul.mubr.f32.gmra.mrb[0].mxu0 %v867
      %v935 = vpop.f32.mrb[0].mxu0
      %v936 = vadd.f32 %v843, %v935
      %v937 = vpop.f32.mrb[0].mxu0
      %938 = vdwg.mxu0
      %v940 = vcombine.high %v936, %v936
      %v942 = vunpack.c.l.s4 1966171168
      %v943 = vunpack.c.0.s8 %v942
      %v944 = vlaneseq
      %v945 = vshrl.u32 %v944, 7
      %v946 = vsub.s32 %v943, %v945
      %v947 = vrot.slane %v936, %v946
      %v949 = vunpack.c.l.s4 1966171168
      %v950 = vunpack.c.0.s8 %v949
      %v951 = vlaneseq
      %v952 = vshrl.u32 %v951, 7
      %v953 = vsub.s32 %v950, %v952
      %v954 = vrot.slane %v940, %v953
      %v955 = vcombine.high %v947, %v947
      %v956 = vcombine.high %v954, %v954
      %v958 = vunpack.c.l.s4 1966171168
      %v959 = vunpack.c.0.s8 %v958
      %v960 = vlaneseq
      %v961 = vshrl.u32 %v960, 7
      %v962 = vsub.s32 %v959, %v961
      %v963 = vrot.slane %v947, %v962
      %v965 = vunpack.c.l.s4 1966171168
      %v966 = vunpack.c.0.s8 %v965
      %v967 = vlaneseq
      %v968 = vshrl.u32 %v967, 7
      %v969 = vsub.s32 %v966, %v968
      %v970 = vrot.slane %v954, %v969
      %v972 = vunpack.c.l.s4 1966171168
      %v973 = vunpack.c.0.s8 %v972
      %v974 = vlaneseq
      %v975 = vshrl.u32 %v974, 7
      %v976 = vsub.s32 %v973, %v975
      %v977 = vrot.slane %v955, %v976
      %v979 = vunpack.c.l.s4 1966171168
      %v980 = vunpack.c.0.s8 %v979
      %v981 = vlaneseq
      %v982 = vshrl.u32 %v981, 7
      %v983 = vsub.s32 %v980, %v982
      %v984 = vrot.slane %v956, %v983
      %v985 = vcombine.high %v963, %v963
      %v986 = vcombine.high %v970, %v970
      %v987 = vcombine.high %v977, %v977
      %v988 = vcombine.high %v984, %v984
      %v989 = vlaneseq
      %v990 = vshrl.u32 %v989, 7
      %v991 = vsub.s32 0, %v990
      %v992 = vrot.slane %v963, %v991
      %v993 = vlaneseq
      %v994 = vshrl.u32 %v993, 7
      %v995 = vsub.s32 0, %v994
      %v996 = vrot.slane %v977, %v995
      %v997 = vlaneseq
      %v998 = vshrl.u32 %v997, 7
      %v999 = vsub.s32 0, %v998
      %v1000 = vrot.slane %v985, %v999
      %v1001 = vlaneseq
      %v1002 = vshrl.u32 %v1001, 7
      %v1003 = vsub.s32 0, %v1002
      %v1004 = vrot.slane %v987, %v1003
      %v1005 = vlaneseq
      %v1006 = vshrl.u32 %v1005, 7
      %v1007 = vsub.s32 0, %v1006
      %v1008 = vrot.slane %v970, %v1007
      %v1009 = vlaneseq
      %v1010 = vshrl.u32 %v1009, 7
      %v1011 = vsub.s32 0, %v1010
      %v1012 = vrot.slane %v984, %v1011
      %v1013 = vlaneseq
      %v1014 = vshrl.u32 %v1013, 7
      %v1015 = vsub.s32 0, %v1014
      %v1016 = vrot.slane %v986, %v1015
      %v1017 = vlaneseq
      %v1018 = vshrl.u32 %v1017, 7
      %v1019 = vsub.s32 0, %v1018
      %v1020 = vrot.slane %v988, %v1019
      %v1029 = vmul.f32 %v992, %v671
      %v1030 = vmul.f32 %v996, %v676
      %v1031 = vmul.f32 %v1000, %v681
      %v1032 = vmul.f32 %v1004, %v686
      %v1033 = vmul.f32 %v1008, %v691
      %v1034 = vmul.f32 %v1012, %v696
      %v1035 = vmul.f32 %v1016, %v701
      %v1036 = vmul.f32 %v1020, %v706
      %v1037 = vsel %vm579, %v1029, 0.0
      %1038 = vadd.xlane.f32.xlu0 %v1037
      %v1039 = vpop.xlane.xlu0 %1038
      %v1040 = vsel %vm579, %v1030, 0.0
      %1041 = vadd.xlane.f32.xlu0 %v1040
      %v1042 = vpop.xlane.xlu0 %1041
      %v1043 = vsel %vm579, %v1031, 0.0
      %1044 = vadd.xlane.f32.xlu0 %v1043
      %v1045 = vpop.xlane.xlu0 %1044
      %v1046 = vsel %vm579, %v1032, 0.0
      %1047 = vadd.xlane.f32.xlu0 %v1046
      %v1048 = vpop.xlane.xlu0 %1047
      %v1049 = vsel %vm579, %v1033, 0.0
      %1050 = vadd.xlane.f32.xlu0 %v1049
      %v1051 = vpop.xlane.xlu0 %1050
      %v1052 = vsel %vm579, %v1034, 0.0
      %1053 = vadd.xlane.f32.xlu0 %v1052
      %v1054 = vpop.xlane.xlu0 %1053
      %v1055 = vsel %vm579, %v1035, 0.0
      %1056 = vadd.xlane.f32.xlu0 %v1055
      %v1057 = vpop.xlane.xlu0 %1056
      %v1058 = vsel %vm579, %v1036, 0.0
      %1059 = vadd.xlane.f32.xlu0 %v1058
      %v1060 = vpop.xlane.xlu0 %1059
      %v1061 = vmul.f32 %v1039, 0.125
      %v1062 = vmul.f32 %v1042, 0.125
      %v1063 = vmul.f32 %v1045, 0.125
      %v1064 = vmul.f32 %v1048, 0.125
      %v1065 = vmul.f32 %v1051, 0.125
      %v1066 = vmul.f32 %v1054, 0.125
      %v1067 = vmul.f32 %v1057, 0.125
      %v1068 = vmul.f32 %v1060, 0.125
      %v1077 = vlaneseq
      %v1078 = vand.u32 %v1077, 127
      %v1079 = vlaneseq
      %v1080 = vshrl.u32 %v1079, 7
      %v1081 = vsub.s32 %v1078, %v1080
      %v1082 = vrot.slane %v1061, %v1081
      %v1083 = vlaneseq
      %v1084 = vshrl.u32 %v1083, 7
      %v1085 = vsub.s32 %v1078, %v1084
      %v1086 = vrot.slane %v1062, %v1085
      %v1087 = vlaneseq
      %v1088 = vshrl.u32 %v1087, 7
      %v1089 = vsub.s32 %v1078, %v1088
      %v1090 = vrot.slane %v1063, %v1089
      %v1091 = vlaneseq
      %v1092 = vshrl.u32 %v1091, 7
      %v1093 = vsub.s32 %v1078, %v1092
      %v1094 = vrot.slane %v1064, %v1093
      %v1095 = vlaneseq
      %v1096 = vshrl.u32 %v1095, 7
      %v1097 = vsub.s32 %v1078, %v1096
      %v1098 = vrot.slane %v1065, %v1097
      %v1099 = vlaneseq
      %v1100 = vshrl.u32 %v1099, 7
      %v1101 = vsub.s32 %v1078, %v1100
      %v1102 = vrot.slane %v1066, %v1101
      %v1103 = vlaneseq
      %v1104 = vshrl.u32 %v1103, 7
      %v1105 = vsub.s32 %v1078, %v1104
      %v1106 = vrot.slane %v1067, %v1105
      %v1107 = vlaneseq
      %v1108 = vshrl.u32 %v1107, 7
      %v1109 = vsub.s32 %v1078, %v1108
      %v1110 = vrot.slane %v1068, %v1109
      %v1111 = vsel %vm853, %v1086, %v1082
      %v1112 = vsel %vm855, %v1090, %v1111
      %v1113 = vsel %vm857, %v1094, %v1112
      %v1114 = vsel %vm859, %v1098, %v1113
      %v1115 = vsel %vm861, %v1102, %v1114
      %v1116 = vsel %vm863, %v1106, %v1115
      %v1117 = vsel %vm865, %v1110, %v1116
      %vm1119 = vcmask 64512
      %v1120 = vsel %vm1119, %v1117, -inf
      %1121 = vmax.xlane.f32.xlu0 %v1120
      %v1122 = vpop.xlane.xlu0 %1121
      %v1124 = vlaneseq
      %v1125 = vshrl.u32 %v1124, 7
      %v1126 = vsub.s32 0, %v1125
      %v1127 = vrot.slane %v1122, %v1126
      %v1128 = vlaneseq
      %v1129 = vshrl.u32 %v1128, 7
      %v1130 = vsub.s32 1, %v1129
      %v1131 = vrot.slane %v1122, %v1130
      %v1132 = vlaneseq
      %v1133 = vshrl.u32 %v1132, 7
      %v1134 = vsub.s32 2, %v1133
      %v1135 = vrot.slane %v1122, %v1134
      %v1136 = vlaneseq
      %v1137 = vshrl.u32 %v1136, 7
      %v1138 = vsub.s32 3, %v1137
      %v1139 = vrot.slane %v1122, %v1138
      %v1140 = vlaneseq
      %v1141 = vshrl.u32 %v1140, 7
      %v1142 = vsub.s32 4, %v1141
      %v1143 = vrot.slane %v1122, %v1142
      %v1144 = vlaneseq
      %v1145 = vshrl.u32 %v1144, 7
      %v1146 = vsub.s32 5, %v1145
      %v1147 = vrot.slane %v1122, %v1146
      %v1148 = vlaneseq
      %v1149 = vshrl.u32 %v1148, 7
      %v1150 = vsub.s32 6, %v1149
      %v1151 = vrot.slane %v1122, %v1150
      %v1152 = vlaneseq
      %v1153 = vshrl.u32 %v1152, 7
      %v1154 = vsub.s32 7, %v1153
      %v1155 = vrot.slane %v1122, %v1154
      %v1164 = vsub.f32 %v1061, %v1127
      %v1165 = vsub.f32 %v1062, %v1131
      %v1166 = vsub.f32 %v1063, %v1135
      %v1167 = vsub.f32 %v1064, %v1139
      %v1168 = vsub.f32 %v1065, %v1143
      %v1169 = vsub.f32 %v1066, %v1147
      %v1170 = vsub.f32 %v1067, %v1151
      %v1171 = vsub.f32 %v1068, %v1155
      %v1172 = vmul.f32 %v1164, 1.442695
      %v1173 = vpow.pop %v1172
      %v1174 = vmul.f32 %v1165, 1.442695
      %v1175 = vpow.pop %v1174
      %v1176 = vmul.f32 %v1166, 1.442695
      %v1177 = vpow.pop %v1176
      %v1178 = vmul.f32 %v1167, 1.442695
      %v1179 = vpow.pop %v1178
      %v1180 = vmul.f32 %v1168, 1.442695
      %v1181 = vpow.pop %v1180
      %v1182 = vmul.f32 %v1169, 1.442695
      %v1183 = vpow.pop %v1182
      %v1184 = vmul.f32 %v1170, 1.442695
      %v1185 = vpow.pop %v1184
      %v1186 = vmul.f32 %v1171, 1.442695
      %v1187 = vpow.pop %v1186
      %1196 = vset.pattern.permute.xlu0 0
      %1197 = vperm.xlu0 %1196, %v1173
      %v1198 = vpop.permute.xlu0 %1197
      %1199 = vset.pattern.permute.xlu0 0
      %1200 = vperm.xlu0 %1199, %v1175
      %v1201 = vpop.permute.xlu0 %1200
      %1202 = vset.pattern.permute.xlu0 0
      %1203 = vperm.xlu0 %1202, %v1177
      %v1204 = vpop.permute.xlu0 %1203
      %1205 = vset.pattern.permute.xlu0 0
      %1206 = vperm.xlu0 %1205, %v1179
      %v1207 = vpop.permute.xlu0 %1206
      %1208 = vset.pattern.permute.xlu0 0
      %1209 = vperm.xlu0 %1208, %v1181
      %v1210 = vpop.permute.xlu0 %1209
      %1211 = vset.pattern.permute.xlu0 0
      %1212 = vperm.xlu0 %1211, %v1183
      %v1213 = vpop.permute.xlu0 %1212
      %1214 = vset.pattern.permute.xlu0 0
      %1215 = vperm.xlu0 %1214, %v1185
      %v1216 = vpop.permute.xlu0 %1215
      %1217 = vset.pattern.permute.xlu0 0
      %1218 = vperm.xlu0 %1217, %v1187
      %v1219 = vpop.permute.xlu0 %1218
      %v1220 = vlaneseq
      %v1221 = vshrl.u32 %v1220, 7
      %v1222 = vsub.s32 %v1078, %v1221
      %v1223 = vrot.slane %v1198, %v1222
      %v1224 = vlaneseq
      %v1225 = vshrl.u32 %v1224, 7
      %v1226 = vsub.s32 %v1078, %v1225
      %v1227 = vrot.slane %v1201, %v1226
      %v1228 = vlaneseq
      %v1229 = vshrl.u32 %v1228, 7
      %v1230 = vsub.s32 %v1078, %v1229
      %v1231 = vrot.slane %v1204, %v1230
      %v1232 = vlaneseq
      %v1233 = vshrl.u32 %v1232, 7
      %v1234 = vsub.s32 %v1078, %v1233
      %v1235 = vrot.slane %v1207, %v1234
      %v1236 = vlaneseq
      %v1237 = vshrl.u32 %v1236, 7
      %v1238 = vsub.s32 %v1078, %v1237
      %v1239 = vrot.slane %v1210, %v1238
      %v1240 = vlaneseq
      %v1241 = vshrl.u32 %v1240, 7
      %v1242 = vsub.s32 %v1078, %v1241
      %v1243 = vrot.slane %v1213, %v1242
      %v1244 = vlaneseq
      %v1245 = vshrl.u32 %v1244, 7
      %v1246 = vsub.s32 %v1078, %v1245
      %v1247 = vrot.slane %v1216, %v1246
      %v1248 = vlaneseq
      %v1249 = vshrl.u32 %v1248, 7
      %v1250 = vsub.s32 %v1078, %v1249
      %v1251 = vrot.slane %v1219, %v1250
      %v1252 = vsel %vm853, %v1227, %v1223
      %v1253 = vsel %vm855, %v1231, %v1252
      %v1254 = vsel %vm857, %v1235, %v1253
      %v1255 = vsel %vm859, %v1239, %v1254
      %v1256 = vsel %vm861, %v1243, %v1255
      %v1257 = vsel %vm863, %v1247, %v1256
      %v1258 = vsel %vm865, %v1251, %v1257
      %v1260 = vsel %vm1119, %v1258, 0.0
      %1261 = vadd.xlane.f32.xlu0 %v1260
      %v1262 = vpop.xlane.xlu0 %1261
      %v1263 = vrcp.pop %v1262
      %v1265 = vlaneseq
      %v1266 = vshrl.u32 %v1265, 7
      %v1267 = vsub.s32 0, %v1266
      %v1268 = vrot.slane %v1263, %v1267
      %v1269 = vlaneseq
      %v1270 = vshrl.u32 %v1269, 7
      %v1271 = vsub.s32 1, %v1270
      %v1272 = vrot.slane %v1263, %v1271
      %v1273 = vlaneseq
      %v1274 = vshrl.u32 %v1273, 7
      %v1275 = vsub.s32 2, %v1274
      %v1276 = vrot.slane %v1263, %v1275
      %v1277 = vlaneseq
      %v1278 = vshrl.u32 %v1277, 7
      %v1279 = vsub.s32 3, %v1278
      %v1280 = vrot.slane %v1263, %v1279
      %v1281 = vlaneseq
      %v1282 = vshrl.u32 %v1281, 7
      %v1283 = vsub.s32 4, %v1282
      %v1284 = vrot.slane %v1263, %v1283
      %v1285 = vlaneseq
      %v1286 = vshrl.u32 %v1285, 7
      %v1287 = vsub.s32 5, %v1286
      %v1288 = vrot.slane %v1263, %v1287
      %v1289 = vlaneseq
      %v1290 = vshrl.u32 %v1289, 7
      %v1291 = vsub.s32 6, %v1290
      %v1292 = vrot.slane %v1263, %v1291
      %v1293 = vlaneseq
      %v1294 = vshrl.u32 %v1293, 7
      %v1295 = vsub.s32 7, %v1294
      %v1296 = vrot.slane %v1263, %v1295
      %v1305 = vmul.f32 %v1173, %v1268
      %v1306 = vmul.f32 %v1175, %v1272
      %v1307 = vmul.f32 %v1177, %v1276
      %v1308 = vmul.f32 %v1179, %v1280
      %v1309 = vmul.f32 %v1181, %v1284
      %v1310 = vmul.f32 %v1183, %v1288
      %v1311 = vmul.f32 %v1185, %v1292
      %v1312 = vmul.f32 %v1187, %v1296
      %1314 = vset.pattern.permute.xlu0 0
      %1315 = vperm.xlu0 %1314, %v1305
      %v1316 = vpop.permute.xlu0 %1315
      %1319 = vset.pattern.permute.xlu0 0
      %1320 = vperm.xlu0 %1319, %v1306
      %v1321 = vpop.permute.xlu0 %1320
      %1324 = vset.pattern.permute.xlu0 0
      %1325 = vperm.xlu0 %1324, %v1307
      %v1326 = vpop.permute.xlu0 %1325
      %1329 = vset.pattern.permute.xlu0 0
      %1330 = vperm.xlu0 %1329, %v1308
      %v1331 = vpop.permute.xlu0 %1330
      %1334 = vset.pattern.permute.xlu0 0
      %1335 = vperm.xlu0 %1334, %v1309
      %v1336 = vpop.permute.xlu0 %1335
      %1339 = vset.pattern.permute.xlu0 0
      %1340 = vperm.xlu0 %1339, %v1310
      %v1341 = vpop.permute.xlu0 %1340
      %1344 = vset.pattern.permute.xlu0 0
      %1345 = vperm.xlu0 %1344, %v1311
      %v1346 = vpop.permute.xlu0 %1345
      %1349 = vset.pattern.permute.xlu0 0
      %1350 = vperm.xlu0 %1349, %v1312
      %v1351 = vpop.permute.xlu0 %1350
      %v1353 = vmul.f32 %v1316, %v671
      %v1354 = vmul.f32 %v1321, %v676
      %v1355 = vmul.f32 %v1326, %v681
      %v1356 = vmul.f32 %v1331, %v686
      %v1357 = vmul.f32 %v1336, %v691
      %v1358 = vmul.f32 %v1341, %v696
      %v1359 = vmul.f32 %v1346, %v701
      %v1360 = vmul.f32 %v1351, %v706
      %vm1361 = vcmask 1048064
      %v1362 = vsel %vm1361, %v1353, 0.0
      %v1363 = vrot.slane %v1362, 4
      %v1364 = vadd.f32 %v1362, %v1363
      %v1365 = vrot.slane %v1364, 2
      %v1366 = vadd.f32 %v1364, %v1365
      %v1367 = vrot.slane %v1366, 1
      %v1368 = vadd.f32 %v1366, %v1367
      %v1369 = vsel %vm1361, %v1354, 0.0
      %v1370 = vrot.slane %v1369, 4
      %v1371 = vadd.f32 %v1369, %v1370
      %v1372 = vrot.slane %v1371, 2
      %v1373 = vadd.f32 %v1371, %v1372
      %v1374 = vrot.slane %v1373, 1
      %v1375 = vadd.f32 %v1373, %v1374
      %v1376 = vsel %vm1361, %v1355, 0.0
      %v1377 = vrot.slane %v1376, 4
      %v1378 = vadd.f32 %v1376, %v1377
      %v1379 = vrot.slane %v1378, 2
      %v1380 = vadd.f32 %v1378, %v1379
      %v1381 = vrot.slane %v1380, 1
      %v1382 = vadd.f32 %v1380, %v1381
      %v1383 = vsel %vm1361, %v1356, 0.0
      %v1384 = vrot.slane %v1383, 4
      %v1385 = vadd.f32 %v1383, %v1384
      %v1386 = vrot.slane %v1385, 2
      %v1387 = vadd.f32 %v1385, %v1386
      %v1388 = vrot.slane %v1387, 1
      %v1389 = vadd.f32 %v1387, %v1388
      %v1390 = vsel %vm1361, %v1357, 0.0
      %v1391 = vrot.slane %v1390, 4
      %v1392 = vadd.f32 %v1390, %v1391
      %v1393 = vrot.slane %v1392, 2
      %v1394 = vadd.f32 %v1392, %v1393
      %v1395 = vrot.slane %v1394, 1
      %v1396 = vadd.f32 %v1394, %v1395
      %v1397 = vsel %vm1361, %v1358, 0.0
      %v1398 = vrot.slane %v1397, 4
      %v1399 = vadd.f32 %v1397, %v1398
      %v1400 = vrot.slane %v1399, 2
      %v1401 = vadd.f32 %v1399, %v1400
      %v1402 = vrot.slane %v1401, 1
      %v1403 = vadd.f32 %v1401, %v1402
      %v1404 = vsel %vm1361, %v1359, 0.0
      %v1405 = vrot.slane %v1404, 4
      %v1406 = vadd.f32 %v1404, %v1405
      %v1407 = vrot.slane %v1406, 2
      %v1408 = vadd.f32 %v1406, %v1407
      %v1409 = vrot.slane %v1408, 1
      %v1410 = vadd.f32 %v1408, %v1409
      %v1411 = vsel %vm1361, %v1360, 0.0
      %v1412 = vrot.slane %v1411, 4
      %v1413 = vadd.f32 %v1411, %v1412
      %v1414 = vrot.slane %v1413, 2
      %v1415 = vadd.f32 %v1413, %v1414
      %v1416 = vrot.slane %v1415, 1
      %v1417 = vadd.f32 %v1415, %v1416
      %v1418 = vld [vmem:[%s7] sm:$0xff]
      %v1419 = vld [vmem:[%s7 + $0x8] sm:$0xff]
      %v1420 = vld [vmem:[%s7 + $0x10] sm:$0xff]
      %v1421 = vld [vmem:[%s7 + $0x18] sm:$0xff]
      %v1422 = vld [vmem:[%s7 + $0x20] sm:$0xff]
      %v1423 = vld [vmem:[%s7 + $0x28] sm:$0xff]
      %v1424 = vld [vmem:[%s7 + $0x30] sm:$0xff]
      %v1425 = vld [vmem:[%s7 + $0x38] sm:$0xff]
      %v1426 = vld [vmem:[%s8] sm:$0x1]
      %v1428 = vlaneseq
      %v1429 = vshrl.u32 %v1428, 7
      %v1430 = vsub.s32 0, %v1429
      %v1431 = vrot.slane %v1426, %v1430
      %v1441 = vsel %vm853, %v1375, %v1368
      %v1442 = vsel %vm855, %v1382, %v1441
      %v1443 = vsel %vm857, %v1389, %v1442
      %v1444 = vsel %vm859, %v1396, %v1443
      %v1445 = vsel %vm861, %v1403, %v1444
      %v1446 = vsel %vm863, %v1410, %v1445
      %v1447 = vsel %vm865, %v1417, %v1446
      %1448 = vrot.lane.b32.xlu0 %v1447, 64
      %v1449 = vpop.permute.xlu0 %1448
      %v1450 = vsel %vm579, %v1449, 0
      %1452 = vmatprep.subr.mxu0 0.0
      %1453 = vmatpush1.msra.mxu0 %v1418
      %1454 = vmatprep.subr.mxu0 0.0
      %1455 = vmatpush1.msra.mxu0 %v1419
      %1456 = vmatprep.subr.mxu0 0.0
      %1457 = vmatpush1.msra.mxu0 %v1420
      %1458 = vmatprep.subr.mxu0 0.0
      %1459 = vmatpush1.msra.mxu0 %v1421
      %1460 = vmatprep.subr.mxu0 0.0
      %1461 = vmatpush1.msra.mxu0 %v1422
      %1462 = vmatprep.subr.mxu0 0.0
      %1463 = vmatpush1.msra.mxu0 %v1423
      %1464 = vmatprep.subr.mxu0 0.0
      %1465 = vmatpush1.msra.mxu0 %v1424
      %1466 = vmatprep.subr.mxu0 0.0
      %1467 = vmatpush1.msra.mxu0 %v1425
      %1468 = vmatprep.subr.mxu0 0.0
      %1469 = vmatpush1.msra.mxu0 0.0
      %1470 = vmatprep.subr.mxu0 0.0
      %1471 = vmatpush1.msra.mxu0 0.0
      %1472 = vmatprep.subr.mxu0 0.0
      %1473 = vmatpush1.msra.mxu0 0.0
      %1474 = vmatprep.subr.mxu0 0.0
      %1475 = vmatpush1.msra.mxu0 0.0
      %1476 = vmatprep.subr.mxu0 0.0
      %1477 = vmatpush1.msra.mxu0 0.0
      %1478 = vmatprep.subr.mxu0 0.0
      %1479 = vmatpush1.msra.mxu0 0.0
      %1480 = vmatprep.subr.mxu0 0.0
      %1481 = vmatpush1.msra.mxu0 0.0
      %1482 = vmatprep.subr.mxu0 0.0
      %1483 = vmatpush1.msra.mxu0 0.0
      %1484 = vmatprep.subr.mxu0 0.0
      %1485 = vmatpush1.msra.mxu0 0.0
      %1486 = vmatprep.subr.mxu0 0.0
      %1487 = vmatpush1.msra.mxu0 0.0
      %1488 = vmatprep.subr.mxu0 0.0
      %1489 = vmatpush1.msra.mxu0 0.0
      %1490 = vmatprep.subr.mxu0 0.0
      %1491 = vmatpush1.msra.mxu0 0.0
      %1492 = vmatprep.subr.mxu0 0.0
      %1493 = vmatpush1.msra.mxu0 0.0
      %1494 = vmatprep.subr.mxu0 0.0
      %1495 = vmatpush1.msra.mxu0 0.0
      %1496 = vmatprep.subr.mxu0 0.0
      %1497 = vmatpush1.msra.mxu0 0.0
      %1498 = vmatprep.subr.mxu0 0.0
      %1499 = vmatpush1.msra.mxu0 0.0
      %1500 = vmatprep.subr.mxu0 0.0
      %1501 = vmatpush1.msra.mxu0 0.0
      %1502 = vmatprep.subr.mxu0 0.0
      %1503 = vmatpush1.msra.mxu0 0.0
      %1504 = vmatprep.subr.mxu0 0.0
      %1505 = vmatpush1.msra.mxu0 0.0
      %1506 = vmatprep.subr.mxu0 0.0
      %1507 = vmatpush1.msra.mxu0 0.0
      %1508 = vmatprep.subr.mxu0 0.0
      %1509 = vmatpush1.msra.mxu0 0.0
      %1510 = vmatprep.subr.mxu0 0.0
      %1511 = vmatpush1.msra.mxu0 0.0
      %1512 = vmatprep.subr.mxu0 0.0
      %1513 = vmatpush1.msra.mxu0 0.0
      %1514 = vmatprep.subr.mxu0 0.0
      %1515 = vmatpush1.msra.mxu0 0.0
      %1516 = vmatprep.mubr.f32.mxu0 0.0
      %1517 = vmatmul.mubr.f32.gmra.mrb[0].mxu0 %v1450
      %v1518 = vpop.f32.mrb[0].mxu0
      %v1519 = vadd.f32 %v1431, %v1518
      %v1520 = vpop.f32.mrb[0].mxu0
      %1521 = vdwg.mxu0
      %v1522 = vld [vmem:[%s551] sm:$0xff]
      %v1523 = vlaneseq
      %v1524 = vshrl.u32 %v1523, 7
      %v1525 = vsub.s32 %v1078, %v1524
      %v1526 = vrot.slane %v1316, %v1525
      %v1527 = vlaneseq
      %v1528 = vshrl.u32 %v1527, 7
      %v1529 = vsub.s32 %v1078, %v1528
      %v1530 = vrot.slane %v1321, %v1529
      %v1531 = vlaneseq
      %v1532 = vshrl.u32 %v1531, 7
      %v1533 = vsub.s32 %v1078, %v1532
      %v1534 = vrot.slane %v1326, %v1533
      %v1535 = vlaneseq
      %v1536 = vshrl.u32 %v1535, 7
      %v1537 = vsub.s32 %v1078, %v1536
      %v1538 = vrot.slane %v1331, %v1537
      %v1539 = vlaneseq
      %v1540 = vshrl.u32 %v1539, 7
      %v1541 = vsub.s32 %v1078, %v1540
      %v1542 = vrot.slane %v1336, %v1541
      %v1543 = vlaneseq
      %v1544 = vshrl.u32 %v1543, 7
      %v1545 = vsub.s32 %v1078, %v1544
      %v1546 = vrot.slane %v1341, %v1545
      %v1547 = vlaneseq
      %v1548 = vshrl.u32 %v1547, 7
      %v1549 = vsub.s32 %v1078, %v1548
      %v1550 = vrot.slane %v1346, %v1549
      %v1551 = vlaneseq
      %v1552 = vshrl.u32 %v1551, 7
      %v1553 = vsub.s32 %v1078, %v1552
      %v1554 = vrot.slane %v1351, %v1553
      %v1555 = vsel %vm853, %v1530, %v1526
      %v1556 = vsel %vm855, %v1534, %v1555
      %v1557 = vsel %vm857, %v1538, %v1556
      %v1558 = vsel %vm859, %v1542, %v1557
      %v1559 = vsel %vm861, %v1546, %v1558
      %v1560 = vsel %vm863, %v1550, %v1559
      %v1561 = vsel %vm865, %v1554, %v1560
      %v1563 = vmul.f32 %v1522, %v1561
      %v1564 = vld [vmem:[%s9] sm:$0x1]
      %v1566 = vlaneseq
      %v1567 = vshrl.u32 %v1566, 7
      %v1568 = vsub.s32 0, %v1567
      %v1569 = vrot.slane %v1564, %v1568
      %v1571 = vmul.f32 %v1519, %v1569
      %v1572 = vld [vmem:[%s10] sm:$0x1]
      %v1574 = vlaneseq
      %v1575 = vshrl.u32 %v1574, 7
      %v1576 = vsub.s32 0, %v1575
      %v1577 = vrot.slane %v1572, %v1576
      %v1579 = vadd.f32 %v1571, %v1577
      %v1580 = vld [vmem:[%s11] sm:$0x1]
      %v1582 = vlaneseq
      %v1583 = vshrl.u32 %v1582, 7
      %v1584 = vsub.s32 0, %v1583
      %v1585 = vrot.slane %v1580, %v1584
      %v1587 = vmul.f32 %v1563, %v1585
      %v1588 = vld [vmem:[%s12] sm:$0x1]
      %v1590 = vlaneseq
      %v1591 = vshrl.u32 %v1590, 7
      %v1592 = vsub.s32 0, %v1591
      %v1593 = vrot.slane %v1588, %v1592
      %v1595 = vadd.f32 %v1587, %v1593
      %v1596 = vld [vmem:[%s13] sm:$0xff]
      %v1597 = vld [vmem:[%s13 + $0x8] sm:$0xff]
      %v1598 = vld [vmem:[%s13 + $0x10] sm:$0xff]
      %v1599 = vld [vmem:[%s13 + $0x18] sm:$0xff]
      %v1600 = vld [vmem:[%s13 + $0x20] sm:$0xff]
      %v1601 = vld [vmem:[%s13 + $0x28] sm:$0xff]
      %v1602 = vld [vmem:[%s13 + $0x30] sm:$0xff]
      %v1603 = vld [vmem:[%s13 + $0x38] sm:$0xff]
      %v1604 = vld [vmem:[%s14] sm:$0xff]
      %v1606 = vsel %vm1119, %v1595, 0
      %1608 = vmatprep.subr.mxu0 0.0
      %1609 = vmatpush1.msra.mxu0 %v1604
      %1610 = vmatprep.subr.mxu0 0.0
      %1611 = vmatpush1.msra.mxu0 0.0
      %1612 = vmatprep.subr.mxu0 0.0
      %1613 = vmatpush1.msra.mxu0 0.0
      %1614 = vmatprep.subr.mxu0 0.0
      %1615 = vmatpush1.msra.mxu0 0.0
      %1616 = vmatprep.subr.mxu0 0.0
      %1617 = vmatpush1.msra.mxu0 0.0
      %1618 = vmatprep.subr.mxu0 0.0
      %1619 = vmatpush1.msra.mxu0 0.0
      %1620 = vmatprep.subr.mxu0 0.0
      %1621 = vmatpush1.msra.mxu0 0.0
      %1622 = vmatprep.subr.mxu0 0.0
      %1623 = vmatpush1.msra.mxu0 0.0
      %1624 = vmatprep.subr.mxu0 0.0
      %1625 = vmatpush1.msra.mxu0 0.0
      %1626 = vmatprep.subr.mxu0 0.0
      %1627 = vmatpush1.msra.mxu0 0.0
      %1628 = vmatprep.subr.mxu0 0.0
      %1629 = vmatpush1.msra.mxu0 0.0
      %1630 = vmatprep.subr.mxu0 0.0
      %1631 = vmatpush1.msra.mxu0 0.0
      %1632 = vmatprep.subr.mxu0 0.0
      %1633 = vmatpush1.msra.mxu0 0.0
      %1634 = vmatprep.subr.mxu0 0.0
      %1635 = vmatpush1.msra.mxu0 0.0
      %1636 = vmatprep.subr.mxu0 0.0
      %1637 = vmatpush1.msra.mxu0 0.0
      %1638 = vmatprep.subr.mxu0 0.0
      %1639 = vmatpush1.msra.mxu0 0.0
      %1640 = vmatprep.subr.mxu0 0.0
      %1641 = vmatpush1.msra.mxu0 0.0
      %1642 = vmatprep.subr.mxu0 0.0
      %1643 = vmatpush1.msra.mxu0 0.0
      %1644 = vmatprep.subr.mxu0 0.0
      %1645 = vmatpush1.msra.mxu0 0.0
      %1646 = vmatprep.subr.mxu0 0.0
      %1647 = vmatpush1.msra.mxu0 0.0
      %1648 = vmatprep.subr.mxu0 0.0
      %1649 = vmatpush1.msra.mxu0 0.0
      %1650 = vmatprep.subr.mxu0 0.0
      %1651 = vmatpush1.msra.mxu0 0.0
      %1652 = vmatprep.subr.mxu0 0.0
      %1653 = vmatpush1.msra.mxu0 0.0
      %1654 = vmatprep.subr.mxu0 0.0
      %1655 = vmatpush1.msra.mxu0 0.0
      %1656 = vmatprep.subr.mxu0 0.0
      %1657 = vmatpush1.msra.mxu0 0.0
      %1658 = vmatprep.subr.mxu0 0.0
      %1659 = vmatpush1.msra.mxu0 0.0
      %1660 = vmatprep.subr.mxu0 0.0
      %1661 = vmatpush1.msra.mxu0 0.0
      %1662 = vmatprep.subr.mxu0 0.0
      %1663 = vmatpush1.msra.mxu0 0.0
      %1664 = vmatprep.subr.mxu0 0.0
      %1665 = vmatpush1.msra.mxu0 0.0
      %1666 = vmatprep.subr.mxu0 0.0
      %1667 = vmatpush1.msra.mxu0 0.0
      %1668 = vmatprep.subr.mxu0 0.0
      %1669 = vmatpush1.msra.mxu0 0.0
      %1670 = vmatprep.subr.mxu0 0.0
      %1671 = vmatpush1.msra.mxu0 0.0
      %1672 = vmatprep.mubr.f32.mxu0 0.0
      %1673 = vmatmul.mubr.f32.gmra.mrb[0].mxu0 %v1606
      %v1674 = vpop.f32.mrb[0].mxu0
      %v1675 = vadd.f32 0.0, %v1674
      %v1676 = vpop.f32.mrb[0].mxu0
      %1677 = vdwg.mxu0
      %v1679 = vsel %vm579, %v1579, 0
      %1681 = vmatprep.subr.mxu0 0.0
      %1682 = vmatpush1.msra.mxu0 %v1596
      %1683 = vmatprep.subr.mxu0 0.0
      %1684 = vmatpush1.msra.mxu0 %v1597
      %1685 = vmatprep.subr.mxu0 0.0
      %1686 = vmatpush1.msra.mxu0 %v1598
      %1687 = vmatprep.subr.mxu0 0.0
      %1688 = vmatpush1.msra.mxu0 %v1599
      %1689 = vmatprep.subr.mxu0 0.0
      %1690 = vmatpush1.msra.mxu0 %v1600
      %1691 = vmatprep.subr.mxu0 0.0
      %1692 = vmatpush1.msra.mxu0 %v1601
      %1693 = vmatprep.subr.mxu0 0.0
      %1694 = vmatpush1.msra.mxu0 %v1602
      %1695 = vmatprep.subr.mxu0 0.0
      %1696 = vmatpush1.msra.mxu0 %v1603
      %1697 = vmatprep.subr.mxu0 0.0
      %1698 = vmatpush1.msra.mxu0 0.0
      %1699 = vmatprep.subr.mxu0 0.0
      %1700 = vmatpush1.msra.mxu0 0.0
      %1701 = vmatprep.subr.mxu0 0.0
      %1702 = vmatpush1.msra.mxu0 0.0
      %1703 = vmatprep.subr.mxu0 0.0
      %1704 = vmatpush1.msra.mxu0 0.0
      %1705 = vmatprep.subr.mxu0 0.0
      %1706 = vmatpush1.msra.mxu0 0.0
      %1707 = vmatprep.subr.mxu0 0.0
      %1708 = vmatpush1.msra.mxu0 0.0
      %1709 = vmatprep.subr.mxu0 0.0
      %1710 = vmatpush1.msra.mxu0 0.0
      %1711 = vmatprep.subr.mxu0 0.0
      %1712 = vmatpush1.msra.mxu0 0.0
      %1713 = vmatprep.subr.mxu0 0.0
      %1714 = vmatpush1.msra.mxu0 0.0
      %1715 = vmatprep.subr.mxu0 0.0
      %1716 = vmatpush1.msra.mxu0 0.0
      %1717 = vmatprep.subr.mxu0 0.0
      %1718 = vmatpush1.msra.mxu0 0.0
      %1719 = vmatprep.subr.mxu0 0.0
      %1720 = vmatpush1.msra.mxu0 0.0
      %1721 = vmatprep.subr.mxu0 0.0
      %1722 = vmatpush1.msra.mxu0 0.0
      %1723 = vmatprep.subr.mxu0 0.0
      %1724 = vmatpush1.msra.mxu0 0.0
      %1725 = vmatprep.subr.mxu0 0.0
      %1726 = vmatpush1.msra.mxu0 0.0
      %1727 = vmatprep.subr.mxu0 0.0
      %1728 = vmatpush1.msra.mxu0 0.0
      %1729 = vmatprep.subr.mxu0 0.0
      %1730 = vmatpush1.msra.mxu0 0.0
      %1731 = vmatprep.subr.mxu0 0.0
      %1732 = vmatpush1.msra.mxu0 0.0
      %1733 = vmatprep.subr.mxu0 0.0
      %1734 = vmatpush1.msra.mxu0 0.0
      %1735 = vmatprep.subr.mxu0 0.0
      %1736 = vmatpush1.msra.mxu0 0.0
      %1737 = vmatprep.subr.mxu0 0.0
      %1738 = vmatpush1.msra.mxu0 0.0
      %1739 = vmatprep.subr.mxu0 0.0
      %1740 = vmatpush1.msra.mxu0 0.0
      %1741 = vmatprep.subr.mxu0 0.0
      %1742 = vmatpush1.msra.mxu0 0.0
      %1743 = vmatprep.subr.mxu0 0.0
      %1744 = vmatpush1.msra.mxu0 0.0
      %1745 = vmatprep.mubr.f32.mxu0 0.0
      %1746 = vmatmul.mubr.f32.gmra.mrb[0].mxu0 %v1679
      %v1747 = vpop.f32.mrb[0].mxu0
      %v1748 = vadd.f32 %v1675, %v1747
      %v1749 = vpop.f32.mrb[0].mxu0
      %1750 = vdwg.mxu0
      %v1751 = vld [vmem:[%s15] sm:$0x1]
      %v1753 = vlaneseq
      %v1754 = vshrl.u32 %v1753, 7
      %v1755 = vsub.s32 0, %v1754
      %v1756 = vrot.slane %v1751, %v1755
      %v1758 = vadd.f32 %v1748, %v1756
      %vm1759 = vcmask 23552
      %1760 = vst.msk [vmem:[%s555] sm:$0xff] %vm1759, %v1758
      %p1761 = scmp.lt.s32.totalorder %s27, 1
      %s1762 = scalar_select %p1761, %s27, 1
      %s1763 = smul.addr %s1762, 8
      %s1764 = scalar_lea.vmem %s16, %s1763
      // Predicated region
      $region85: #{absa_gru_forward.3} parent=83 // pred_check
        %p1765 = pneg %p396
      $region86: #{absa_gru_forward.3} parent=83 // pred_check_branch
        %1767 = sbr.rel (%p1765) target = $region88
      $region87: #{absa_gru_forward.3} parent=83 // pred_region
        _
      $region88: #{absa_gru_forward.3} parent=83 // pred_fallthru
        _
    $region84: #{absa_gru_forward.3} parent=5 // pred_fallthru
      _
    %p1768 = scmp.le.s32.totalorder 2, %s22
    // Predicated region
    $region89: #{absa_gru_forward.3} parent=5 // pred_check
      %p1769 = pneg %p1768
    $region90: #{absa_gru_forward.3} parent=5 // pred_check_branch
      %1771 = sbr.rel (%p1769) target = $region92
    $region91: #{absa_gru_forward.3} parent=5 // pred_region
      %s1772 = ssub.s32 %s22, 2
      // Predicated region
      $region93: #{absa_gru_forward.3} parent=91 // pred_check
        %p1773 = pneg %p402
      $region94: #{absa_gru_forward.3} parent=91 // pred_check_branch
        %1775 = sbr.rel (%p1773) target = $region96
      $region95: #{absa_gru_forward.3} parent=91 // pred_region
        %p1776 = scmp.lt.s32.totalorder %s28, 1
        %s1777 = scalar_select %p1776, %s28, 1
        %s1778 = smul.addr %s1777, 8
        %s1779 = scalar_lea.vmem %s16, %s1778
      $region96: #{absa_gru_forward.3} parent=91 // pred_fallthru
        _
    $region92: #{absa_gru_forward.3} parent=5 // pred_fallthru
      _
  $region6: #{absa_gru_forward.3} parent=0 // loop_footer
    %s26 = sadd.s32 1, %s22
  $region7: #{absa_gru_forward.3} parent=0 // loop_footer_branch
    %21 = sbr.rel target = $region3
  $region8: #{absa_gru_forward.3} parent=0 // loop_exit
    _

</llo_original>
